<compile_context>
chip_gen: v7x
topology: tpu7x:2x2x1
jax: 0.10.0
libtpu: 0.0.40
codegen_flags: <defaults>
</compile_context>

<pallas_src>
import numpy as np
import jax
import jax.numpy as jnp
from jax.experimental import pallas as pl
from jax.experimental.pallas import tpu as pltpu

EPS = 1e-5


def _round_up(x, m):
    return (x + m - 1) // m * m


def _fold_bn_weight(w_oihw, b, gamma, beta, mean, var, cin_pad, cout_pad):
    """Fold eval-mode BN into conv weight/bias, zero-pad channels, cast weight to bf16.

    Returns (taps, shift):
      taps:  (kh*kw, cin_pad, cout_pad) bf16, taps[ky*kw+kx][ci, co] = w[co, ci, ky, kx]*scale[co]
      shift: (1, cout_pad) f32,  shift[co] = (b[co]-mean[co])*scale[co] + beta[co]
    """
    cout, cin, kh, kw = w_oihw.shape
    scale = gamma / jnp.sqrt(var + EPS)
    shift = (b - mean) * scale + beta
    w = jnp.transpose(w_oihw, (2, 3, 1, 0)).reshape(kh * kw, cin, cout) * scale[None, None, :]
    w = jnp.pad(w, ((0, 0), (0, cin_pad - cin), (0, cout_pad - cout)))
    shift = jnp.pad(shift, (0, cout_pad - cout)).reshape(1, cout_pad)
    return w.astype(jnp.bfloat16), shift.astype(jnp.float32)


def resblock_forward(x_nchw, params):
    """Pallas implementation of ResBlock.forward. Input/output layout: NCHW (PyTorch)."""
    N, C, H, W = x_nchw.shape
    Cmid = C // 4
    Cp = _round_up(C, 128)          # lane-dense in/out channel width
    Mp = _round_up(Cmid, 128)       # lane-dense middle channel width

    Hp, Wp = H + 2, W + 2           # spatially zero-padded grid for the 3x3 / pad=1 conv
    Mg = Hp * Wp                    # real rows of the padded grid
    Mgu = _round_up(Mg, 16)         # row count padded so all kernel stores stay 16-row aligned
    margin = _round_up(Wp + 1, 16)  # >= max tap row-shift, aligned for packed bf16 sublanes
    R = Mgu + 2 * margin            # rows of the flat, margin-padded y0 scratch

    # ------------------------ wrapper-side data prep (XLA) ------------------------ #
    x_nhwc = jnp.transpose(x_nchw, (0, 2, 3, 1))
    x_sp = jnp.pad(x_nhwc, ((0, 0), (1, 1), (1, 1), (0, Cp - C)))           # (N,Hp,Wp,Cp)
    x_flat = jnp.pad(x_sp.reshape(N, Mg, Cp),
                     ((0, 0), (0, Mgu - Mg), (0, 0))).astype(jnp.bfloat16)  # (N,Mgu,Cp) bf16

    # Interior mask: 1 at rows holding a real pixel, 0 at the zero-padding ring / Mgu pad rows.
    # Forces y0's border to be exactly the 3x3 conv's zero padding.
    py, px = np.meshgrid(np.arange(Hp), np.arange(Wp), indexing="ij")
    interior = ((py >= 1) & (py <= H) & (px >= 1) & (px <= W)).astype(np.float32).reshape(-1)
    mask_np = np.zeros((Mgu, 1), np.float32)
    mask_np[:Mg, 0] = interior
    mask = jnp.asarray(mask_np)

    w0, t0 = _fold_bn_weight(params["w0"], params["b0"], params["g0"], params["be0"],
                             params["m0"], params["v0"], Cp, Mp)
    w1, t1 = _fold_bn_weight(params["w1"], params["b1"], params["g1"], params["be1"],
                             params["m1"], params["v1"], Mp, Mp)
    w2, t2 = _fold_bn_weight(params["w2"], params["b2"], params["g2"], params["be2"],
                             params["m2"], params["v2"], Mp, Cp)
    w0 = w0.reshape(Cp, Mp)         # 1x1 conv -> single tap
    w2 = w2.reshape(Mp, Cp)

    # ---------------------------------- kernel ------------------------------------ #
    def kernel(x_ref, mask_ref, w0_ref, t0_ref, w1_ref, t1_ref, w2_ref, t2_ref,
               o_ref, y0_ref, acc_ref):
        # Refresh the zero margins of the bf16 y0 scratch: two aligned 16-row-multiple strip
        # stores (cheap), so every grid step is self-contained (megacore-safe, no pl.when).
        zero_strip = jnp.zeros((margin, Mp), jnp.bfloat16)
        y0_ref[0:margin, :] = zero_strip
        y0_ref[margin + Mgu:R, :] = zero_strip

        x = x_ref[...]                                                # (Mgu, Cp) bf16

        # stage 0: 1x1 conv + BN + ReLU on interior rows only; ring/pad rows masked to zero.
        y0 = jnp.dot(x, w0_ref[...], preferred_element_type=jnp.float32)
        y0 = jnp.maximum(y0 + t0_ref[...], 0.0) * mask_ref[...]       # (Mgu, Mp) f32
        y0_ref[margin:margin + Mgu, :] = y0.astype(jnp.bfloat16)      # aligned bf16 store

        # stage 1: 3x3 conv as 9 shifted 1x1 matmuls; the 3 kx dots per ky are summed as
        # values so the f32 accumulator only sees 3 RMW passes.  Tap reads never leave the
        # zeroed-margin scratch (|shift| <= Wp+1 <= margin) and only loads are unaligned.
        for ky in range(3):
            base = margin + (ky - 1) * Wp
            c = jnp.dot(y0_ref[base - 1:base - 1 + Mgu, :], w1_ref[3 * ky + 0],
                        preferred_element_type=jnp.float32)
            c = c + jnp.dot(y0_ref[base:base + Mgu, :], w1_ref[3 * ky + 1],
                            preferred_element_type=jnp.float32)
            c = c + jnp.dot(y0_ref[base + 1:base + 1 + Mgu, :], w1_ref[3 * ky + 2],
                            preferred_element_type=jnp.float32)
            if ky == 0:
                acc_ref[...] = c
            else:
                acc_ref[...] += c
        y1 = jnp.maximum(acc_ref[...] + t1_ref[...], 0.0).astype(jnp.bfloat16)   # (Mgu, Mp)

        # stage 2: 1x1 conv + BN + ReLU + residual add (add in f32 from the bf16 copy of x).
        y2 = jnp.dot(y1, w2_ref[...], preferred_element_type=jnp.float32)
        y2 = jnp.maximum(y2 + t2_ref[...], 0.0)                       # (Mgu, Cp)
        o_ref[...] = (x.astype(jnp.float32) + y2).astype(o_ref.dtype)

    flops = N * (2 * Mgu * Cp * Mp + 9 * 2 * Mgu * Mp * Mp + 2 * Mgu * Mp * Cp)
    bytes_accessed = (x_flat.size * 2 + N * Mgu * Cp * 4 + mask.size * 4
                      + (w0.size + w1.size + w2.size) * 2
                      + (t0.size + t1.size + t2.size) * 4)

    # Per-step VMEM footprint: double-buffered x/out blocks + scratches + weights + headroom
    # for the f32 matmul temporaries.  Never below the 32 MiB default so small shapes behave
    # exactly as before; capped well under v7x's 64 MiB physical VMEM.
    vmem_bytes = (2 * Mgu * Cp * 2 + 2 * Mgu * Cp * 4 + R * Mp * 2 + Mgu * Mp * 4
                  + 2 * (w0.size + w1.size + w2.size) * 2 + 4 * Mgu * Mp * 4)
    vmem_limit = int(min(max(2 * vmem_bytes, 32 * 1024 * 1024), 100 * 1024 * 1024))

    out = pl.pallas_call(
        kernel,
        out_shape=jax.ShapeDtypeStruct((N, Mgu, Cp), jnp.float32),
        grid=(N,),
        in_specs=[
            pl.BlockSpec((None, Mgu, Cp), lambda n: (n, 0, 0)),    # x (bf16, ring-padded rows)
            pl.BlockSpec((Mgu, 1), lambda n: (0, 0)),              # interior mask
            pl.BlockSpec((Cp, Mp), lambda n: (0, 0)),              # w0 (BN-folded)
            pl.BlockSpec((1, Mp), lambda n: (0, 0)),               # shift0
            pl.BlockSpec((9, Mp, Mp), lambda n: (0, 0, 0)),        # w1 taps (BN-folded)
            pl.BlockSpec((1, Mp), lambda n: (0, 0)),               # shift1
            pl.BlockSpec((Mp, Cp), lambda n: (0, 0)),              # w2 (BN-folded)
            pl.BlockSpec((1, Cp), lambda n: (0, 0)),               # shift2
        ],
        out_specs=pl.BlockSpec((None, Mgu, Cp), lambda n: (n, 0, 0)),
        scratch_shapes=[
            pltpu.VMEM((R, Mp), jnp.bfloat16),    # zero-margin y0, flat layout (bf16)
            pltpu.VMEM((Mgu, Mp), jnp.float32),   # 3x3 f32 accumulator (3 RMW passes)
        ],
        compiler_params=pltpu.CompilerParams(
            dimension_semantics=("parallel",),
            vmem_limit_bytes=vmem_limit),
        cost_estimate=pl.CostEstimate(flops=flops, transcendentals=0,
                                      bytes_accessed=bytes_accessed),
    )(x_flat, mask, w0, t0, w1, t1, w2, t2)

    y = out[:, :Mg, :].reshape(N, Hp, Wp, Cp)[:, 1:H + 1, 1:W + 1, :C]   # drop pad ring / chans
    return jnp.transpose(y, (0, 3, 1, 2))                                # back to NCHW


# ------------------------- deterministic parameters -------------------------- #

def init_params(key, in_dim):
    mid = in_dim // 4
    ks = jax.random.split(key, 18)

    def conv_w(k, cout, cin, ksz):
        bound = 1.0 / np.sqrt(cin * ksz * ksz)
        return jax.random.uniform(k, (cout, cin, ksz, ksz), jnp.float32, -bound, bound)

    def conv_b(k, cout, cin, ksz):
        bound = 1.0 / np.sqrt(cin * ksz * ksz)
        return jax.random.uniform(k, (cout,), jnp.float32, -bound, bound)

    def bn(k, c):
        k1, k2, k3, k4 = jax.random.split(k, 4)
        gamma = jax.random.uniform(k1, (c,), jnp.float32, 0.5, 1.5)
        beta = jax.random.uniform(k2, (c,), jnp.float32, -0.1, 0.1)
        mean = jax.random.uniform(k3, (c,), jnp.float32, -0.1, 0.1)
        var = jax.random.uniform(k4, (c,), jnp.float32, 0.5, 1.5)
        return gamma, beta, mean, var

    p = {}
    p["w0"], p["b0"] = conv_w(ks[0], mid, in_dim, 1), conv_b(ks[1], mid, in_dim, 1)
    p["g0"], p["be0"], p["m0"], p["v0"] = bn(ks[2], mid)
    p["w1"], p["b1"] = conv_w(ks[3], mid, mid, 3), conv_b(ks[4], mid, mid, 3)
    p["g1"], p["be1"], p["m1"], p["v1"] = bn(ks[5], mid)
    p["w2"], p["b2"] = conv_w(ks[6], in_dim, mid, 1), conv_b(ks[7], in_dim, mid, 1)
    p["g2"], p["be2"], p["m2"], p["v2"] = bn(ks[8], in_dim)
    return p


# ------------------------------ pure-JAX reference ---------------------------- #

def _ref_conv_bn_relu(x, w, b, gamma, beta, mean, var, pad):
    y = jax.lax.conv_general_dilated(
        x, w, (1, 1), [(pad, pad), (pad, pad)],
        dimension_numbers=("NCHW", "OIHW", "NCHW"))
    y = y + b[None, :, None, None]
    y = (y - mean[None, :, None, None]) / jnp.sqrt(var[None, :, None, None] + EPS)
    y = y * gamma[None, :, None, None] + beta[None, :, None, None]
    return jnp.maximum(y, 0.0)


def resblock_ref(x, p):
    y = _ref_conv_bn_relu(x, p["w0"], p["b0"], p["g0"], p["be0"], p["m0"], p["v0"], 0)
    y = _ref_conv_bn_relu(y, p["w1"], p["b1"], p["g1"], p["be1"], p["m1"], p["v1"], 1)
    y = _ref_conv_bn_relu(y, p["w2"], p["b2"], p["g2"], p["be2"], p["m2"], p["v2"], 0)
    return x + y


# ----------------------------------- main ------------------------------------ #

if __name__ == "__main__":
    key = jax.random.PRNGKey(0)
    k_x, k_p = jax.random.split(key)

    N, C, H, W = 2, 16, 16, 16          # in_dim=16 -> middle_dim=4
    x = jax.random.normal(k_x, (N, C, H, W), jnp.float32)
    params = init_params(k_p, C)

    out = jax.block_until_ready(jax.jit(resblock_forward)(x, params))
    ref = jax.block_until_ready(resblock_ref(x, params))

    assert out.shape == (N, C, H, W)
    # bf16 matmuls + bf16 residual copy of x -> loosened tolerance vs. the f32 reference.
    np.testing.assert_allclose(np.asarray(out), np.asarray(ref), rtol=2e-2, atol=3e-2)

    print("KERNEL_OK")
</pallas_src>

<mosaic_0001>
module attributes {stable_mosaic.version = 11 : i64} {
  func.func @kernel(%arg0: i32, %arg1: memref<1x336x128xbf16, #tpu.memory_space<vmem>>, %arg2: memref<336x1xf32, #tpu.memory_space<vmem>>, %arg3: memref<128x128xbf16, #tpu.memory_space<vmem>>, %arg4: memref<1x128xf32, #tpu.memory_space<vmem>>, %arg5: memref<9x128x128xbf16, #tpu.memory_space<vmem>>, %arg6: memref<1x128xf32, #tpu.memory_space<vmem>>, %arg7: memref<128x128xbf16, #tpu.memory_space<vmem>>, %arg8: memref<1x128xf32, #tpu.memory_space<vmem>>, %arg9: memref<1x336x128xf32, #tpu.memory_space<vmem>>, %arg10: memref<400x128xbf16, #tpu.memory_space<vmem>>, %arg11: memref<336x128xf32, #tpu.memory_space<vmem>>) attributes {dimension_semantics = [#tpu.dimension_semantics<parallel>], iteration_bounds = array<i64: 2>, scalar_prefetch = 0 : i64, scratch_operands = 2 : i64, tpu.core_type = #tpu.core_type<tc>, window_params = [{transform_indices = @transform_0, window_bounds = array<i64: 1, 336, 128>}, {pipeline_mode = #tpu.pipeline_mode<synchronous>, transform_indices = @transform_1, window_bounds = array<i64: 336, 1>}, {pipeline_mode = #tpu.pipeline_mode<synchronous>, transform_indices = @transform_2, window_bounds = array<i64: 128, 128>}, {pipeline_mode = #tpu.pipeline_mode<synchronous>, transform_indices = @transform_3, window_bounds = array<i64: 1, 128>}, {pipeline_mode = #tpu.pipeline_mode<synchronous>, transform_indices = @transform_4, window_bounds = array<i64: 9, 128, 128>}, {pipeline_mode = #tpu.pipeline_mode<synchronous>, transform_indices = @transform_5, window_bounds = array<i64: 1, 128>}, {pipeline_mode = #tpu.pipeline_mode<synchronous>, transform_indices = @transform_6, window_bounds = array<i64: 128, 128>}, {pipeline_mode = #tpu.pipeline_mode<synchronous>, transform_indices = @transform_7, window_bounds = array<i64: 1, 128>}, {transform_indices = @transform_8, window_bounds = array<i64: 1, 336, 128>}]} {
    %cst = arith.constant 0.000000e+00 : bf16
    %0 = vector.broadcast %cst : bf16 to vector<32x128xbf16>
    %c0 = arith.constant 0 : index
    %c0_0 = arith.constant 0 : index
    %1 = vector.load %arg10[%c0, %c0_0] : memref<400x128xbf16, #tpu.memory_space<vmem>>, vector<32x128xbf16>
    tpu.vector_store %arg10[%c0, %c0_0], %0 {strides = array<i32>} : memref<400x128xbf16, #tpu.memory_space<vmem>>, vector<32x128xbf16>,
    %c368 = arith.constant 368 : index
    %c0_1 = arith.constant 0 : index
    %2 = vector.load %arg10[%c368, %c0_1] : memref<400x128xbf16, #tpu.memory_space<vmem>>, vector<32x128xbf16>
    tpu.vector_store %arg10[%c368, %c0_1], %0 {strides = array<i32>} : memref<400x128xbf16, #tpu.memory_space<vmem>>, vector<32x128xbf16>,
    %c0_2 = arith.constant 0 : index
    %c0_3 = arith.constant 0 : index
    %c0_4 = arith.constant 0 : index
    %3 = vector.load %arg1[%c0_2, %c0_3, %c0_4] : memref<1x336x128xbf16, #tpu.memory_space<vmem>>, vector<1x336x128xbf16>
    %4 = vector.shape_cast %3 : vector<1x336x128xbf16> to vector<336x128xbf16>
    %c0_5 = arith.constant 0 : index
    %c0_6 = arith.constant 0 : index
    %5 = vector.load %arg3[%c0_5, %c0_6] : memref<128x128xbf16, #tpu.memory_space<vmem>>, vector<128x128xbf16>
    %cst_7 = arith.constant dense<0.000000e+00> : vector<336x128xf32>
    %6 = tpu.matmul %4, %5, %cst_7 {dimension_numbers = #tpu.dot_dimension_numbers<[1], [0], [0], [1], [0, 0, 1, 1], [], []>} : vector<336x128xbf16>, vector<128x128xbf16>, vector<336x128xf32> -> vector<336x128xf32>
    %c0_8 = arith.constant 0 : index
    %c0_9 = arith.constant 0 : index
    %7 = vector.load %arg4[%c0_8, %c0_9] : memref<1x128xf32, #tpu.memory_space<vmem>>, vector<1x128xf32>
    %8 = vector.broadcast %7 : vector<1x128xf32> to vector<336x128xf32>
    %9 = arith.addf %6, %8 : vector<336x128xf32>
    %cst_10 = arith.constant 0.000000e+00 : f32
    %10 = vector.broadcast %cst_10 : f32 to vector<336x128xf32>
    %11 = arith.maximumf %9, %10 : vector<336x128xf32>
    %c0_11 = arith.constant 0 : index
    %c0_12 = arith.constant 0 : index
    %12 = vector.load %arg2[%c0_11, %c0_12] : memref<336x1xf32, #tpu.memory_space<vmem>>, vector<336x1xf32>
    %13 = vector.broadcast %12 : vector<336x1xf32> to vector<336x128xf32>
    %14 = arith.mulf %11, %13 : vector<336x128xf32>
    %15 = arith.truncf %14 : vector<336x128xf32> to vector<336x128xbf16>
    %c32 = arith.constant 32 : index
    %c0_13 = arith.constant 0 : index
    %16 = vector.load %arg10[%c32, %c0_13] : memref<400x128xbf16, #tpu.memory_space<vmem>>, vector<336x128xbf16>
    tpu.vector_store %arg10[%c32, %c0_13], %15 {strides = array<i32>} : memref<400x128xbf16, #tpu.memory_space<vmem>>, vector<336x128xbf16>,
    %c13 = arith.constant 13 : index
    %c0_14 = arith.constant 0 : index
    %17 = vector.load %arg10[%c13, %c0_14] : memref<400x128xbf16, #tpu.memory_space<vmem>>, vector<336x128xbf16>
    %c0_15 = arith.constant 0 : index
    %c0_16 = arith.constant 0 : index
    %c0_17 = arith.constant 0 : index
    %18 = vector.load %arg5[%c0_15, %c0_16, %c0_17] : memref<9x128x128xbf16, #tpu.memory_space<vmem>>, vector<1x128x128xbf16>
    %19 = vector.shape_cast %18 : vector<1x128x128xbf16> to vector<128x128xbf16>
    %cst_18 = arith.constant dense<0.000000e+00> : vector<336x128xf32>
    %20 = tpu.matmul %17, %19, %cst_18 {dimension_numbers = #tpu.dot_dimension_numbers<[1], [0], [0], [1], [0, 0, 1, 1], [], []>} : vector<336x128xbf16>, vector<128x128xbf16>, vector<336x128xf32> -> vector<336x128xf32>
    %c14 = arith.constant 14 : index
    %c0_19 = arith.constant 0 : index
    %21 = vector.load %arg10[%c14, %c0_19] : memref<400x128xbf16, #tpu.memory_space<vmem>>, vector<336x128xbf16>
    %c1 = arith.constant 1 : index
    %c0_20 = arith.constant 0 : index
    %c0_21 = arith.constant 0 : index
    %22 = vector.load %arg5[%c1, %c0_20, %c0_21] : memref<9x128x128xbf16, #tpu.memory_space<vmem>>, vector<1x128x128xbf16>
    %23 = vector.shape_cast %22 : vector<1x128x128xbf16> to vector<128x128xbf16>
    %cst_22 = arith.constant dense<0.000000e+00> : vector<336x128xf32>
    %24 = tpu.matmul %21, %23, %cst_22 {dimension_numbers = #tpu.dot_dimension_numbers<[1], [0], [0], [1], [0, 0, 1, 1], [], []>} : vector<336x128xbf16>, vector<128x128xbf16>, vector<336x128xf32> -> vector<336x128xf32>
    %25 = arith.addf %20, %24 : vector<336x128xf32>
    %c15 = arith.constant 15 : index
    %c0_23 = arith.constant 0 : index
    %26 = vector.load %arg10[%c15, %c0_23] : memref<400x128xbf16, #tpu.memory_space<vmem>>, vector<336x128xbf16>
    %c2 = arith.constant 2 : index
    %c0_24 = arith.constant 0 : index
    %c0_25 = arith.constant 0 : index
    %27 = vector.load %arg5[%c2, %c0_24, %c0_25] : memref<9x128x128xbf16, #tpu.memory_space<vmem>>, vector<1x128x128xbf16>
    %28 = vector.shape_cast %27 : vector<1x128x128xbf16> to vector<128x128xbf16>
    %cst_26 = arith.constant dense<0.000000e+00> : vector<336x128xf32>
    %29 = tpu.matmul %26, %28, %cst_26 {dimension_numbers = #tpu.dot_dimension_numbers<[1], [0], [0], [1], [0, 0, 1, 1], [], []>} : vector<336x128xbf16>, vector<128x128xbf16>, vector<336x128xf32> -> vector<336x128xf32>
    %30 = arith.addf %25, %29 : vector<336x128xf32>
    %c0_27 = arith.constant 0 : index
    %c0_28 = arith.constant 0 : index
    %31 = vector.load %arg11[%c0_27, %c0_28] : memref<336x128xf32, #tpu.memory_space<vmem>>, vector<336x128xf32>
    tpu.vector_store %arg11[%c0_27, %c0_28], %30 {strides = array<i32>} : memref<336x128xf32, #tpu.memory_space<vmem>>, vector<336x128xf32>,
    %c31 = arith.constant 31 : index
    %c0_29 = arith.constant 0 : index
    %32 = vector.load %arg10[%c31, %c0_29] : memref<400x128xbf16, #tpu.memory_space<vmem>>, vector<336x128xbf16>
    %c3 = arith.constant 3 : index
    %c0_30 = arith.constant 0 : index
    %c0_31 = arith.constant 0 : index
    %33 = vector.load %arg5[%c3, %c0_30, %c0_31] : memref<9x128x128xbf16, #tpu.memory_space<vmem>>, vector<1x128x128xbf16>
    %34 = vector.shape_cast %33 : vector<1x128x128xbf16> to vector<128x128xbf16>
    %cst_32 = arith.constant dense<0.000000e+00> : vector<336x128xf32>
    %35 = tpu.matmul %32, %34, %cst_32 {dimension_numbers = #tpu.dot_dimension_numbers<[1], [0], [0], [1], [0, 0, 1, 1], [], []>} : vector<336x128xbf16>, vector<128x128xbf16>, vector<336x128xf32> -> vector<336x128xf32>
    %c32_33 = arith.constant 32 : index
    %c0_34 = arith.constant 0 : index
    %36 = vector.load %arg10[%c32_33, %c0_34] : memref<400x128xbf16, #tpu.memory_space<vmem>>, vector<336x128xbf16>
    %c4 = arith.constant 4 : index
    %c0_35 = arith.constant 0 : index
    %c0_36 = arith.constant 0 : index
    %37 = vector.load %arg5[%c4, %c0_35, %c0_36] : memref<9x128x128xbf16, #tpu.memory_space<vmem>>, vector<1x128x128xbf16>
    %38 = vector.shape_cast %37 : vector<1x128x128xbf16> to vector<128x128xbf16>
    %cst_37 = arith.constant dense<0.000000e+00> : vector<336x128xf32>
    %39 = tpu.matmul %36, %38, %cst_37 {dimension_numbers = #tpu.dot_dimension_numbers<[1], [0], [0], [1], [0, 0, 1, 1], [], []>} : vector<336x128xbf16>, vector<128x128xbf16>, vector<336x128xf32> -> vector<336x128xf32>
    %40 = arith.addf %35, %39 : vector<336x128xf32>
    %c33 = arith.constant 33 : index
    %c0_38 = arith.constant 0 : index
    %41 = vector.load %arg10[%c33, %c0_38] : memref<400x128xbf16, #tpu.memory_space<vmem>>, vector<336x128xbf16>
    %c5 = arith.constant 5 : index
    %c0_39 = arith.constant 0 : index
    %c0_40 = arith.constant 0 : index
    %42 = vector.load %arg5[%c5, %c0_39, %c0_40] : memref<9x128x128xbf16, #tpu.memory_space<vmem>>, vector<1x128x128xbf16>
    %43 = vector.shape_cast %42 : vector<1x128x128xbf16> to vector<128x128xbf16>
    %cst_41 = arith.constant dense<0.000000e+00> : vector<336x128xf32>
    %44 = tpu.matmul %41, %43, %cst_41 {dimension_numbers = #tpu.dot_dimension_numbers<[1], [0], [0], [1], [0, 0, 1, 1], [], []>} : vector<336x128xbf16>, vector<128x128xbf16>, vector<336x128xf32> -> vector<336x128xf32>
    %45 = arith.addf %40, %44 : vector<336x128xf32>
    %c0_42 = arith.constant 0 : index
    %c0_43 = arith.constant 0 : index
    %46 = vector.load %arg11[%c0_42, %c0_43] : memref<336x128xf32, #tpu.memory_space<vmem>>, vector<336x128xf32>
    %47 = arith.addf %46, %45 : vector<336x128xf32>
    %c0_44 = arith.constant 0 : index
    %c0_45 = arith.constant 0 : index
    %48 = vector.load %arg11[%c0_44, %c0_45] : memref<336x128xf32, #tpu.memory_space<vmem>>, vector<336x128xf32>
    tpu.vector_store %arg11[%c0_44, %c0_45], %47 {strides = array<i32>} : memref<336x128xf32, #tpu.memory_space<vmem>>, vector<336x128xf32>,
    %c49 = arith.constant 49 : index
    %c0_46 = arith.constant 0 : index
    %49 = vector.load %arg10[%c49, %c0_46] : memref<400x128xbf16, #tpu.memory_space<vmem>>, vector<336x128xbf16>
    %c6 = arith.constant 6 : index
    %c0_47 = arith.constant 0 : index
    %c0_48 = arith.constant 0 : index
    %50 = vector.load %arg5[%c6, %c0_47, %c0_48] : memref<9x128x128xbf16, #tpu.memory_space<vmem>>, vector<1x128x128xbf16>
    %51 = vector.shape_cast %50 : vector<1x128x128xbf16> to vector<128x128xbf16>
    %cst_49 = arith.constant dense<0.000000e+00> : vector<336x128xf32>
    %52 = tpu.matmul %49, %51, %cst_49 {dimension_numbers = #tpu.dot_dimension_numbers<[1], [0], [0], [1], [0, 0, 1, 1], [], []>} : vector<336x128xbf16>, vector<128x128xbf16>, vector<336x128xf32> -> vector<336x128xf32>
    %c50 = arith.constant 50 : index
    %c0_50 = arith.constant 0 : index
    %53 = vector.load %arg10[%c50, %c0_50] : memref<400x128xbf16, #tpu.memory_space<vmem>>, vector<336x128xbf16>
    %c7 = arith.constant 7 : index
    %c0_51 = arith.constant 0 : index
    %c0_52 = arith.constant 0 : index
    %54 = vector.load %arg5[%c7, %c0_51, %c0_52] : memref<9x128x128xbf16, #tpu.memory_space<vmem>>, vector<1x128x128xbf16>
    %55 = vector.shape_cast %54 : vector<1x128x128xbf16> to vector<128x128xbf16>
    %cst_53 = arith.constant dense<0.000000e+00> : vector<336x128xf32>
    %56 = tpu.matmul %53, %55, %cst_53 {dimension_numbers = #tpu.dot_dimension_numbers<[1], [0], [0], [1], [0, 0, 1, 1], [], []>} : vector<336x128xbf16>, vector<128x128xbf16>, vector<336x128xf32> -> vector<336x128xf32>
    %57 = arith.addf %52, %56 : vector<336x128xf32>
    %c51 = arith.constant 51 : index
    %c0_54 = arith.constant 0 : index
    %58 = vector.load %arg10[%c51, %c0_54] : memref<400x128xbf16, #tpu.memory_space<vmem>>, vector<336x128xbf16>
    %c8 = arith.constant 8 : index
    %c0_55 = arith.constant 0 : index
    %c0_56 = arith.constant 0 : index
    %59 = vector.load %arg5[%c8, %c0_55, %c0_56] : memref<9x128x128xbf16, #tpu.memory_space<vmem>>, vector<1x128x128xbf16>
    %60 = vector.shape_cast %59 : vector<1x128x128xbf16> to vector<128x128xbf16>
    %cst_57 = arith.constant dense<0.000000e+00> : vector<336x128xf32>
    %61 = tpu.matmul %58, %60, %cst_57 {dimension_numbers = #tpu.dot_dimension_numbers<[1], [0], [0], [1], [0, 0, 1, 1], [], []>} : vector<336x128xbf16>, vector<128x128xbf16>, vector<336x128xf32> -> vector<336x128xf32>
    %62 = arith.addf %57, %61 : vector<336x128xf32>
    %c0_58 = arith.constant 0 : index
    %c0_59 = arith.constant 0 : index
    %63 = vector.load %arg11[%c0_58, %c0_59] : memref<336x128xf32, #tpu.memory_space<vmem>>, vector<336x128xf32>
    %64 = arith.addf %63, %62 : vector<336x128xf32>
    %c0_60 = arith.constant 0 : index
    %c0_61 = arith.constant 0 : index
    %65 = vector.load %arg11[%c0_60, %c0_61] : memref<336x128xf32, #tpu.memory_space<vmem>>, vector<336x128xf32>
    tpu.vector_store %arg11[%c0_60, %c0_61], %64 {strides = array<i32>} : memref<336x128xf32, #tpu.memory_space<vmem>>, vector<336x128xf32>,
    %c0_62 = arith.constant 0 : index
    %c0_63 = arith.constant 0 : index
    %66 = vector.load %arg11[%c0_62, %c0_63] : memref<336x128xf32, #tpu.memory_space<vmem>>, vector<336x128xf32>
    %c0_64 = arith.constant 0 : index
    %c0_65 = arith.constant 0 : index
    %67 = vector.load %arg6[%c0_64, %c0_65] : memref<1x128xf32, #tpu.memory_space<vmem>>, vector<1x128xf32>
    %68 = vector.broadcast %67 : vector<1x128xf32> to vector<336x128xf32>
    %69 = arith.addf %66, %68 : vector<336x128xf32>
    %cst_66 = arith.constant 0.000000e+00 : f32
    %70 = vector.broadcast %cst_66 : f32 to vector<336x128xf32>
    %71 = arith.maximumf %69, %70 : vector<336x128xf32>
    %72 = arith.truncf %71 : vector<336x128xf32> to vector<336x128xbf16>
    %c0_67 = arith.constant 0 : index
    %c0_68 = arith.constant 0 : index
    %73 = vector.load %arg7[%c0_67, %c0_68] : memref<128x128xbf16, #tpu.memory_space<vmem>>, vector<128x128xbf16>
    %cst_69 = arith.constant dense<0.000000e+00> : vector<336x128xf32>
    %74 = tpu.matmul %72, %73, %cst_69 {dimension_numbers = #tpu.dot_dimension_numbers<[1], [0], [0], [1], [0, 0, 1, 1], [], []>} : vector<336x128xbf16>, vector<128x128xbf16>, vector<336x128xf32> -> vector<336x128xf32>
    %c0_70 = arith.constant 0 : index
    %c0_71 = arith.constant 0 : index
    %75 = vector.load %arg8[%c0_70, %c0_71] : memref<1x128xf32, #tpu.memory_space<vmem>>, vector<1x128xf32>
    %76 = vector.broadcast %75 : vector<1x128xf32> to vector<336x128xf32>
    %77 = arith.addf %74, %76 : vector<336x128xf32>
    %cst_72 = arith.constant 0.000000e+00 : f32
    %78 = vector.broadcast %cst_72 : f32 to vector<336x128xf32>
    %79 = arith.maximumf %77, %78 : vector<336x128xf32>
    %80 = arith.extf %4 : vector<336x128xbf16> to vector<336x128xf32>
    %81 = arith.addf %80, %79 : vector<336x128xf32>
    %c0_73 = arith.constant 0 : index
    %c0_74 = arith.constant 0 : index
    %c0_75 = arith.constant 0 : index
    %82 = vector.load %arg9[%c0_73, %c0_74, %c0_75] : memref<1x336x128xf32, #tpu.memory_space<vmem>>, vector<1x336x128xf32>
    %83 = vector.shape_cast %82 : vector<1x336x128xf32> to vector<336x128xf32>
    %84 = vector.shape_cast %81 : vector<336x128xf32> to vector<1x336x128xf32>
    tpu.vector_store %arg9[%c0_73, %c0_74, %c0_75], %84 {strides = array<i32>} : memref<1x336x128xf32, #tpu.memory_space<vmem>>, vector<1x336x128xf32>,
    return
  }
  func.func @transform_0(%arg0: i32) -> (i32, i32, i32) {
    %c0_i32 = arith.constant 0 : i32
    %c0_i32_0 = arith.constant 0 : i32
    %c0_i32_1 = arith.constant 0 : i32
    return %arg0, %c0_i32, %c0_i32_0 : i32, i32, i32
  }
  func.func @transform_1(%arg0: i32) -> (i32, i32) {
    %c0_i32 = arith.constant 0 : i32
    %c0_i32_0 = arith.constant 0 : i32
    %c0_i32_1 = arith.constant 0 : i32
    return %c0_i32, %c0_i32_0 : i32, i32
  }
  func.func @transform_2(%arg0: i32) -> (i32, i32) {
    %c0_i32 = arith.constant 0 : i32
    %c0_i32_0 = arith.constant 0 : i32
    %c0_i32_1 = arith.constant 0 : i32
    return %c0_i32, %c0_i32_0 : i32, i32
  }
  func.func @transform_3(%arg0: i32) -> (i32, i32) {
    %c0_i32 = arith.constant 0 : i32
    %c0_i32_0 = arith.constant 0 : i32
    %c0_i32_1 = arith.constant 0 : i32
    return %c0_i32, %c0_i32_0 : i32, i32
  }
  func.func @transform_4(%arg0: i32) -> (i32, i32, i32) {
    %c0_i32 = arith.constant 0 : i32
    %c0_i32_0 = arith.constant 0 : i32
    %c0_i32_1 = arith.constant 0 : i32
    %c0_i32_2 = arith.constant 0 : i32
    return %c0_i32, %c0_i32_0, %c0_i32_1 : i32, i32, i32
  }
  func.func @transform_5(%arg0: i32) -> (i32, i32) {
    %c0_i32 = arith.constant 0 : i32
    %c0_i32_0 = arith.constant 0 : i32
    %c0_i32_1 = arith.constant 0 : i32
    return %c0_i32, %c0_i32_0 : i32, i32
  }
  func.func @transform_6(%arg0: i32) -> (i32, i32) {
    %c0_i32 = arith.constant 0 : i32
    %c0_i32_0 = arith.constant 0 : i32
    %c0_i32_1 = arith.constant 0 : i32
    return %c0_i32, %c0_i32_0 : i32, i32
  }
  func.func @transform_7(%arg0: i32) -> (i32, i32) {
    %c0_i32 = arith.constant 0 : i32
    %c0_i32_0 = arith.constant 0 : i32
    %c0_i32_1 = arith.constant 0 : i32
    return %c0_i32, %c0_i32_0 : i32, i32
  }
  func.func @transform_8(%arg0: i32) -> (i32, i32, i32) {
    %c0_i32 = arith.constant 0 : i32
    %c0_i32_0 = arith.constant 0 : i32
    %c0_i32_1 = arith.constant 0 : i32
    return %arg0, %c0_i32, %c0_i32_0 : i32, i32, i32
  }
}

</mosaic_0001>

<llo_original>
// kernel: resblock_forward.1
$region0: #{resblock_forward.1}
  #allocation0 [shape = 'u32[]', space=smem, size = 0x4, offset = 0x4, fixed_abs, tag = 'smem constant byte address 0x4 - core index']
  #allocation1 [shape = 'u32[144,128]{1,0:T(1,128)}', space=vmem, size = 0x12000, scoped, tag = 'internal scratch']
  #allocation2 [shape = 'bf16[400,128]{1,0:T(16,128)(2,1)}', space=vmem, size = 0x19000, scoped, tag = 'scratch operand']
  #allocation3 [shape = 'f32[336,128]{1,0:T(8,128)}', space=vmem, size = 0x2a000, scoped, tag = 'scratch operand']
  %s0 = inlined_call_operand.vmem [shape: bf16[2,336,128], index: 0, kind: input, shape index: {}]
  %s1 = inlined_call_operand.vmem [shape: f32[336,1], index: 1, kind: input, shape index: {}]
  %s2 = inlined_call_operand.vmem [shape: bf16[128,128], index: 2, kind: input, shape index: {}]
  %s3 = inlined_call_operand.vmem [shape: f32[1,128], index: 3, kind: input, shape index: {}]
  %s4 = inlined_call_operand.vmem [shape: bf16[9,128,128], index: 4, kind: input, shape index: {}]
  %s5 = inlined_call_operand.vmem [shape: f32[1,128], index: 5, kind: input, shape index: {}]
  %s6 = inlined_call_operand.vmem [shape: bf16[128,128], index: 6, kind: input, shape index: {}]
  %s7 = inlined_call_operand.vmem [shape: f32[1,128], index: 7, kind: input, shape index: {}]
  %s8 = inlined_call_operand.vmem [shape: f32[2,336,128], index: 8, kind: output, shape index: {}]
  %s9 = sld [smem:[#allocation0]]
  $region65: #{resblock_forward.1} parent=0
    _
  %s11 = ssub.s32 1, %s9
  %s12 = scalar_select 0, %s11, %s9
  loop: start=0, step=1, limit=4
  $region2: #{resblock_forward.1} parent=0 // loop_pre_header
    _
  $region3: #{resblock_forward.1} parent=0 // loop_header
    %s14 = sphi 0, %s18
    %p15 = scmp.ge.s32.totalorder %s14, 4
    %s24 = sphi 0, %s26
    %s27 = sphi 0, %s24
    %s28 = sphi 0, %s27
    %s44 = sphi 0, %s28
    %s48 = sphi 0, %s48
    %s50 = sphi 0, %s48
    %s51 = sphi 0, %s50
    %s65 = sphi 0, %s51
    %s69 = sphi 0, %s69
    %s71 = sphi 0, %s69
    %s72 = sphi 0, %s71
    %s86 = sphi 0, %s72
    %s90 = sphi 0, %s90
    %s92 = sphi 0, %s90
    %s93 = sphi 0, %s92
    %s107 = sphi 0, %s93
    %s111 = sphi 0, %s111
    %s113 = sphi 0, %s111
    %s114 = sphi 0, %s113
    %s128 = sphi 0, %s114
    %s132 = sphi 0, %s132
    %s134 = sphi 0, %s132
    %s135 = sphi 0, %s134
    %s149 = sphi 0, %s135
    %s153 = sphi 0, %s153
    %s155 = sphi 0, %s153
    %s156 = sphi 0, %s155
    %s170 = sphi 0, %s156
    %s174 = sphi 0, %s174
    %s176 = sphi 0, %s174
    %s177 = sphi 0, %s176
    %s191 = sphi 0, %s177
    %s197 = sphi 0, %s199
    %s200 = sphi 0, %s197
    %s201 = sphi 0, %s200
    %s217 = sphi 0, %s201
  $region4: #{resblock_forward.1} parent=0 // loop_header_branch
    %17 = sbr.rel (%p15) target = $region8
  $region5: #{resblock_forward.1} parent=0 // loop_body
    %s19 = ssub.s32 %s14, 1
    %s20 = ssub.s32 %s14, 2
    %s21 = sadd.s32 %s14, 1
    %s22 = ssub.s32 %s14, %s21
    %p23 = scmp.eq.s32.totalorder %s22, 0
    %s25 = sadd.s32 %s24, 1
    %s26 = scalar_select %p23, %s24, %s25
    %p29 = pneg %p23
    %p30 = scmp.eq.s32.totalorder %s14, 1
    %p31 = por %p29, %p30
    %p32 = scmp.ne.s32.totalorder %s24, %s27
    %p33 = scmp.eq.s32.totalorder %s14, 0
    %p34 = por %p32, %p33
    %p35 = scmp.ne.s32.totalorder %s24, %s27
    %p36 = scmp.eq.s32.totalorder %s19, 1
    %p37 = por %p35, %p36
    %p38 = scmp.ne.s32.totalorder %s27, %s28
    %p39 = scmp.eq.s32.totalorder %s19, 0
    %p40 = por %p38, %p39
    %p41 = scmp.ne.s32.totalorder %s27, %s28
    %p42 = scmp.eq.s32.totalorder %s20, 1
    %p43 = por %p41, %p42
    %p45 = scmp.ne.s32.totalorder %s28, %s44
    %p46 = scmp.eq.s32.totalorder %s20, 0
    %p47 = por %p45, %p46
    %s49 = sadd.s32 %s48, 1
    %p52 = scmp.eq.s32.totalorder %s14, 1
    %p53 = scmp.ne.s32.totalorder %s48, %s50
    %p54 = scmp.eq.s32.totalorder %s14, 0
    %p55 = por %p53, %p54
    %p56 = scmp.ne.s32.totalorder %s48, %s50
    %p57 = scmp.eq.s32.totalorder %s19, 1
    %p58 = por %p56, %p57
    %p59 = scmp.ne.s32.totalorder %s50, %s51
    %p60 = scmp.eq.s32.totalorder %s19, 0
    %p61 = por %p59, %p60
    %p62 = scmp.ne.s32.totalorder %s50, %s51
    %p63 = scmp.eq.s32.totalorder %s20, 1
    %p64 = por %p62, %p63
    %p66 = scmp.ne.s32.totalorder %s51, %s65
    %p67 = scmp.eq.s32.totalorder %s20, 0
    %p68 = por %p66, %p67
    %s70 = sadd.s32 %s69, 1
    %p73 = scmp.eq.s32.totalorder %s14, 1
    %p74 = scmp.ne.s32.totalorder %s69, %s71
    %p75 = scmp.eq.s32.totalorder %s14, 0
    %p76 = por %p74, %p75
    %p77 = scmp.ne.s32.totalorder %s69, %s71
    %p78 = scmp.eq.s32.totalorder %s19, 1
    %p79 = por %p77, %p78
    %p80 = scmp.ne.s32.totalorder %s71, %s72
    %p81 = scmp.eq.s32.totalorder %s19, 0
    %p82 = por %p80, %p81
    %p83 = scmp.ne.s32.totalorder %s71, %s72
    %p84 = scmp.eq.s32.totalorder %s20, 1
    %p85 = por %p83, %p84
    %p87 = scmp.ne.s32.totalorder %s72, %s86
    %p88 = scmp.eq.s32.totalorder %s20, 0
    %p89 = por %p87, %p88
    %s91 = sadd.s32 %s90, 1
    %p94 = scmp.eq.s32.totalorder %s14, 1
    %p95 = scmp.ne.s32.totalorder %s90, %s92
    %p96 = scmp.eq.s32.totalorder %s14, 0
    %p97 = por %p95, %p96
    %p98 = scmp.ne.s32.totalorder %s90, %s92
    %p99 = scmp.eq.s32.totalorder %s19, 1
    %p100 = por %p98, %p99
    %p101 = scmp.ne.s32.totalorder %s92, %s93
    %p102 = scmp.eq.s32.totalorder %s19, 0
    %p103 = por %p101, %p102
    %p104 = scmp.ne.s32.totalorder %s92, %s93
    %p105 = scmp.eq.s32.totalorder %s20, 1
    %p106 = por %p104, %p105
    %p108 = scmp.ne.s32.totalorder %s93, %s107
    %p109 = scmp.eq.s32.totalorder %s20, 0
    %p110 = por %p108, %p109
    %s112 = sadd.s32 %s111, 1
    %p115 = scmp.eq.s32.totalorder %s14, 1
    %p116 = scmp.ne.s32.totalorder %s111, %s113
    %p117 = scmp.eq.s32.totalorder %s14, 0
    %p118 = por %p116, %p117
    %p119 = scmp.ne.s32.totalorder %s111, %s113
    %p120 = scmp.eq.s32.totalorder %s19, 1
    %p121 = por %p119, %p120
    %p122 = scmp.ne.s32.totalorder %s113, %s114
    %p123 = scmp.eq.s32.totalorder %s19, 0
    %p124 = por %p122, %p123
    %p125 = scmp.ne.s32.totalorder %s113, %s114
    %p126 = scmp.eq.s32.totalorder %s20, 1
    %p127 = por %p125, %p126
    %p129 = scmp.ne.s32.totalorder %s114, %s128
    %p130 = scmp.eq.s32.totalorder %s20, 0
    %p131 = por %p129, %p130
    %s133 = sadd.s32 %s132, 1
    %p136 = scmp.eq.s32.totalorder %s14, 1
    %p137 = scmp.ne.s32.totalorder %s132, %s134
    %p138 = scmp.eq.s32.totalorder %s14, 0
    %p139 = por %p137, %p138
    %p140 = scmp.ne.s32.totalorder %s132, %s134
    %p141 = scmp.eq.s32.totalorder %s19, 1
    %p142 = por %p140, %p141
    %p143 = scmp.ne.s32.totalorder %s134, %s135
    %p144 = scmp.eq.s32.totalorder %s19, 0
    %p145 = por %p143, %p144
    %p146 = scmp.ne.s32.totalorder %s134, %s135
    %p147 = scmp.eq.s32.totalorder %s20, 1
    %p148 = por %p146, %p147
    %p150 = scmp.ne.s32.totalorder %s135, %s149
    %p151 = scmp.eq.s32.totalorder %s20, 0
    %p152 = por %p150, %p151
    %s154 = sadd.s32 %s153, 1
    %p157 = scmp.eq.s32.totalorder %s14, 1
    %p158 = scmp.ne.s32.totalorder %s153, %s155
    %p159 = scmp.eq.s32.totalorder %s14, 0
    %p160 = por %p158, %p159
    %p161 = scmp.ne.s32.totalorder %s153, %s155
    %p162 = scmp.eq.s32.totalorder %s19, 1
    %p163 = por %p161, %p162
    %p164 = scmp.ne.s32.totalorder %s155, %s156
    %p165 = scmp.eq.s32.totalorder %s19, 0
    %p166 = por %p164, %p165
    %p167 = scmp.ne.s32.totalorder %s155, %s156
    %p168 = scmp.eq.s32.totalorder %s20, 1
    %p169 = por %p167, %p168
    %p171 = scmp.ne.s32.totalorder %s156, %s170
    %p172 = scmp.eq.s32.totalorder %s20, 0
    %p173 = por %p171, %p172
    %s175 = sadd.s32 %s174, 1
    %p178 = scmp.eq.s32.totalorder %s14, 1
    %p179 = scmp.ne.s32.totalorder %s174, %s176
    %p180 = scmp.eq.s32.totalorder %s14, 0
    %p181 = por %p179, %p180
    %p182 = scmp.ne.s32.totalorder %s174, %s176
    %p183 = scmp.eq.s32.totalorder %s19, 1
    %p184 = por %p182, %p183
    %p185 = scmp.ne.s32.totalorder %s176, %s177
    %p186 = scmp.eq.s32.totalorder %s19, 0
    %p187 = por %p185, %p186
    %p188 = scmp.ne.s32.totalorder %s176, %s177
    %p189 = scmp.eq.s32.totalorder %s20, 1
    %p190 = por %p188, %p189
    %p192 = scmp.ne.s32.totalorder %s177, %s191
    %p193 = scmp.eq.s32.totalorder %s20, 0
    %p194 = por %p192, %p193
    %s195 = ssub.s32 %s14, %s21
    %p196 = scmp.eq.s32.totalorder %s195, 0
    %s198 = sadd.s32 %s197, 1
    %s199 = scalar_select %p196, %s197, %s198
    %p202 = pneg %p196
    %p203 = scmp.eq.s32.totalorder %s14, 1
    %p204 = por %p202, %p203
    %p205 = scmp.ne.s32.totalorder %s197, %s200
    %p206 = scmp.eq.s32.totalorder %s14, 0
    %p207 = por %p205, %p206
    %p208 = scmp.ne.s32.totalorder %s197, %s200
    %p209 = scmp.eq.s32.totalorder %s19, 1
    %p210 = por %p208, %p209
    %p211 = scmp.ne.s32.totalorder %s200, %s201
    %p212 = scmp.eq.s32.totalorder %s19, 0
    %p213 = por %p211, %p212
    %p214 = scmp.ne.s32.totalorder %s200, %s201
    %p215 = scmp.eq.s32.totalorder %s20, 1
    %p216 = por %p214, %p215
    %p218 = scmp.ne.s32.totalorder %s201, %s217
    %p219 = scmp.eq.s32.totalorder %s20, 0
    %p220 = por %p218, %p219
    %p221 = scmp.le.s32.totalorder 1, %s14
    %p222 = scmp.lt.s32.totalorder %s14, 3
    %p223 = pnand %p221, %p222
    %p224 = pneg %p223
    // Predicated region
    $region9: #{resblock_forward.1} parent=5 // pred_check
      _
    $region10: #{resblock_forward.1} parent=5 // pred_check_branch
      %226 = sbr.rel (%p223) target = $region12
    $region11: #{resblock_forward.1} parent=5 // pred_region
      %s227 = ssub.s32 %s14, 1
      // Predicated region
      $region13: #{resblock_forward.1} parent=11 // pred_check
        %p228 = pneg %p61
      $region14: #{resblock_forward.1} parent=11 // pred_check_branch
        %230 = sbr.rel (%p228) target = $region16
      $region15: #{resblock_forward.1} parent=11 // pred_region
        _
      $region16: #{resblock_forward.1} parent=11 // pred_fallthru
        _
      // Predicated region
      $region17: #{resblock_forward.1} parent=11 // pred_check
        %p231 = pneg %p82
      $region18: #{resblock_forward.1} parent=11 // pred_check_branch
        %233 = sbr.rel (%p231) target = $region20
      $region19: #{resblock_forward.1} parent=11 // pred_region
        _
      $region20: #{resblock_forward.1} parent=11 // pred_fallthru
        _
      // Predicated region
      $region21: #{resblock_forward.1} parent=11 // pred_check
        %p234 = pneg %p103
      $region22: #{resblock_forward.1} parent=11 // pred_check_branch
        %236 = sbr.rel (%p234) target = $region24
      $region23: #{resblock_forward.1} parent=11 // pred_region
        _
      $region24: #{resblock_forward.1} parent=11 // pred_fallthru
        _
      // Predicated region
      $region25: #{resblock_forward.1} parent=11 // pred_check
        %p237 = pneg %p124
      $region26: #{resblock_forward.1} parent=11 // pred_check_branch
        %239 = sbr.rel (%p237) target = $region28
      $region27: #{resblock_forward.1} parent=11 // pred_region
        _
      $region28: #{resblock_forward.1} parent=11 // pred_fallthru
        _
      // Predicated region
      $region29: #{resblock_forward.1} parent=11 // pred_check
        %p240 = pneg %p145
      $region30: #{resblock_forward.1} parent=11 // pred_check_branch
        %242 = sbr.rel (%p240) target = $region32
      $region31: #{resblock_forward.1} parent=11 // pred_region
        _
      $region32: #{resblock_forward.1} parent=11 // pred_fallthru
        _
      // Predicated region
      $region33: #{resblock_forward.1} parent=11 // pred_check
        %p243 = pneg %p166
      $region34: #{resblock_forward.1} parent=11 // pred_check_branch
        %245 = sbr.rel (%p243) target = $region36
      $region35: #{resblock_forward.1} parent=11 // pred_region
        _
      $region36: #{resblock_forward.1} parent=11 // pred_fallthru
        _
      // Predicated region
      $region37: #{resblock_forward.1} parent=11 // pred_check
        %p246 = pneg %p187
      $region38: #{resblock_forward.1} parent=11 // pred_check_branch
        %248 = sbr.rel (%p246) target = $region40
      $region39: #{resblock_forward.1} parent=11 // pred_region
        _
      $region40: #{resblock_forward.1} parent=11 // pred_fallthru
        _
    $region12: #{resblock_forward.1} parent=5 // pred_fallthru
      _
    %p249 = scmp.lt.s32.totalorder %s14, 2
    // Predicated region
    $region41: #{resblock_forward.1} parent=5 // pred_check
      %p250 = pneg %p249
    $region42: #{resblock_forward.1} parent=5 // pred_check_branch
      %252 = sbr.rel (%p250) target = $region44
    $region43: #{resblock_forward.1} parent=5 // pred_region
      // Predicated region
      $region45: #{resblock_forward.1} parent=43 // pred_check
        %p253 = pneg %p34
      $region46: #{resblock_forward.1} parent=43 // pred_check_branch
        %255 = sbr.rel (%p253) target = $region48
      $region47: #{resblock_forward.1} parent=43 // pred_region
        %p256 = scmp.lt.s32.totalorder %s14, 1
        %s257 = scalar_select %p256, %s14, 1
        %s258 = smul.addr %s257, 42
        %s259 = smul.addr %s258, 4
        %s260 = scalar_lea.vmem %s0, %s259
      $region48: #{resblock_forward.1} parent=43 // pred_fallthru
        _
    $region44: #{resblock_forward.1} parent=5 // pred_fallthru
      _
    %p261 = scmp.le.s32.totalorder 1, %s14
    %p262 = scmp.lt.s32.totalorder %s14, 3
    %p263 = pnand %p261, %p262
    %p264 = pneg %p263
    // Predicated region
    $region49: #{resblock_forward.1} parent=5 // pred_check
      _
    $region50: #{resblock_forward.1} parent=5 // pred_check_branch
      %266 = sbr.rel (%p263) target = $region52
    $region51: #{resblock_forward.1} parent=5 // pred_region
      %s267 = ssub.s32 %s14, 1
      %p268 = scmp.lt.s32.totalorder %s19, 1
      %s269 = scalar_select %p268, %s19, 1
      %s270 = smul.addr %s269, 42
      %s271 = smul.addr %s270, 4
      %s272 = scalar_lea.vmem %s0, %s271
      %p273 = pneg %p40
      %p274 = pneg %p37
      %p275 = pneg %p61
      %p276 = pneg %p58
      %p277 = pneg %p82
      %p278 = pneg %p79
      %p279 = pneg %p103
      %p280 = pneg %p100
      %p281 = pneg %p124
      %p282 = pneg %p121
      %p283 = pneg %p145
      %p284 = pneg %p142
      %p285 = pneg %p166
      %p286 = pneg %p163
      %p287 = pneg %p187
      %p288 = pneg %p184
      %p289 = pneg %p213
      %p290 = pneg %p210
      %p291 = scmp.lt.s32.totalorder %s19, 1
      %s292 = scalar_select %p291, %s19, 1
      %s293 = smul.addr %s292, 42
      %s294 = smul.addr %s293, 8
      %s295 = scalar_lea.vmem %s8, %s294
      %p296 = scmp.lt.s32.totalorder %s19, 1
      %s297 = scalar_select %p296, %s19, 1
      %s298 = smul.addr %s297, 42
      %s299 = smul.addr %s298, 4
      %s300 = scalar_lea.vmem %s0, %s299
      %p301 = scmp.lt.s32.totalorder %s19, 1
      %s302 = scalar_select %p301, %s19, 1
      %s303 = smul.addr %s302, 42
      %s304 = smul.addr %s303, 8
      %s305 = scalar_lea.vmem %s8, %s304
      %307 = vst [vmem:[#allocation2] sm:$0xff] 0
      %308 = vst [vmem:[#allocation2 + $0x8] sm:$0xff] 0
      %309 = vst [vmem:[#allocation2 + $0xb8] sm:$0xff] 0
      %310 = vst [vmem:[#allocation2 + $0xc0] sm:$0xff] 0
      %v311 = vld [vmem:[%s300] sm:$0xf]
      %v312 = vld [vmem:[%s300 + $0x4] sm:$0xf]
      %v313 = vld [vmem:[%s300 + $0x8] sm:$0xf]
      %v314 = vld [vmem:[%s300 + $0xc] sm:$0xf]
      %v315 = vld [vmem:[%s300 + $0x10] sm:$0xf]
      %v316 = vld [vmem:[%s300 + $0x14] sm:$0xf]
      %v317 = vld [vmem:[%s300 + $0x18] sm:$0xf]
      %v318 = vld [vmem:[%s300 + $0x1c] sm:$0xf]
      %v319 = vld [vmem:[%s300 + $0x20] sm:$0xf]
      %v320 = vld [vmem:[%s300 + $0x24] sm:$0xf]
      %v321 = vld [vmem:[%s300 + $0x28] sm:$0xf]
      %v322 = vld [vmem:[%s300 + $0x2c] sm:$0xf]
      %v323 = vld [vmem:[%s300 + $0x30] sm:$0xf]
      %v324 = vld [vmem:[%s300 + $0x34] sm:$0xf]
      %v325 = vld [vmem:[%s300 + $0x38] sm:$0xf]
      %v326 = vld [vmem:[%s300 + $0x3c] sm:$0xf]
      %v327 = vld [vmem:[%s300 + $0x40] sm:$0xf]
      %v328 = vld [vmem:[%s300 + $0x44] sm:$0xf]
      %v329 = vld [vmem:[%s300 + $0x48] sm:$0xf]
      %v330 = vld [vmem:[%s300 + $0x4c] sm:$0xf]
      %v331 = vld [vmem:[%s300 + $0x50] sm:$0xf]
      %v332 = vld [vmem:[%s300 + $0x54] sm:$0xf]
      %v333 = vld [vmem:[%s300 + $0x58] sm:$0xf]
      %v334 = vld [vmem:[%s300 + $0x5c] sm:$0xf]
      %v335 = vld [vmem:[%s300 + $0x60] sm:$0xf]
      %v336 = vld [vmem:[%s300 + $0x64] sm:$0xf]
      %v337 = vld [vmem:[%s300 + $0x68] sm:$0xf]
      %v338 = vld [vmem:[%s300 + $0x6c] sm:$0xf]
      %v339 = vld [vmem:[%s300 + $0x70] sm:$0xf]
      %v340 = vld [vmem:[%s300 + $0x74] sm:$0xf]
      %v341 = vld [vmem:[%s300 + $0x78] sm:$0xf]
      %v342 = vld [vmem:[%s300 + $0x7c] sm:$0xf]
      %v343 = vld [vmem:[%s300 + $0x80] sm:$0xf]
      %v344 = vld [vmem:[%s300 + $0x84] sm:$0xf]
      %v345 = vld [vmem:[%s300 + $0x88] sm:$0xf]
      %v346 = vld [vmem:[%s300 + $0x8c] sm:$0xf]
      %v347 = vld [vmem:[%s300 + $0x90] sm:$0xf]
      %v348 = vld [vmem:[%s300 + $0x94] sm:$0xf]
      %v349 = vld [vmem:[%s300 + $0x98] sm:$0xf]
      %v350 = vld [vmem:[%s300 + $0x9c] sm:$0xf]
      %v351 = vld [vmem:[%s300 + $0xa0] sm:$0xf]
      %v352 = vld [vmem:[%s300 + $0xa4] sm:$0xf]
      %v353 = vld [vmem:[%s2] sm:$0xf]
      %v354 = vld [vmem:[%s2 + $0x4] sm:$0xf]
      %v355 = vld [vmem:[%s2 + $0x8] sm:$0xf]
      %v356 = vld [vmem:[%s2 + $0xc] sm:$0xf]
      %v357 = vld [vmem:[%s2 + $0x10] sm:$0xf]
      %v358 = vld [vmem:[%s2 + $0x14] sm:$0xf]
      %v359 = vld [vmem:[%s2 + $0x18] sm:$0xf]
      %v360 = vld [vmem:[%s2 + $0x1c] sm:$0xf]
      %v361 = vld [vmem:[%s2 + $0x20] sm:$0xf]
      %v362 = vld [vmem:[%s2 + $0x24] sm:$0xf]
      %v363 = vld [vmem:[%s2 + $0x28] sm:$0xf]
      %v364 = vld [vmem:[%s2 + $0x2c] sm:$0xf]
      %v365 = vld [vmem:[%s2 + $0x30] sm:$0xf]
      %v366 = vld [vmem:[%s2 + $0x34] sm:$0xf]
      %v367 = vld [vmem:[%s2 + $0x38] sm:$0xf]
      %v368 = vld [vmem:[%s2 + $0x3c] sm:$0xf]
      %v369 = vld [vmem:[%s3] sm:$0x1]
      %v371 = vlaneseq
      %v372 = vshrl.u32 %v371, 7
      %v373 = vsub.s32 0, %v372
      %v374 = vrot.slane %v369, %v373
      %v418 = vunpack.c.l.b16 %v311
      %v419 = vunpack.c.l.b16 %v312
      %v420 = vunpack.c.l.b16 %v313
      %v421 = vunpack.c.l.b16 %v314
      %v422 = vunpack.c.l.b16 %v315
      %v423 = vunpack.c.l.b16 %v316
      %v424 = vunpack.c.l.b16 %v317
      %v425 = vunpack.c.l.b16 %v318
      %v426 = vunpack.c.l.b16 %v319
      %v427 = vunpack.c.l.b16 %v320
      %v428 = vunpack.c.l.b16 %v321
      %v429 = vunpack.c.l.b16 %v322
      %v430 = vunpack.c.l.b16 %v323
      %v431 = vunpack.c.l.b16 %v324
      %v432 = vunpack.c.l.b16 %v325
      %v433 = vunpack.c.l.b16 %v326
      %v434 = vunpack.c.l.b16 %v327
      %v435 = vunpack.c.l.b16 %v328
      %v436 = vunpack.c.l.b16 %v329
      %v437 = vunpack.c.l.b16 %v330
      %v438 = vunpack.c.l.b16 %v331
      %v439 = vunpack.c.l.b16 %v332
      %v440 = vunpack.c.l.b16 %v333
      %v441 = vunpack.c.l.b16 %v334
      %v442 = vunpack.c.l.b16 %v335
      %v443 = vunpack.c.l.b16 %v336
      %v444 = vunpack.c.l.b16 %v337
      %v445 = vunpack.c.l.b16 %v338
      %v446 = vunpack.c.l.b16 %v339
      %v447 = vunpack.c.l.b16 %v340
      %v448 = vunpack.c.l.b16 %v341
      %v449 = vunpack.c.l.b16 %v342
      %v450 = vunpack.c.l.b16 %v343
      %v451 = vunpack.c.l.b16 %v344
      %v452 = vunpack.c.l.b16 %v345
      %v453 = vunpack.c.l.b16 %v346
      %v454 = vunpack.c.l.b16 %v347
      %v455 = vunpack.c.l.b16 %v348
      %v456 = vunpack.c.l.b16 %v349
      %v457 = vunpack.c.l.b16 %v350
      %v458 = vunpack.c.l.b16 %v351
      %v459 = vunpack.c.l.b16 %v352
      %v460 = vpack.c.b16 %v419, %v418
      %v461 = vpack.c.b16 %v421, %v420
      %v462 = vpack.c.b16 %v423, %v422
      %v463 = vpack.c.b16 %v425, %v424
      %v464 = vpack.c.b16 %v427, %v426
      %v465 = vpack.c.b16 %v429, %v428
      %v466 = vpack.c.b16 %v431, %v430
      %v467 = vpack.c.b16 %v433, %v432
      %v468 = vpack.c.b16 %v435, %v434
      %v469 = vpack.c.b16 %v437, %v436
      %v470 = vpack.c.b16 %v439, %v438
      %v471 = vpack.c.b16 %v441, %v440
      %v472 = vpack.c.b16 %v443, %v442
      %v473 = vpack.c.b16 %v445, %v444
      %v474 = vpack.c.b16 %v447, %v446
      %v475 = vpack.c.b16 %v449, %v448
      %v476 = vpack.c.b16 %v451, %v450
      %v477 = vpack.c.b16 %v453, %v452
      %v478 = vpack.c.b16 %v455, %v454
      %v479 = vpack.c.b16 %v457, %v456
      %v480 = vpack.c.b16 %v459, %v458
      %v518 = vunpack.c.l.b16 %v353
      %v519 = vunpack.c.l.b16 %v354
      %v520 = vunpack.c.l.b16 %v355
      %v521 = vunpack.c.l.b16 %v356
      %v522 = vunpack.c.l.b16 %v357
      %v523 = vunpack.c.l.b16 %v358
      %v524 = vunpack.c.l.b16 %v359
      %v525 = vunpack.c.l.b16 %v360
      %v526 = vunpack.c.l.b16 %v361
      %v527 = vunpack.c.l.b16 %v362
      %v528 = vunpack.c.l.b16 %v363
      %v529 = vunpack.c.l.b16 %v364
      %v530 = vunpack.c.l.b16 %v365
      %v531 = vunpack.c.l.b16 %v366
      %v532 = vunpack.c.l.b16 %v367
      %v533 = vunpack.c.l.b16 %v368
      %v534 = vpack.c.b16 %v519, %v518
      %v535 = vpack.c.b16 %v521, %v520
      %v536 = vpack.c.b16 %v523, %v522
      %v537 = vpack.c.b16 %v525, %v524
      %v538 = vpack.c.b16 %v527, %v526
      %v539 = vpack.c.b16 %v529, %v528
      %v540 = vpack.c.b16 %v531, %v530
      %v541 = vpack.c.b16 %v533, %v532
      %550 = vmatprep.subr.bf16.mxu0 0
      %551 = vmatpush1.bf16.msra.mxu0 %v534
      %552 = vmatprep.subr.bf16.mxu0 0
      %553 = vmatpush1.bf16.msra.mxu0 %v535
      %554 = vmatprep.subr.bf16.mxu0 0
      %555 = vmatpush1.bf16.msra.mxu0 %v536
      %556 = vmatprep.subr.bf16.mxu0 0
      %557 = vmatpush1.bf16.msra.mxu0 %v537
      %558 = vmatprep.subr.bf16.mxu0 0
      %559 = vmatpush1.bf16.msra.mxu0 %v538
      %560 = vmatprep.subr.bf16.mxu0 0
      %561 = vmatpush1.bf16.msra.mxu0 %v539
      %562 = vmatprep.subr.bf16.mxu0 0
      %563 = vmatpush1.bf16.msra.mxu0 %v540
      %564 = vmatprep.subr.bf16.mxu0 0
      %565 = vmatpush1.bf16.msra.mxu0 %v541
      %566 = vmatprep.subr.bf16.mxu0 0
      %567 = vmatpush1.bf16.msra.mxu0 0
      %568 = vmatprep.subr.bf16.mxu0 0
      %569 = vmatpush1.bf16.msra.mxu0 0
      %570 = vmatprep.subr.bf16.mxu0 0
      %571 = vmatpush1.bf16.msra.mxu0 0
      %572 = vmatprep.subr.bf16.mxu0 0
      %573 = vmatpush1.bf16.msra.mxu0 0
      %574 = vmatprep.subr.bf16.mxu0 0
      %575 = vmatpush1.bf16.msra.mxu0 0
      %576 = vmatprep.subr.bf16.mxu0 0
      %577 = vmatpush1.bf16.msra.mxu0 0
      %578 = vmatprep.subr.bf16.mxu0 0
      %579 = vmatpush1.bf16.msra.mxu0 0
      %580 = vmatprep.subr.bf16.mxu0 0
      %581 = vmatpush1.bf16.msra.mxu0 0
      %582 = vmatprep.mubr.bf16.mxu0 0
      %583 = vmatmul.mubr.bf16.gmra.mrb[0].mxu0 %v460
      %v584 = vpop.f32.mrb[0].mxu0
      %v585 = vadd.f32 %v374, %v584
      %v586 = vpop.f32.mrb[0].mxu0
      %v587 = vpop.f32.mrb[0].mxu0
      %v588 = vadd.f32 %v374, %v587
      %v589 = vpop.f32.mrb[0].mxu0
      %590 = vmatprep.mubr.bf16.mxu0 0
      %591 = vmatmul.mubr.bf16.gmra.mrb[0].mxu0 %v461
      %v592 = vpop.f32.mrb[0].mxu0
      %v593 = vadd.f32 %v374, %v592
      %v594 = vpop.f32.mrb[0].mxu0
      %v595 = vpop.f32.mrb[0].mxu0
      %v596 = vadd.f32 %v374, %v595
      %v597 = vpop.f32.mrb[0].mxu0
      %598 = vmatprep.mubr.bf16.mxu0 0
      %599 = vmatmul.mubr.bf16.gmra.mrb[0].mxu0 %v462
      %v600 = vpop.f32.mrb[0].mxu0
      %v601 = vadd.f32 %v374, %v600
      %v602 = vpop.f32.mrb[0].mxu0
      %v603 = vpop.f32.mrb[0].mxu0
      %v604 = vadd.f32 %v374, %v603
      %v605 = vpop.f32.mrb[0].mxu0
      %606 = vmatprep.mubr.bf16.mxu0 0
      %607 = vmatmul.mubr.bf16.gmra.mrb[0].mxu0 %v463
      %v608 = vpop.f32.mrb[0].mxu0
      %v609 = vadd.f32 %v374, %v608
      %v610 = vpop.f32.mrb[0].mxu0
      %v611 = vpop.f32.mrb[0].mxu0
      %v612 = vadd.f32 %v374, %v611
      %v613 = vpop.f32.mrb[0].mxu0
      %614 = vmatprep.mubr.bf16.mxu0 0
      %615 = vmatmul.mubr.bf16.gmra.mrb[0].mxu0 %v464
      %v616 = vpop.f32.mrb[0].mxu0
      %v617 = vadd.f32 %v374, %v616
      %v618 = vpop.f32.mrb[0].mxu0
      %v619 = vpop.f32.mrb[0].mxu0
      %v620 = vadd.f32 %v374, %v619
      %v621 = vpop.f32.mrb[0].mxu0
      %622 = vmatprep.mubr.bf16.mxu0 0
      %623 = vmatmul.mubr.bf16.gmra.mrb[0].mxu0 %v465
      %v624 = vpop.f32.mrb[0].mxu0
      %v625 = vadd.f32 %v374, %v624
      %v626 = vpop.f32.mrb[0].mxu0
      %v627 = vpop.f32.mrb[0].mxu0
      %v628 = vadd.f32 %v374, %v627
      %v629 = vpop.f32.mrb[0].mxu0
      %630 = vmatprep.mubr.bf16.mxu0 0
      %631 = vmatmul.mubr.bf16.gmra.mrb[0].mxu0 %v466
      %v632 = vpop.f32.mrb[0].mxu0
      %v633 = vadd.f32 %v374, %v632
      %v634 = vpop.f32.mrb[0].mxu0
      %v635 = vpop.f32.mrb[0].mxu0
      %v636 = vadd.f32 %v374, %v635
      %v637 = vpop.f32.mrb[0].mxu0
      %638 = vmatprep.mubr.bf16.mxu0 0
      %639 = vmatmul.mubr.bf16.gmra.mrb[0].mxu0 %v467
      %v640 = vpop.f32.mrb[0].mxu0
      %v641 = vadd.f32 %v374, %v640
      %v642 = vpop.f32.mrb[0].mxu0
      %v643 = vpop.f32.mrb[0].mxu0
      %v644 = vadd.f32 %v374, %v643
      %v645 = vpop.f32.mrb[0].mxu0
      %646 = vmatprep.mubr.bf16.mxu0 0
      %647 = vmatmul.mubr.bf16.gmra.mrb[0].mxu0 %v468
      %v648 = vpop.f32.mrb[0].mxu0
      %v649 = vadd.f32 %v374, %v648
      %v650 = vpop.f32.mrb[0].mxu0
      %v651 = vpop.f32.mrb[0].mxu0
      %v652 = vadd.f32 %v374, %v651
      %v653 = vpop.f32.mrb[0].mxu0
      %654 = vmatprep.mubr.bf16.mxu0 0
      %655 = vmatmul.mubr.bf16.gmra.mrb[0].mxu0 %v469
      %v656 = vpop.f32.mrb[0].mxu0
      %v657 = vadd.f32 %v374, %v656
      %v658 = vpop.f32.mrb[0].mxu0
      %v659 = vpop.f32.mrb[0].mxu0
      %v660 = vadd.f32 %v374, %v659
      %v661 = vpop.f32.mrb[0].mxu0
      %662 = vmatprep.mubr.bf16.mxu0 0
      %663 = vmatmul.mubr.bf16.gmra.mrb[0].mxu0 %v470
      %v664 = vpop.f32.mrb[0].mxu0
      %v665 = vadd.f32 %v374, %v664
      %v666 = vpop.f32.mrb[0].mxu0
      %v667 = vpop.f32.mrb[0].mxu0
      %v668 = vadd.f32 %v374, %v667
      %v669 = vpop.f32.mrb[0].mxu0
      %670 = vmatprep.mubr.bf16.mxu0 0
      %671 = vmatmul.mubr.bf16.gmra.mrb[0].mxu0 %v471
      %v672 = vpop.f32.mrb[0].mxu0
      %v673 = vadd.f32 %v374, %v672
      %v674 = vpop.f32.mrb[0].mxu0
      %v675 = vpop.f32.mrb[0].mxu0
      %v676 = vadd.f32 %v374, %v675
      %v677 = vpop.f32.mrb[0].mxu0
      %678 = vmatprep.mubr.bf16.mxu0 0
      %679 = vmatmul.mubr.bf16.gmra.mrb[0].mxu0 %v472
      %v680 = vpop.f32.mrb[0].mxu0
      %v681 = vadd.f32 %v374, %v680
      %v682 = vpop.f32.mrb[0].mxu0
      %v683 = vpop.f32.mrb[0].mxu0
      %v684 = vadd.f32 %v374, %v683
      %v685 = vpop.f32.mrb[0].mxu0
      %686 = vmatprep.mubr.bf16.mxu0 0
      %687 = vmatmul.mubr.bf16.gmra.mrb[0].mxu0 %v473
      %v688 = vpop.f32.mrb[0].mxu0
      %v689 = vadd.f32 %v374, %v688
      %v690 = vpop.f32.mrb[0].mxu0
      %v691 = vpop.f32.mrb[0].mxu0
      %v692 = vadd.f32 %v374, %v691
      %v693 = vpop.f32.mrb[0].mxu0
      %694 = vmatprep.mubr.bf16.mxu0 0
      %695 = vmatmul.mubr.bf16.gmra.mrb[0].mxu0 %v474
      %v696 = vpop.f32.mrb[0].mxu0
      %v697 = vadd.f32 %v374, %v696
      %v698 = vpop.f32.mrb[0].mxu0
      %v699 = vpop.f32.mrb[0].mxu0
      %v700 = vadd.f32 %v374, %v699
      %v701 = vpop.f32.mrb[0].mxu0
      %702 = vmatprep.mubr.bf16.mxu0 0
      %703 = vmatmul.mubr.bf16.gmra.mrb[0].mxu0 %v475
      %v704 = vpop.f32.mrb[0].mxu0
      %v705 = vadd.f32 %v374, %v704
      %v706 = vpop.f32.mrb[0].mxu0
      %v707 = vpop.f32.mrb[0].mxu0
      %v708 = vadd.f32 %v374, %v707
      %v709 = vpop.f32.mrb[0].mxu0
      %710 = vmatprep.mubr.bf16.mxu0 0
      %711 = vmatmul.mubr.bf16.gmra.mrb[0].mxu0 %v476
      %v712 = vpop.f32.mrb[0].mxu0
      %v713 = vadd.f32 %v374, %v712
      %v714 = vpop.f32.mrb[0].mxu0
      %v715 = vpop.f32.mrb[0].mxu0
      %v716 = vadd.f32 %v374, %v715
      %v717 = vpop.f32.mrb[0].mxu0
      %718 = vmatprep.mubr.bf16.mxu0 0
      %719 = vmatmul.mubr.bf16.gmra.mrb[0].mxu0 %v477
      %v720 = vpop.f32.mrb[0].mxu0
      %v721 = vadd.f32 %v374, %v720
      %v722 = vpop.f32.mrb[0].mxu0
      %v723 = vpop.f32.mrb[0].mxu0
      %v724 = vadd.f32 %v374, %v723
      %v725 = vpop.f32.mrb[0].mxu0
      %726 = vmatprep.mubr.bf16.mxu0 0
      %727 = vmatmul.mubr.bf16.gmra.mrb[0].mxu0 %v478
      %v728 = vpop.f32.mrb[0].mxu0
      %v729 = vadd.f32 %v374, %v728
      %v730 = vpop.f32.mrb[0].mxu0
      %v731 = vpop.f32.mrb[0].mxu0
      %v732 = vadd.f32 %v374, %v731
      %v733 = vpop.f32.mrb[0].mxu0
      %734 = vmatprep.mubr.bf16.mxu0 0
      %735 = vmatmul.mubr.bf16.gmra.mrb[0].mxu0 %v479
      %v736 = vpop.f32.mrb[0].mxu0
      %v737 = vadd.f32 %v374, %v736
      %v738 = vpop.f32.mrb[0].mxu0
      %v739 = vpop.f32.mrb[0].mxu0
      %v740 = vadd.f32 %v374, %v739
      %v741 = vpop.f32.mrb[0].mxu0
      %742 = vmatprep.mubr.bf16.mxu0 0
      %743 = vmatmul.mubr.bf16.gmra.mrb[0].mxu0 %v480
      %v744 = vpop.f32.mrb[0].mxu0
      %v745 = vadd.f32 %v374, %v744
      %v746 = vpop.f32.mrb[0].mxu0
      %v747 = vpop.f32.mrb[0].mxu0
      %v748 = vadd.f32 %v374, %v747
      %v749 = vpop.f32.mrb[0].mxu0
      %750 = vdwg.mxu0
      %v751 = vmax.f32 %v585, 0.0
      %v752 = vmax.f32 %v588, 0.0
      %v753 = vmax.f32 %v593, 0.0
      %v754 = vmax.f32 %v596, 0.0
      %v755 = vmax.f32 %v601, 0.0
      %v756 = vmax.f32 %v604, 0.0
      %v757 = vmax.f32 %v609, 0.0
      %v758 = vmax.f32 %v612, 0.0
      %v759 = vmax.f32 %v617, 0.0
      %v760 = vmax.f32 %v620, 0.0
      %v761 = vmax.f32 %v625, 0.0
      %v762 = vmax.f32 %v628, 0.0
      %v763 = vmax.f32 %v633, 0.0
      %v764 = vmax.f32 %v636, 0.0
      %v765 = vmax.f32 %v641, 0.0
      %v766 = vmax.f32 %v644, 0.0
      %v767 = vmax.f32 %v649, 0.0
      %v768 = vmax.f32 %v652, 0.0
      %v769 = vmax.f32 %v657, 0.0
      %v770 = vmax.f32 %v660, 0.0
      %v771 = vmax.f32 %v665, 0.0
      %v772 = vmax.f32 %v668, 0.0
      %v773 = vmax.f32 %v673, 0.0
      %v774 = vmax.f32 %v676, 0.0
      %v775 = vmax.f32 %v681, 0.0
      %v776 = vmax.f32 %v684, 0.0
      %v777 = vmax.f32 %v689, 0.0
      %v778 = vmax.f32 %v692, 0.0
      %v779 = vmax.f32 %v697, 0.0
      %v780 = vmax.f32 %v700, 0.0
      %v781 = vmax.f32 %v705, 0.0
      %v782 = vmax.f32 %v708, 0.0
      %v783 = vmax.f32 %v713, 0.0
      %v784 = vmax.f32 %v716, 0.0
      %v785 = vmax.f32 %v721, 0.0
      %v786 = vmax.f32 %v724, 0.0
      %v787 = vmax.f32 %v729, 0.0
      %v788 = vmax.f32 %v732, 0.0
      %v789 = vmax.f32 %v737, 0.0
      %v790 = vmax.f32 %v740, 0.0
      %v791 = vmax.f32 %v745, 0.0
      %v792 = vmax.f32 %v748, 0.0
      %v793 = vld [vmem:[%s1] sm:$0xff]
      %v794 = vld [vmem:[%s1 + $0x8] sm:$0xff]
      %v795 = vld [vmem:[%s1 + $0x10] sm:$0xff]
      %v796 = vld [vmem:[%s1 + $0x18] sm:$0xff]
      %v797 = vld [vmem:[%s1 + $0x20] sm:$0xff]
      %v798 = vld [vmem:[%s1 + $0x28] sm:$0xff]
      %v799 = vld [vmem:[%s1 + $0x30] sm:$0xff]
      %v800 = vld [vmem:[%s1 + $0x38] sm:$0xff]
      %v801 = vld [vmem:[%s1 + $0x40] sm:$0xff]
      %v802 = vld [vmem:[%s1 + $0x48] sm:$0xff]
      %v803 = vld [vmem:[%s1 + $0x50] sm:$0xff]
      %v804 = vld [vmem:[%s1 + $0x58] sm:$0xff]
      %v805 = vld [vmem:[%s1 + $0x60] sm:$0xff]
      %v806 = vld [vmem:[%s1 + $0x68] sm:$0xff]
      %v807 = vld [vmem:[%s1 + $0x70] sm:$0xff]
      %v808 = vld [vmem:[%s1 + $0x78] sm:$0xff]
      %v809 = vld [vmem:[%s1 + $0x80] sm:$0xff]
      %v810 = vld [vmem:[%s1 + $0x88] sm:$0xff]
      %v811 = vld [vmem:[%s1 + $0x90] sm:$0xff]
      %v812 = vld [vmem:[%s1 + $0x98] sm:$0xff]
      %v813 = vld [vmem:[%s1 + $0xa0] sm:$0xff]
      %v814 = vld [vmem:[%s1 + $0xa8] sm:$0xff]
      %v815 = vld [vmem:[%s1 + $0xb0] sm:$0xff]
      %v816 = vld [vmem:[%s1 + $0xb8] sm:$0xff]
      %v817 = vld [vmem:[%s1 + $0xc0] sm:$0xff]
      %v818 = vld [vmem:[%s1 + $0xc8] sm:$0xff]
      %v819 = vld [vmem:[%s1 + $0xd0] sm:$0xff]
      %v820 = vld [vmem:[%s1 + $0xd8] sm:$0xff]
      %v821 = vld [vmem:[%s1 + $0xe0] sm:$0xff]
      %v822 = vld [vmem:[%s1 + $0xe8] sm:$0xff]
      %v823 = vld [vmem:[%s1 + $0xf0] sm:$0xff]
      %v824 = vld [vmem:[%s1 + $0xf8] sm:$0xff]
      %v825 = vld [vmem:[%s1 + $0x100] sm:$0xff]
      %v826 = vld [vmem:[%s1 + $0x108] sm:$0xff]
      %v827 = vld [vmem:[%s1 + $0x110] sm:$0xff]
      %v828 = vld [vmem:[%s1 + $0x118] sm:$0xff]
      %v829 = vld [vmem:[%s1 + $0x120] sm:$0xff]
      %v830 = vld [vmem:[%s1 + $0x128] sm:$0xff]
      %v831 = vld [vmem:[%s1 + $0x130] sm:$0xff]
      %v832 = vld [vmem:[%s1 + $0x138] sm:$0xff]
      %v833 = vld [vmem:[%s1 + $0x140] sm:$0xff]
      %v834 = vld [vmem:[%s1 + $0x148] sm:$0xff]
      %836 = vset.pattern.permute.xlu0 0
      %837 = vperm.xlu0 %836, %v793
      %v838 = vpop.permute.xlu0 %837
      %841 = vset.pattern.permute.xlu0 0
      %842 = vperm.xlu0 %841, %v794
      %v843 = vpop.permute.xlu0 %842
      %846 = vset.pattern.permute.xlu0 0
      %847 = vperm.xlu0 %846, %v795
      %v848 = vpop.permute.xlu0 %847
      %851 = vset.pattern.permute.xlu0 0
      %852 = vperm.xlu0 %851, %v796
      %v853 = vpop.permute.xlu0 %852
      %856 = vset.pattern.permute.xlu0 0
      %857 = vperm.xlu0 %856, %v797
      %v858 = vpop.permute.xlu0 %857
      %861 = vset.pattern.permute.xlu0 0
      %862 = vperm.xlu0 %861, %v798
      %v863 = vpop.permute.xlu0 %862
      %866 = vset.pattern.permute.xlu0 0
      %867 = vperm.xlu0 %866, %v799
      %v868 = vpop.permute.xlu0 %867
      %871 = vset.pattern.permute.xlu0 0
      %872 = vperm.xlu0 %871, %v800
      %v873 = vpop.permute.xlu0 %872
      %876 = vset.pattern.permute.xlu0 0
      %877 = vperm.xlu0 %876, %v801
      %v878 = vpop.permute.xlu0 %877
      %881 = vset.pattern.permute.xlu0 0
      %882 = vperm.xlu0 %881, %v802
      %v883 = vpop.permute.xlu0 %882
      %886 = vset.pattern.permute.xlu0 0
      %887 = vperm.xlu0 %886, %v803
      %v888 = vpop.permute.xlu0 %887
      %891 = vset.pattern.permute.xlu0 0
      %892 = vperm.xlu0 %891, %v804
      %v893 = vpop.permute.xlu0 %892
      %896 = vset.pattern.permute.xlu0 0
      %897 = vperm.xlu0 %896, %v805
      %v898 = vpop.permute.xlu0 %897
      %901 = vset.pattern.permute.xlu0 0
      %902 = vperm.xlu0 %901, %v806
      %v903 = vpop.permute.xlu0 %902
      %906 = vset.pattern.permute.xlu0 0
      %907 = vperm.xlu0 %906, %v807
      %v908 = vpop.permute.xlu0 %907
      %911 = vset.pattern.permute.xlu0 0
      %912 = vperm.xlu0 %911, %v808
      %v913 = vpop.permute.xlu0 %912
      %916 = vset.pattern.permute.xlu0 0
      %917 = vperm.xlu0 %916, %v809
      %v918 = vpop.permute.xlu0 %917
      %921 = vset.pattern.permute.xlu0 0
      %922 = vperm.xlu0 %921, %v810
      %v923 = vpop.permute.xlu0 %922
      %926 = vset.pattern.permute.xlu0 0
      %927 = vperm.xlu0 %926, %v811
      %v928 = vpop.permute.xlu0 %927
      %931 = vset.pattern.permute.xlu0 0
      %932 = vperm.xlu0 %931, %v812
      %v933 = vpop.permute.xlu0 %932
      %936 = vset.pattern.permute.xlu0 0
      %937 = vperm.xlu0 %936, %v813
      %v938 = vpop.permute.xlu0 %937
      %941 = vset.pattern.permute.xlu0 0
      %942 = vperm.xlu0 %941, %v814
      %v943 = vpop.permute.xlu0 %942
      %946 = vset.pattern.permute.xlu0 0
      %947 = vperm.xlu0 %946, %v815
      %v948 = vpop.permute.xlu0 %947
      %951 = vset.pattern.permute.xlu0 0
      %952 = vperm.xlu0 %951, %v816
      %v953 = vpop.permute.xlu0 %952
      %956 = vset.pattern.permute.xlu0 0
      %957 = vperm.xlu0 %956, %v817
      %v958 = vpop.permute.xlu0 %957
      %961 = vset.pattern.permute.xlu0 0
      %962 = vperm.xlu0 %961, %v818
      %v963 = vpop.permute.xlu0 %962
      %966 = vset.pattern.permute.xlu0 0
      %967 = vperm.xlu0 %966, %v819
      %v968 = vpop.permute.xlu0 %967
      %971 = vset.pattern.permute.xlu0 0
      %972 = vperm.xlu0 %971, %v820
      %v973 = vpop.permute.xlu0 %972
      %976 = vset.pattern.permute.xlu0 0
      %977 = vperm.xlu0 %976, %v821
      %v978 = vpop.permute.xlu0 %977
      %981 = vset.pattern.permute.xlu0 0
      %982 = vperm.xlu0 %981, %v822
      %v983 = vpop.permute.xlu0 %982
      %986 = vset.pattern.permute.xlu0 0
      %987 = vperm.xlu0 %986, %v823
      %v988 = vpop.permute.xlu0 %987
      %991 = vset.pattern.permute.xlu0 0
      %992 = vperm.xlu0 %991, %v824
      %v993 = vpop.permute.xlu0 %992
      %996 = vset.pattern.permute.xlu0 0
      %997 = vperm.xlu0 %996, %v825
      %v998 = vpop.permute.xlu0 %997
      %1001 = vset.pattern.permute.xlu0 0
      %1002 = vperm.xlu0 %1001, %v826
      %v1003 = vpop.permute.xlu0 %1002
      %1006 = vset.pattern.permute.xlu0 0
      %1007 = vperm.xlu0 %1006, %v827
      %v1008 = vpop.permute.xlu0 %1007
      %1011 = vset.pattern.permute.xlu0 0
      %1012 = vperm.xlu0 %1011, %v828
      %v1013 = vpop.permute.xlu0 %1012
      %1016 = vset.pattern.permute.xlu0 0
      %1017 = vperm.xlu0 %1016, %v829
      %v1018 = vpop.permute.xlu0 %1017
      %1021 = vset.pattern.permute.xlu0 0
      %1022 = vperm.xlu0 %1021, %v830
      %v1023 = vpop.permute.xlu0 %1022
      %1026 = vset.pattern.permute.xlu0 0
      %1027 = vperm.xlu0 %1026, %v831
      %v1028 = vpop.permute.xlu0 %1027
      %1031 = vset.pattern.permute.xlu0 0
      %1032 = vperm.xlu0 %1031, %v832
      %v1033 = vpop.permute.xlu0 %1032
      %1036 = vset.pattern.permute.xlu0 0
      %1037 = vperm.xlu0 %1036, %v833
      %v1038 = vpop.permute.xlu0 %1037
      %1041 = vset.pattern.permute.xlu0 0
      %1042 = vperm.xlu0 %1041, %v834
      %v1043 = vpop.permute.xlu0 %1042
      %v1045 = vmul.f32 %v751, %v838
      %v1046 = vmul.f32 %v752, %v843
      %v1047 = vmul.f32 %v753, %v848
      %v1048 = vmul.f32 %v754, %v853
      %v1049 = vmul.f32 %v755, %v858
      %v1050 = vmul.f32 %v756, %v863
      %v1051 = vmul.f32 %v757, %v868
      %v1052 = vmul.f32 %v758, %v873
      %v1053 = vmul.f32 %v759, %v878
      %v1054 = vmul.f32 %v760, %v883
      %v1055 = vmul.f32 %v761, %v888
      %v1056 = vmul.f32 %v762, %v893
      %v1057 = vmul.f32 %v763, %v898
      %v1058 = vmul.f32 %v764, %v903
      %v1059 = vmul.f32 %v765, %v908
      %v1060 = vmul.f32 %v766, %v913
      %v1061 = vmul.f32 %v767, %v918
      %v1062 = vmul.f32 %v768, %v923
      %v1063 = vmul.f32 %v769, %v928
      %v1064 = vmul.f32 %v770, %v933
      %v1065 = vmul.f32 %v771, %v938
      %v1066 = vmul.f32 %v772, %v943
      %v1067 = vmul.f32 %v773, %v948
      %v1068 = vmul.f32 %v774, %v953
      %v1069 = vmul.f32 %v775, %v958
      %v1070 = vmul.f32 %v776, %v963
      %v1071 = vmul.f32 %v777, %v968
      %v1072 = vmul.f32 %v778, %v973
      %v1073 = vmul.f32 %v779, %v978
      %v1074 = vmul.f32 %v780, %v983
      %v1075 = vmul.f32 %v781, %v988
      %v1076 = vmul.f32 %v782, %v993
      %v1077 = vmul.f32 %v783, %v998
      %v1078 = vmul.f32 %v784, %v1003
      %v1079 = vmul.f32 %v785, %v1008
      %v1080 = vmul.f32 %v786, %v1013
      %v1081 = vmul.f32 %v787, %v1018
      %v1082 = vmul.f32 %v788, %v1023
      %v1083 = vmul.f32 %v789, %v1028
      %v1084 = vmul.f32 %v790, %v1033
      %v1085 = vmul.f32 %v791, %v1038
      %v1086 = vmul.f32 %v792, %v1043
      %v1087 = vpack.c.bf16 %v1046, %v1045
      %v1088 = vpack.c.bf16 %v1048, %v1047
      %v1089 = vpack.c.bf16 %v1050, %v1049
      %v1090 = vpack.c.bf16 %v1052, %v1051
      %v1091 = vpack.c.bf16 %v1054, %v1053
      %v1092 = vpack.c.bf16 %v1056, %v1055
      %v1093 = vpack.c.bf16 %v1058, %v1057
      %v1094 = vpack.c.bf16 %v1060, %v1059
      %v1095 = vpack.c.bf16 %v1062, %v1061
      %v1096 = vpack.c.bf16 %v1064, %v1063
      %v1097 = vpack.c.bf16 %v1066, %v1065
      %v1098 = vpack.c.bf16 %v1068, %v1067
      %v1099 = vpack.c.bf16 %v1070, %v1069
      %v1100 = vpack.c.bf16 %v1072, %v1071
      %v1101 = vpack.c.bf16 %v1074, %v1073
      %v1102 = vpack.c.bf16 %v1076, %v1075
      %v1103 = vpack.c.bf16 %v1078, %v1077
      %v1104 = vpack.c.bf16 %v1080, %v1079
      %v1105 = vpack.c.bf16 %v1082, %v1081
      %v1106 = vpack.c.bf16 %v1084, %v1083
      %v1107 = vpack.c.bf16 %v1086, %v1085
      %1108 = vst [vmem:[#allocation2 + $0x10] sm:$0xff] %v1087
      %1109 = vst [vmem:[#allocation2 + $0x18] sm:$0xff] %v1088
      %1110 = vst [vmem:[#allocation2 + $0x20] sm:$0xff] %v1089
      %1111 = vst [vmem:[#allocation2 + $0x28] sm:$0xff] %v1090
      %1112 = vst [vmem:[#allocation2 + $0x30] sm:$0xff] %v1091
      %1113 = vst [vmem:[#allocation2 + $0x38] sm:$0xff] %v1092
      %1114 = vst [vmem:[#allocation2 + $0x40] sm:$0xff] %v1093
      %1115 = vst [vmem:[#allocation2 + $0x48] sm:$0xff] %v1094
      %1116 = vst [vmem:[#allocation2 + $0x50] sm:$0xff] %v1095
      %1117 = vst [vmem:[#allocation2 + $0x58] sm:$0xff] %v1096
      %1118 = vst [vmem:[#allocation2 + $0x60] sm:$0xff] %v1097
      %1119 = vst [vmem:[#allocation2 + $0x68] sm:$0xff] %v1098
      %1120 = vst [vmem:[#allocation2 + $0x70] sm:$0xff] %v1099
      %1121 = vst [vmem:[#allocation2 + $0x78] sm:$0xff] %v1100
      %1122 = vst [vmem:[#allocation2 + $0x80] sm:$0xff] %v1101
      %1123 = vst [vmem:[#allocation2 + $0x88] sm:$0xff] %v1102
      %1124 = vst [vmem:[#allocation2 + $0x90] sm:$0xff] %v1103
      %1125 = vst [vmem:[#allocation2 + $0x98] sm:$0xff] %v1104
      %1126 = vst [vmem:[#allocation2 + $0xa0] sm:$0xff] %v1105
      %1127 = vst [vmem:[#allocation2 + $0xa8] sm:$0xff] %v1106
      %1128 = vst [vmem:[#allocation2 + $0xb0] sm:$0xff] %v1107
      %v1129 = vld [vmem:[#allocation2] sm:$0xc0]
      %v1130 = vld [vmem:[#allocation2 + $0x8] sm:$0xff]
      %v1131 = vld [vmem:[#allocation2 + $0x10] sm:$0xff]
      %v1132 = vld [vmem:[#allocation2 + $0x18] sm:$0xff]
      %v1133 = vld [vmem:[#allocation2 + $0x20] sm:$0xff]
      %v1134 = vld [vmem:[#allocation2 + $0x28] sm:$0xff]
      %v1135 = vld [vmem:[#allocation2 + $0x30] sm:$0xff]
      %v1136 = vld [vmem:[#allocation2 + $0x38] sm:$0xff]
      %v1137 = vld [vmem:[#allocation2 + $0x40] sm:$0xff]
      %v1138 = vld [vmem:[#allocation2 + $0x48] sm:$0xff]
      %v1139 = vld [vmem:[#allocation2 + $0x50] sm:$0xff]
      %v1140 = vld [vmem:[#allocation2 + $0x58] sm:$0xff]
      %v1141 = vld [vmem:[#allocation2 + $0x60] sm:$0xff]
      %v1142 = vld [vmem:[#allocation2 + $0x68] sm:$0xff]
      %v1143 = vld [vmem:[#allocation2 + $0x70] sm:$0xff]
      %v1144 = vld [vmem:[#allocation2 + $0x78] sm:$0xff]
      %v1145 = vld [vmem:[#allocation2 + $0x80] sm:$0xff]
      %v1146 = vld [vmem:[#allocation2 + $0x88] sm:$0xff]
      %v1147 = vld [vmem:[#allocation2 + $0x90] sm:$0xff]
      %v1148 = vld [vmem:[#allocation2 + $0x98] sm:$0xff]
      %v1149 = vld [vmem:[#allocation2 + $0xa0] sm:$0xff]
      %v1150 = vld [vmem:[#allocation2 + $0xa8] sm:$0x7f]
      %v1151 = vld [vmem:[%s4] sm:$0xf]
      %v1152 = vld [vmem:[%s4 + $0x4] sm:$0xf]
      %v1153 = vld [vmem:[%s4 + $0x8] sm:$0xf]
      %v1154 = vld [vmem:[%s4 + $0xc] sm:$0xf]
      %v1155 = vld [vmem:[%s4 + $0x10] sm:$0xf]
      %v1156 = vld [vmem:[%s4 + $0x14] sm:$0xf]
      %v1157 = vld [vmem:[%s4 + $0x18] sm:$0xf]
      %v1158 = vld [vmem:[%s4 + $0x1c] sm:$0xf]
      %v1159 = vld [vmem:[%s4 + $0x20] sm:$0xf]
      %v1160 = vld [vmem:[%s4 + $0x24] sm:$0xf]
      %v1161 = vld [vmem:[%s4 + $0x28] sm:$0xf]
      %v1162 = vld [vmem:[%s4 + $0x2c] sm:$0xf]
      %v1163 = vld [vmem:[%s4 + $0x30] sm:$0xf]
      %v1164 = vld [vmem:[%s4 + $0x34] sm:$0xf]
      %v1165 = vld [vmem:[%s4 + $0x38] sm:$0xf]
      %v1166 = vld [vmem:[%s4 + $0x3c] sm:$0xf]
      %v1167 = vld [vmem:[#allocation2] sm:$0x80]
      %s1168 = scalar_lea.vmem %s4, 64
      %v1169 = vld [vmem:[%s1168] sm:$0xf]
      %v1170 = vld [vmem:[%s1168 + $0x4] sm:$0xf]
      %v1171 = vld [vmem:[%s1168 + $0x8] sm:$0xf]
      %v1172 = vld [vmem:[%s1168 + $0xc] sm:$0xf]
      %v1173 = vld [vmem:[%s1168 + $0x10] sm:$0xf]
      %v1174 = vld [vmem:[%s1168 + $0x14] sm:$0xf]
      %v1175 = vld [vmem:[%s1168 + $0x18] sm:$0xf]
      %v1176 = vld [vmem:[%s1168 + $0x1c] sm:$0xf]
      %v1177 = vld [vmem:[%s1168 + $0x20] sm:$0xf]
      %v1178 = vld [vmem:[%s1168 + $0x24] sm:$0xf]
      %v1179 = vld [vmem:[%s1168 + $0x28] sm:$0xf]
      %v1180 = vld [vmem:[%s1168 + $0x2c] sm:$0xf]
      %v1181 = vld [vmem:[%s1168 + $0x30] sm:$0xf]
      %v1182 = vld [vmem:[%s1168 + $0x34] sm:$0xf]
      %v1183 = vld [vmem:[%s1168 + $0x38] sm:$0xf]
      %v1184 = vld [vmem:[%s1168 + $0x3c] sm:$0xf]
      %vm1207 = vcmask 1040384
      %v1208 = vrot.slane %v1167, 7
      %v1209 = vrot.slane %v1130, 7
      %v1210 = vsel %vm1207, %v1208, %v1209
      %v1211 = vrot.slane %v1131, 7
      %v1212 = vsel %vm1207, %v1209, %v1211
      %v1213 = vrot.slane %v1132, 7
      %v1214 = vsel %vm1207, %v1211, %v1213
      %v1215 = vrot.slane %v1133, 7
      %v1216 = vsel %vm1207, %v1213, %v1215
      %v1217 = vrot.slane %v1134, 7
      %v1218 = vsel %vm1207, %v1215, %v1217
      %v1219 = vrot.slane %v1135, 7
      %v1220 = vsel %vm1207, %v1217, %v1219
      %v1221 = vrot.slane %v1136, 7
      %v1222 = vsel %vm1207, %v1219, %v1221
      %v1223 = vrot.slane %v1137, 7
      %v1224 = vsel %vm1207, %v1221, %v1223
      %v1225 = vrot.slane %v1138, 7
      %v1226 = vsel %vm1207, %v1223, %v1225
      %v1227 = vrot.slane %v1139, 7
      %v1228 = vsel %vm1207, %v1225, %v1227
      %v1229 = vrot.slane %v1140, 7
      %v1230 = vsel %vm1207, %v1227, %v1229
      %v1231 = vrot.slane %v1141, 7
      %v1232 = vsel %vm1207, %v1229, %v1231
      %v1233 = vrot.slane %v1142, 7
      %v1234 = vsel %vm1207, %v1231, %v1233
      %v1235 = vrot.slane %v1143, 7
      %v1236 = vsel %vm1207, %v1233, %v1235
      %v1237 = vrot.slane %v1144, 7
      %v1238 = vsel %vm1207, %v1235, %v1237
      %v1239 = vrot.slane %v1145, 7
      %v1240 = vsel %vm1207, %v1237, %v1239
      %v1241 = vrot.slane %v1146, 7
      %v1242 = vsel %vm1207, %v1239, %v1241
      %v1243 = vrot.slane %v1147, 7
      %v1244 = vsel %vm1207, %v1241, %v1243
      %v1245 = vrot.slane %v1148, 7
      %v1246 = vsel %vm1207, %v1243, %v1245
      %v1247 = vrot.slane %v1149, 7
      %v1248 = vsel %vm1207, %v1245, %v1247
      %v1249 = vrot.slane %v1150, 7
      %v1250 = vsel %vm1207, %v1247, %v1249
      %v1288 = vunpack.c.l.b16 %v1169
      %v1289 = vunpack.c.l.b16 %v1170
      %v1290 = vunpack.c.l.b16 %v1171
      %v1291 = vunpack.c.l.b16 %v1172
      %v1292 = vunpack.c.l.b16 %v1173
      %v1293 = vunpack.c.l.b16 %v1174
      %v1294 = vunpack.c.l.b16 %v1175
      %v1295 = vunpack.c.l.b16 %v1176
      %v1296 = vunpack.c.l.b16 %v1177
      %v1297 = vunpack.c.l.b16 %v1178
      %v1298 = vunpack.c.l.b16 %v1179
      %v1299 = vunpack.c.l.b16 %v1180
      %v1300 = vunpack.c.l.b16 %v1181
      %v1301 = vunpack.c.l.b16 %v1182
      %v1302 = vunpack.c.l.b16 %v1183
      %v1303 = vunpack.c.l.b16 %v1184
      %v1304 = vpack.c.b16 %v1289, %v1288
      %v1305 = vpack.c.b16 %v1291, %v1290
      %v1306 = vpack.c.b16 %v1293, %v1292
      %v1307 = vpack.c.b16 %v1295, %v1294
      %v1308 = vpack.c.b16 %v1297, %v1296
      %v1309 = vpack.c.b16 %v1299, %v1298
      %v1310 = vpack.c.b16 %v1301, %v1300
      %v1311 = vpack.c.b16 %v1303, %v1302
      %1320 = vmatprep.subr.bf16.mxu0 0
      %1321 = vmatpush1.bf16.msra.mxu0 %v1304
      %1322 = vmatprep.subr.bf16.mxu0 0
      %1323 = vmatpush1.bf16.msra.mxu0 %v1305
      %1324 = vmatprep.subr.bf16.mxu0 0
      %1325 = vmatpush1.bf16.msra.mxu0 %v1306
      %1326 = vmatprep.subr.bf16.mxu0 0
      %1327 = vmatpush1.bf16.msra.mxu0 %v1307
      %1328 = vmatprep.subr.bf16.mxu0 0
      %1329 = vmatpush1.bf16.msra.mxu0 %v1308
      %1330 = vmatprep.subr.bf16.mxu0 0
      %1331 = vmatpush1.bf16.msra.mxu0 %v1309
      %1332 = vmatprep.subr.bf16.mxu0 0
      %1333 = vmatpush1.bf16.msra.mxu0 %v1310
      %1334 = vmatprep.subr.bf16.mxu0 0
      %1335 = vmatpush1.bf16.msra.mxu0 %v1311
      %1336 = vmatprep.subr.bf16.mxu0 0
      %1337 = vmatpush1.bf16.msra.mxu0 0
      %1338 = vmatprep.subr.bf16.mxu0 0
      %1339 = vmatpush1.bf16.msra.mxu0 0
      %1340 = vmatprep.subr.bf16.mxu0 0
      %1341 = vmatpush1.bf16.msra.mxu0 0
      %1342 = vmatprep.subr.bf16.mxu0 0
      %1343 = vmatpush1.bf16.msra.mxu0 0
      %1344 = vmatprep.subr.bf16.mxu0 0
      %1345 = vmatpush1.bf16.msra.mxu0 0
      %1346 = vmatprep.subr.bf16.mxu0 0
      %1347 = vmatpush1.bf16.msra.mxu0 0
      %1348 = vmatprep.subr.bf16.mxu0 0
      %1349 = vmatpush1.bf16.msra.mxu0 0
      %1350 = vmatprep.subr.bf16.mxu0 0
      %1351 = vmatpush1.bf16.msra.mxu0 0
      %1352 = vmatprep.mubr.bf16.mxu0 0
      %1353 = vmatmul.mubr.bf16.gmra.mrb[0].mxu0 %v1210
      %v1354 = vpop.f32.mrb[0].mxu0
      %v1355 = vadd.f32 0.0, %v1354
      %v1356 = vpop.f32.mrb[0].mxu0
      %v1357 = vpop.f32.mrb[0].mxu0
      %v1358 = vadd.f32 0.0, %v1357
      %v1359 = vpop.f32.mrb[0].mxu0
      %1360 = vmatprep.mubr.bf16.mxu0 0
      %1361 = vmatmul.mubr.bf16.gmra.mrb[0].mxu0 %v1212
      %v1362 = vpop.f32.mrb[0].mxu0
      %v1363 = vadd.f32 0.0, %v1362
      %v1364 = vpop.f32.mrb[0].mxu0
      %v1365 = vpop.f32.mrb[0].mxu0
      %v1366 = vadd.f32 0.0, %v1365
      %v1367 = vpop.f32.mrb[0].mxu0
      %1368 = vmatprep.mubr.bf16.mxu0 0
      %1369 = vmatmul.mubr.bf16.gmra.mrb[0].mxu0 %v1214
      %v1370 = vpop.f32.mrb[0].mxu0
      %v1371 = vadd.f32 0.0, %v1370
      %v1372 = vpop.f32.mrb[0].mxu0
      %v1373 = vpop.f32.mrb[0].mxu0
      %v1374 = vadd.f32 0.0, %v1373
      %v1375 = vpop.f32.mrb[0].mxu0
      %1376 = vmatprep.mubr.bf16.mxu0 0
      %1377 = vmatmul.mubr.bf16.gmra.mrb[0].mxu0 %v1216
      %v1378 = vpop.f32.mrb[0].mxu0
      %v1379 = vadd.f32 0.0, %v1378
      %v1380 = vpop.f32.mrb[0].mxu0
      %v1381 = vpop.f32.mrb[0].mxu0
      %v1382 = vadd.f32 0.0, %v1381
      %v1383 = vpop.f32.mrb[0].mxu0
      %1384 = vmatprep.mubr.bf16.mxu0 0
      %1385 = vmatmul.mubr.bf16.gmra.mrb[0].mxu0 %v1218
      %v1386 = vpop.f32.mrb[0].mxu0
      %v1387 = vadd.f32 0.0, %v1386
      %v1388 = vpop.f32.mrb[0].mxu0
      %v1389 = vpop.f32.mrb[0].mxu0
      %v1390 = vadd.f32 0.0, %v1389
      %v1391 = vpop.f32.mrb[0].mxu0
      %1392 = vmatprep.mubr.bf16.mxu0 0
      %1393 = vmatmul.mubr.bf16.gmra.mrb[0].mxu0 %v1220
      %v1394 = vpop.f32.mrb[0].mxu0
      %v1395 = vadd.f32 0.0, %v1394
      %v1396 = vpop.f32.mrb[0].mxu0
      %v1397 = vpop.f32.mrb[0].mxu0
      %v1398 = vadd.f32 0.0, %v1397
      %v1399 = vpop.f32.mrb[0].mxu0
      %1400 = vmatprep.mubr.bf16.mxu0 0
      %1401 = vmatmul.mubr.bf16.gmra.mrb[0].mxu0 %v1222
      %v1402 = vpop.f32.mrb[0].mxu0
      %v1403 = vadd.f32 0.0, %v1402
      %v1404 = vpop.f32.mrb[0].mxu0
      %v1405 = vpop.f32.mrb[0].mxu0
      %v1406 = vadd.f32 0.0, %v1405
      %v1407 = vpop.f32.mrb[0].mxu0
      %1408 = vmatprep.mubr.bf16.mxu0 0
      %1409 = vmatmul.mubr.bf16.gmra.mrb[0].mxu0 %v1224
      %v1410 = vpop.f32.mrb[0].mxu0
      %v1411 = vadd.f32 0.0, %v1410
      %v1412 = vpop.f32.mrb[0].mxu0
      %v1413 = vpop.f32.mrb[0].mxu0
      %v1414 = vadd.f32 0.0, %v1413
      %v1415 = vpop.f32.mrb[0].mxu0
      %1416 = vmatprep.mubr.bf16.mxu0 0
      %1417 = vmatmul.mubr.bf16.gmra.mrb[0].mxu0 %v1226
      %v1418 = vpop.f32.mrb[0].mxu0
      %v1419 = vadd.f32 0.0, %v1418
      %v1420 = vpop.f32.mrb[0].mxu0
      %v1421 = vpop.f32.mrb[0].mxu0
      %v1422 = vadd.f32 0.0, %v1421
      %v1423 = vpop.f32.mrb[0].mxu0
      %1424 = vmatprep.mubr.bf16.mxu0 0
      %1425 = vmatmul.mubr.bf16.gmra.mrb[0].mxu0 %v1228
      %v1426 = vpop.f32.mrb[0].mxu0
      %v1427 = vadd.f32 0.0, %v1426
      %v1428 = vpop.f32.mrb[0].mxu0
      %v1429 = vpop.f32.mrb[0].mxu0
      %v1430 = vadd.f32 0.0, %v1429
      %v1431 = vpop.f32.mrb[0].mxu0
      %1432 = vmatprep.mubr.bf16.mxu0 0
      %1433 = vmatmul.mubr.bf16.gmra.mrb[0].mxu0 %v1230
      %v1434 = vpop.f32.mrb[0].mxu0
      %v1435 = vadd.f32 0.0, %v1434
      %v1436 = vpop.f32.mrb[0].mxu0
      %v1437 = vpop.f32.mrb[0].mxu0
      %v1438 = vadd.f32 0.0, %v1437
      %v1439 = vpop.f32.mrb[0].mxu0
      %1440 = vmatprep.mubr.bf16.mxu0 0
      %1441 = vmatmul.mubr.bf16.gmra.mrb[0].mxu0 %v1232
      %v1442 = vpop.f32.mrb[0].mxu0
      %v1443 = vadd.f32 0.0, %v1442
      %v1444 = vpop.f32.mrb[0].mxu0
      %v1445 = vpop.f32.mrb[0].mxu0
      %v1446 = vadd.f32 0.0, %v1445
      %v1447 = vpop.f32.mrb[0].mxu0
      %1448 = vmatprep.mubr.bf16.mxu0 0
      %1449 = vmatmul.mubr.bf16.gmra.mrb[0].mxu0 %v1234
      %v1450 = vpop.f32.mrb[0].mxu0
      %v1451 = vadd.f32 0.0, %v1450
      %v1452 = vpop.f32.mrb[0].mxu0
      %v1453 = vpop.f32.mrb[0].mxu0
      %v1454 = vadd.f32 0.0, %v1453
      %v1455 = vpop.f32.mrb[0].mxu0
      %1456 = vmatprep.mubr.bf16.mxu0 0
      %1457 = vmatmul.mubr.bf16.gmra.mrb[0].mxu0 %v1236
      %v1458 = vpop.f32.mrb[0].mxu0
      %v1459 = vadd.f32 0.0, %v1458
      %v1460 = vpop.f32.mrb[0].mxu0
      %v1461 = vpop.f32.mrb[0].mxu0
      %v1462 = vadd.f32 0.0, %v1461
      %v1463 = vpop.f32.mrb[0].mxu0
      %1464 = vmatprep.mubr.bf16.mxu0 0
      %1465 = vmatmul.mubr.bf16.gmra.mrb[0].mxu0 %v1238
      %v1466 = vpop.f32.mrb[0].mxu0
      %v1467 = vadd.f32 0.0, %v1466
      %v1468 = vpop.f32.mrb[0].mxu0
      %v1469 = vpop.f32.mrb[0].mxu0
      %v1470 = vadd.f32 0.0, %v1469
      %v1471 = vpop.f32.mrb[0].mxu0
      %1472 = vmatprep.mubr.bf16.mxu0 0
      %1473 = vmatmul.mubr.bf16.gmra.mrb[0].mxu0 %v1240
      %v1474 = vpop.f32.mrb[0].mxu0
      %v1475 = vadd.f32 0.0, %v1474
      %v1476 = vpop.f32.mrb[0].mxu0
      %v1477 = vpop.f32.mrb[0].mxu0
      %v1478 = vadd.f32 0.0, %v1477
      %v1479 = vpop.f32.mrb[0].mxu0
      %1480 = vmatprep.mubr.bf16.mxu0 0
      %1481 = vmatmul.mubr.bf16.gmra.mrb[0].mxu0 %v1242
      %v1482 = vpop.f32.mrb[0].mxu0
      %v1483 = vadd.f32 0.0, %v1482
      %v1484 = vpop.f32.mrb[0].mxu0
      %v1485 = vpop.f32.mrb[0].mxu0
      %v1486 = vadd.f32 0.0, %v1485
      %v1487 = vpop.f32.mrb[0].mxu0
      %1488 = vmatprep.mubr.bf16.mxu0 0
      %1489 = vmatmul.mubr.bf16.gmra.mrb[0].mxu0 %v1244
      %v1490 = vpop.f32.mrb[0].mxu0
      %v1491 = vadd.f32 0.0, %v1490
      %v1492 = vpop.f32.mrb[0].mxu0
      %v1493 = vpop.f32.mrb[0].mxu0
      %v1494 = vadd.f32 0.0, %v1493
      %v1495 = vpop.f32.mrb[0].mxu0
      %1496 = vmatprep.mubr.bf16.mxu0 0
      %1497 = vmatmul.mubr.bf16.gmra.mrb[0].mxu0 %v1246
      %v1498 = vpop.f32.mrb[0].mxu0
      %v1499 = vadd.f32 0.0, %v1498
      %v1500 = vpop.f32.mrb[0].mxu0
      %v1501 = vpop.f32.mrb[0].mxu0
      %v1502 = vadd.f32 0.0, %v1501
      %v1503 = vpop.f32.mrb[0].mxu0
      %1504 = vmatprep.mubr.bf16.mxu0 0
      %1505 = vmatmul.mubr.bf16.gmra.mrb[0].mxu0 %v1248
      %v1506 = vpop.f32.mrb[0].mxu0
      %v1507 = vadd.f32 0.0, %v1506
      %v1508 = vpop.f32.mrb[0].mxu0
      %v1509 = vpop.f32.mrb[0].mxu0
      %v1510 = vadd.f32 0.0, %v1509
      %v1511 = vpop.f32.mrb[0].mxu0
      %1512 = vmatprep.mubr.bf16.mxu0 0
      %1513 = vmatmul.mubr.bf16.gmra.mrb[0].mxu0 %v1250
      %v1514 = vpop.f32.mrb[0].mxu0
      %v1515 = vadd.f32 0.0, %v1514
      %v1516 = vpop.f32.mrb[0].mxu0
      %v1517 = vpop.f32.mrb[0].mxu0
      %v1518 = vadd.f32 0.0, %v1517
      %v1519 = vpop.f32.mrb[0].mxu0
      %1520 = vdwg.mxu0
      %vm1521 = vsmask.f32 1280
      %v1523 = vshrl.u32 %v1129, 16
      %v1525 = vrot.slane %v1523, 6
      %v1526 = vshll.u32 %v1129, 16
      %v1528 = vrot.slane %v1526, 7
      %v1529 = vor.u32 %v1525, %v1528
      %v1531 = vshrl.u32 %v1130, 16
      %v1533 = vrot.slane %v1531, 6
      %v1534 = vshll.u32 %v1130, 16
      %v1536 = vrot.slane %v1534, 7
      %v1537 = vor.u32 %v1533, %v1536
      %v1538 = vsel %vm1521, %v1529, %v1537
      %v1540 = vshrl.u32 %v1131, 16
      %v1542 = vrot.slane %v1540, 6
      %v1543 = vshll.u32 %v1131, 16
      %v1545 = vrot.slane %v1543, 7
      %v1546 = vor.u32 %v1542, %v1545
      %v1547 = vsel %vm1521, %v1537, %v1546
      %v1549 = vshrl.u32 %v1132, 16
      %v1551 = vrot.slane %v1549, 6
      %v1552 = vshll.u32 %v1132, 16
      %v1554 = vrot.slane %v1552, 7
      %v1555 = vor.u32 %v1551, %v1554
      %v1556 = vsel %vm1521, %v1546, %v1555
      %v1558 = vshrl.u32 %v1133, 16
      %v1560 = vrot.slane %v1558, 6
      %v1561 = vshll.u32 %v1133, 16
      %v1563 = vrot.slane %v1561, 7
      %v1564 = vor.u32 %v1560, %v1563
      %v1565 = vsel %vm1521, %v1555, %v1564
      %v1567 = vshrl.u32 %v1134, 16
      %v1569 = vrot.slane %v1567, 6
      %v1570 = vshll.u32 %v1134, 16
      %v1572 = vrot.slane %v1570, 7
      %v1573 = vor.u32 %v1569, %v1572
      %v1574 = vsel %vm1521, %v1564, %v1573
      %v1576 = vshrl.u32 %v1135, 16
      %v1578 = vrot.slane %v1576, 6
      %v1579 = vshll.u32 %v1135, 16
      %v1581 = vrot.slane %v1579, 7
      %v1582 = vor.u32 %v1578, %v1581
      %v1583 = vsel %vm1521, %v1573, %v1582
      %v1585 = vshrl.u32 %v1136, 16
      %v1587 = vrot.slane %v1585, 6
      %v1588 = vshll.u32 %v1136, 16
      %v1590 = vrot.slane %v1588, 7
      %v1591 = vor.u32 %v1587, %v1590
      %v1592 = vsel %vm1521, %v1582, %v1591
      %v1594 = vshrl.u32 %v1137, 16
      %v1596 = vrot.slane %v1594, 6
      %v1597 = vshll.u32 %v1137, 16
      %v1599 = vrot.slane %v1597, 7
      %v1600 = vor.u32 %v1596, %v1599
      %v1601 = vsel %vm1521, %v1591, %v1600
      %v1603 = vshrl.u32 %v1138, 16
      %v1605 = vrot.slane %v1603, 6
      %v1606 = vshll.u32 %v1138, 16
      %v1608 = vrot.slane %v1606, 7
      %v1609 = vor.u32 %v1605, %v1608
      %v1610 = vsel %vm1521, %v1600, %v1609
      %v1612 = vshrl.u32 %v1139, 16
      %v1614 = vrot.slane %v1612, 6
      %v1615 = vshll.u32 %v1139, 16
      %v1617 = vrot.slane %v1615, 7
      %v1618 = vor.u32 %v1614, %v1617
      %v1619 = vsel %vm1521, %v1609, %v1618
      %v1621 = vshrl.u32 %v1140, 16
      %v1623 = vrot.slane %v1621, 6
      %v1624 = vshll.u32 %v1140, 16
      %v1626 = vrot.slane %v1624, 7
      %v1627 = vor.u32 %v1623, %v1626
      %v1628 = vsel %vm1521, %v1618, %v1627
      %v1630 = vshrl.u32 %v1141, 16
      %v1632 = vrot.slane %v1630, 6
      %v1633 = vshll.u32 %v1141, 16
      %v1635 = vrot.slane %v1633, 7
      %v1636 = vor.u32 %v1632, %v1635
      %v1637 = vsel %vm1521, %v1627, %v1636
      %v1639 = vshrl.u32 %v1142, 16
      %v1641 = vrot.slane %v1639, 6
      %v1642 = vshll.u32 %v1142, 16
      %v1644 = vrot.slane %v1642, 7
      %v1645 = vor.u32 %v1641, %v1644
      %v1646 = vsel %vm1521, %v1636, %v1645
      %v1648 = vshrl.u32 %v1143, 16
      %v1650 = vrot.slane %v1648, 6
      %v1651 = vshll.u32 %v1143, 16
      %v1653 = vrot.slane %v1651, 7
      %v1654 = vor.u32 %v1650, %v1653
      %v1655 = vsel %vm1521, %v1645, %v1654
      %v1657 = vshrl.u32 %v1144, 16
      %v1659 = vrot.slane %v1657, 6
      %v1660 = vshll.u32 %v1144, 16
      %v1662 = vrot.slane %v1660, 7
      %v1663 = vor.u32 %v1659, %v1662
      %v1664 = vsel %vm1521, %v1654, %v1663
      %v1666 = vshrl.u32 %v1145, 16
      %v1668 = vrot.slane %v1666, 6
      %v1669 = vshll.u32 %v1145, 16
      %v1671 = vrot.slane %v1669, 7
      %v1672 = vor.u32 %v1668, %v1671
      %v1673 = vsel %vm1521, %v1663, %v1672
      %v1675 = vshrl.u32 %v1146, 16
      %v1677 = vrot.slane %v1675, 6
      %v1678 = vshll.u32 %v1146, 16
      %v1680 = vrot.slane %v1678, 7
      %v1681 = vor.u32 %v1677, %v1680
      %v1682 = vsel %vm1521, %v1672, %v1681
      %v1684 = vshrl.u32 %v1147, 16
      %v1686 = vrot.slane %v1684, 6
      %v1687 = vshll.u32 %v1147, 16
      %v1689 = vrot.slane %v1687, 7
      %v1690 = vor.u32 %v1686, %v1689
      %v1691 = vsel %vm1521, %v1681, %v1690
      %v1693 = vshrl.u32 %v1148, 16
      %v1695 = vrot.slane %v1693, 6
      %v1696 = vshll.u32 %v1148, 16
      %v1698 = vrot.slane %v1696, 7
      %v1699 = vor.u32 %v1695, %v1698
      %v1700 = vsel %vm1521, %v1690, %v1699
      %v1702 = vshrl.u32 %v1149, 16
      %v1704 = vrot.slane %v1702, 6
      %v1705 = vshll.u32 %v1149, 16
      %v1707 = vrot.slane %v1705, 7
      %v1708 = vor.u32 %v1704, %v1707
      %v1709 = vsel %vm1521, %v1699, %v1708
      %v1711 = vshrl.u32 %v1150, 16
      %v1713 = vrot.slane %v1711, 6
      %v1714 = vshll.u32 %v1150, 16
      %v1716 = vrot.slane %v1714, 7
      %v1717 = vor.u32 %v1713, %v1716
      %v1718 = vsel %vm1521, %v1708, %v1717
      %v1756 = vunpack.c.l.b16 %v1151
      %v1757 = vunpack.c.l.b16 %v1152
      %v1758 = vunpack.c.l.b16 %v1153
      %v1759 = vunpack.c.l.b16 %v1154
      %v1760 = vunpack.c.l.b16 %v1155
      %v1761 = vunpack.c.l.b16 %v1156
      %v1762 = vunpack.c.l.b16 %v1157
      %v1763 = vunpack.c.l.b16 %v1158
      %v1764 = vunpack.c.l.b16 %v1159
      %v1765 = vunpack.c.l.b16 %v1160
      %v1766 = vunpack.c.l.b16 %v1161
      %v1767 = vunpack.c.l.b16 %v1162
      %v1768 = vunpack.c.l.b16 %v1163
      %v1769 = vunpack.c.l.b16 %v1164
      %v1770 = vunpack.c.l.b16 %v1165
      %v1771 = vunpack.c.l.b16 %v1166
      %v1772 = vpack.c.b16 %v1757, %v1756
      %v1773 = vpack.c.b16 %v1759, %v1758
      %v1774 = vpack.c.b16 %v1761, %v1760
      %v1775 = vpack.c.b16 %v1763, %v1762
      %v1776 = vpack.c.b16 %v1765, %v1764
      %v1777 = vpack.c.b16 %v1767, %v1766
      %v1778 = vpack.c.b16 %v1769, %v1768
      %v1779 = vpack.c.b16 %v1771, %v1770
      %1788 = vmatprep.subr.bf16.mxu0 0
      %1789 = vmatpush1.bf16.msra.mxu0 %v1772
      %1790 = vmatprep.subr.bf16.mxu0 0
      %1791 = vmatpush1.bf16.msra.mxu0 %v1773
      %1792 = vmatprep.subr.bf16.mxu0 0
      %1793 = vmatpush1.bf16.msra.mxu0 %v1774
      %1794 = vmatprep.subr.bf16.mxu0 0
      %1795 = vmatpush1.bf16.msra.mxu0 %v1775
      %1796 = vmatprep.subr.bf16.mxu0 0
      %1797 = vmatpush1.bf16.msra.mxu0 %v1776
      %1798 = vmatprep.subr.bf16.mxu0 0
      %1799 = vmatpush1.bf16.msra.mxu0 %v1777
      %1800 = vmatprep.subr.bf16.mxu0 0
      %1801 = vmatpush1.bf16.msra.mxu0 %v1778
      %1802 = vmatprep.subr.bf16.mxu0 0
      %1803 = vmatpush1.bf16.msra.mxu0 %v1779
      %1804 = vmatprep.subr.bf16.mxu0 0
      %1805 = vmatpush1.bf16.msra.mxu0 0
      %1806 = vmatprep.subr.bf16.mxu0 0
      %1807 = vmatpush1.bf16.msra.mxu0 0
      %1808 = vmatprep.subr.bf16.mxu0 0
      %1809 = vmatpush1.bf16.msra.mxu0 0
      %1810 = vmatprep.subr.bf16.mxu0 0
      %1811 = vmatpush1.bf16.msra.mxu0 0
      %1812 = vmatprep.subr.bf16.mxu0 0
      %1813 = vmatpush1.bf16.msra.mxu0 0
      %1814 = vmatprep.subr.bf16.mxu0 0
      %1815 = vmatpush1.bf16.msra.mxu0 0
      %1816 = vmatprep.subr.bf16.mxu0 0
      %1817 = vmatpush1.bf16.msra.mxu0 0
      %1818 = vmatprep.subr.bf16.mxu0 0
      %1819 = vmatpush1.bf16.msra.mxu0 0
      %1820 = vmatprep.mubr.bf16.mxu0 0
      %1821 = vmatmul.mubr.bf16.gmra.mrb[0].mxu0 %v1538
      %v1822 = vpop.f32.mrb[0].mxu0
      %v1823 = vadd.f32 %v1355, %v1822
      %v1824 = vpop.f32.mrb[0].mxu0
      %v1825 = vpop.f32.mrb[0].mxu0
      %v1826 = vadd.f32 %v1358, %v1825
      %v1827 = vpop.f32.mrb[0].mxu0
      %1828 = vmatprep.mubr.bf16.mxu0 0
      %1829 = vmatmul.mubr.bf16.gmra.mrb[0].mxu0 %v1547
      %v1830 = vpop.f32.mrb[0].mxu0
      %v1831 = vadd.f32 %v1363, %v1830
      %v1832 = vpop.f32.mrb[0].mxu0
      %v1833 = vpop.f32.mrb[0].mxu0
      %v1834 = vadd.f32 %v1366, %v1833
      %v1835 = vpop.f32.mrb[0].mxu0
      %1836 = vmatprep.mubr.bf16.mxu0 0
      %1837 = vmatmul.mubr.bf16.gmra.mrb[0].mxu0 %v1556
      %v1838 = vpop.f32.mrb[0].mxu0
      %v1839 = vadd.f32 %v1371, %v1838
      %v1840 = vpop.f32.mrb[0].mxu0
      %v1841 = vpop.f32.mrb[0].mxu0
      %v1842 = vadd.f32 %v1374, %v1841
      %v1843 = vpop.f32.mrb[0].mxu0
      %1844 = vmatprep.mubr.bf16.mxu0 0
      %1845 = vmatmul.mubr.bf16.gmra.mrb[0].mxu0 %v1565
      %v1846 = vpop.f32.mrb[0].mxu0
      %v1847 = vadd.f32 %v1379, %v1846
      %v1848 = vpop.f32.mrb[0].mxu0
      %v1849 = vpop.f32.mrb[0].mxu0
      %v1850 = vadd.f32 %v1382, %v1849
      %v1851 = vpop.f32.mrb[0].mxu0
      %1852 = vmatprep.mubr.bf16.mxu0 0
      %1853 = vmatmul.mubr.bf16.gmra.mrb[0].mxu0 %v1574
      %v1854 = vpop.f32.mrb[0].mxu0
      %v1855 = vadd.f32 %v1387, %v1854
      %v1856 = vpop.f32.mrb[0].mxu0
      %v1857 = vpop.f32.mrb[0].mxu0
      %v1858 = vadd.f32 %v1390, %v1857
      %v1859 = vpop.f32.mrb[0].mxu0
      %1860 = vmatprep.mubr.bf16.mxu0 0
      %1861 = vmatmul.mubr.bf16.gmra.mrb[0].mxu0 %v1583
      %v1862 = vpop.f32.mrb[0].mxu0
      %v1863 = vadd.f32 %v1395, %v1862
      %v1864 = vpop.f32.mrb[0].mxu0
      %v1865 = vpop.f32.mrb[0].mxu0
      %v1866 = vadd.f32 %v1398, %v1865
      %v1867 = vpop.f32.mrb[0].mxu0
      %1868 = vmatprep.mubr.bf16.mxu0 0
      %1869 = vmatmul.mubr.bf16.gmra.mrb[0].mxu0 %v1592
      %v1870 = vpop.f32.mrb[0].mxu0
      %v1871 = vadd.f32 %v1403, %v1870
      %v1872 = vpop.f32.mrb[0].mxu0
      %v1873 = vpop.f32.mrb[0].mxu0
      %v1874 = vadd.f32 %v1406, %v1873
      %v1875 = vpop.f32.mrb[0].mxu0
      %1876 = vmatprep.mubr.bf16.mxu0 0
      %1877 = vmatmul.mubr.bf16.gmra.mrb[0].mxu0 %v1601
      %v1878 = vpop.f32.mrb[0].mxu0
      %v1879 = vadd.f32 %v1411, %v1878
      %v1880 = vpop.f32.mrb[0].mxu0
      %v1881 = vpop.f32.mrb[0].mxu0
      %v1882 = vadd.f32 %v1414, %v1881
      %v1883 = vpop.f32.mrb[0].mxu0
      %1884 = vmatprep.mubr.bf16.mxu0 0
      %1885 = vmatmul.mubr.bf16.gmra.mrb[0].mxu0 %v1610
      %v1886 = vpop.f32.mrb[0].mxu0
      %v1887 = vadd.f32 %v1419, %v1886
      %v1888 = vpop.f32.mrb[0].mxu0
      %v1889 = vpop.f32.mrb[0].mxu0
      %v1890 = vadd.f32 %v1422, %v1889
      %v1891 = vpop.f32.mrb[0].mxu0
      %1892 = vmatprep.mubr.bf16.mxu0 0
      %1893 = vmatmul.mubr.bf16.gmra.mrb[0].mxu0 %v1619
      %v1894 = vpop.f32.mrb[0].mxu0
      %v1895 = vadd.f32 %v1427, %v1894
      %v1896 = vpop.f32.mrb[0].mxu0
      %v1897 = vpop.f32.mrb[0].mxu0
      %v1898 = vadd.f32 %v1430, %v1897
      %v1899 = vpop.f32.mrb[0].mxu0
      %1900 = vmatprep.mubr.bf16.mxu0 0
      %1901 = vmatmul.mubr.bf16.gmra.mrb[0].mxu0 %v1628
      %v1902 = vpop.f32.mrb[0].mxu0
      %v1903 = vadd.f32 %v1435, %v1902
      %v1904 = vpop.f32.mrb[0].mxu0
      %v1905 = vpop.f32.mrb[0].mxu0
      %v1906 = vadd.f32 %v1438, %v1905
      %v1907 = vpop.f32.mrb[0].mxu0
      %1908 = vmatprep.mubr.bf16.mxu0 0
      %1909 = vmatmul.mubr.bf16.gmra.mrb[0].mxu0 %v1637
      %v1910 = vpop.f32.mrb[0].mxu0
      %v1911 = vadd.f32 %v1443, %v1910
      %v1912 = vpop.f32.mrb[0].mxu0
      %v1913 = vpop.f32.mrb[0].mxu0
      %v1914 = vadd.f32 %v1446, %v1913
      %v1915 = vpop.f32.mrb[0].mxu0
      %1916 = vmatprep.mubr.bf16.mxu0 0
      %1917 = vmatmul.mubr.bf16.gmra.mrb[0].mxu0 %v1646
      %v1918 = vpop.f32.mrb[0].mxu0
      %v1919 = vadd.f32 %v1451, %v1918
      %v1920 = vpop.f32.mrb[0].mxu0
      %v1921 = vpop.f32.mrb[0].mxu0
      %v1922 = vadd.f32 %v1454, %v1921
      %v1923 = vpop.f32.mrb[0].mxu0
      %1924 = vmatprep.mubr.bf16.mxu0 0
      %1925 = vmatmul.mubr.bf16.gmra.mrb[0].mxu0 %v1655
      %v1926 = vpop.f32.mrb[0].mxu0
      %v1927 = vadd.f32 %v1459, %v1926
      %v1928 = vpop.f32.mrb[0].mxu0
      %v1929 = vpop.f32.mrb[0].mxu0
      %v1930 = vadd.f32 %v1462, %v1929
      %v1931 = vpop.f32.mrb[0].mxu0
      %1932 = vmatprep.mubr.bf16.mxu0 0
      %1933 = vmatmul.mubr.bf16.gmra.mrb[0].mxu0 %v1664
      %v1934 = vpop.f32.mrb[0].mxu0
      %v1935 = vadd.f32 %v1467, %v1934
      %v1936 = vpop.f32.mrb[0].mxu0
      %v1937 = vpop.f32.mrb[0].mxu0
      %v1938 = vadd.f32 %v1470, %v1937
      %v1939 = vpop.f32.mrb[0].mxu0
      %1940 = vmatprep.mubr.bf16.mxu0 0
      %1941 = vmatmul.mubr.bf16.gmra.mrb[0].mxu0 %v1673
      %v1942 = vpop.f32.mrb[0].mxu0
      %v1943 = vadd.f32 %v1475, %v1942
      %v1944 = vpop.f32.mrb[0].mxu0
      %v1945 = vpop.f32.mrb[0].mxu0
      %v1946 = vadd.f32 %v1478, %v1945
      %v1947 = vpop.f32.mrb[0].mxu0
      %1948 = vmatprep.mubr.bf16.mxu0 0
      %1949 = vmatmul.mubr.bf16.gmra.mrb[0].mxu0 %v1682
      %v1950 = vpop.f32.mrb[0].mxu0
      %v1951 = vadd.f32 %v1483, %v1950
      %v1952 = vpop.f32.mrb[0].mxu0
      %v1953 = vpop.f32.mrb[0].mxu0
      %v1954 = vadd.f32 %v1486, %v1953
      %v1955 = vpop.f32.mrb[0].mxu0
      %1956 = vmatprep.mubr.bf16.mxu0 0
      %1957 = vmatmul.mubr.bf16.gmra.mrb[0].mxu0 %v1691
      %v1958 = vpop.f32.mrb[0].mxu0
      %v1959 = vadd.f32 %v1491, %v1958
      %v1960 = vpop.f32.mrb[0].mxu0
      %v1961 = vpop.f32.mrb[0].mxu0
      %v1962 = vadd.f32 %v1494, %v1961
      %v1963 = vpop.f32.mrb[0].mxu0
      %1964 = vmatprep.mubr.bf16.mxu0 0
      %1965 = vmatmul.mubr.bf16.gmra.mrb[0].mxu0 %v1700
      %v1966 = vpop.f32.mrb[0].mxu0
      %v1967 = vadd.f32 %v1499, %v1966
      %v1968 = vpop.f32.mrb[0].mxu0
      %v1969 = vpop.f32.mrb[0].mxu0
      %v1970 = vadd.f32 %v1502, %v1969
      %v1971 = vpop.f32.mrb[0].mxu0
      %1972 = vmatprep.mubr.bf16.mxu0 0
      %1973 = vmatmul.mubr.bf16.gmra.mrb[0].mxu0 %v1709
      %v1974 = vpop.f32.mrb[0].mxu0
      %v1975 = vadd.f32 %v1507, %v1974
      %v1976 = vpop.f32.mrb[0].mxu0
      %v1977 = vpop.f32.mrb[0].mxu0
      %v1978 = vadd.f32 %v1510, %v1977
      %v1979 = vpop.f32.mrb[0].mxu0
      %1980 = vmatprep.mubr.bf16.mxu0 0
      %1981 = vmatmul.mubr.bf16.gmra.mrb[0].mxu0 %v1718
      %v1982 = vpop.f32.mrb[0].mxu0
      %v1983 = vadd.f32 %v1515, %v1982
      %v1984 = vpop.f32.mrb[0].mxu0
      %v1985 = vpop.f32.mrb[0].mxu0
      %v1986 = vadd.f32 %v1518, %v1985
      %v1987 = vpop.f32.mrb[0].mxu0
      %1988 = vdwg.mxu0
      %v1989 = vld [vmem:[#allocation2 + $0xa8] sm:$0xff]
      %s1990 = scalar_lea.vmem %s4, 128
      %v1991 = vld [vmem:[%s1990] sm:$0xf]
      %v1992 = vld [vmem:[%s1990 + $0x4] sm:$0xf]
      %v1993 = vld [vmem:[%s1990 + $0x8] sm:$0xf]
      %v1994 = vld [vmem:[%s1990 + $0xc] sm:$0xf]
      %v1995 = vld [vmem:[%s1990 + $0x10] sm:$0xf]
      %v1996 = vld [vmem:[%s1990 + $0x14] sm:$0xf]
      %v1997 = vld [vmem:[%s1990 + $0x18] sm:$0xf]
      %v1998 = vld [vmem:[%s1990 + $0x1c] sm:$0xf]
      %v1999 = vld [vmem:[%s1990 + $0x20] sm:$0xf]
      %v2000 = vld [vmem:[%s1990 + $0x24] sm:$0xf]
      %v2001 = vld [vmem:[%s1990 + $0x28] sm:$0xf]
      %v2002 = vld [vmem:[%s1990 + $0x2c] sm:$0xf]
      %v2003 = vld [vmem:[%s1990 + $0x30] sm:$0xf]
      %v2004 = vld [vmem:[%s1990 + $0x34] sm:$0xf]
      %v2005 = vld [vmem:[%s1990 + $0x38] sm:$0xf]
      %v2006 = vld [vmem:[%s1990 + $0x3c] sm:$0xf]
      %vm2007 = vsmask.f32 256
      %v2009 = vshrl.u32 %v1167, 16
      %v2011 = vrot.slane %v2009, 7
      %v2012 = vrot.slane %v1531, 7
      %v2013 = vor.u32 %v2012, %v1534
      %v2014 = vsel %vm2007, %v2011, %v2013
      %v2015 = vrot.slane %v1540, 7
      %v2016 = vor.u32 %v2015, %v1543
      %v2017 = vsel %vm2007, %v2012, %v2016
      %v2018 = vrot.slane %v1549, 7
      %v2019 = vor.u32 %v2018, %v1552
      %v2020 = vsel %vm2007, %v2015, %v2019
      %v2021 = vrot.slane %v1558, 7
      %v2022 = vor.u32 %v2021, %v1561
      %v2023 = vsel %vm2007, %v2018, %v2022
      %v2024 = vrot.slane %v1567, 7
      %v2025 = vor.u32 %v2024, %v1570
      %v2026 = vsel %vm2007, %v2021, %v2025
      %v2027 = vrot.slane %v1576, 7
      %v2028 = vor.u32 %v2027, %v1579
      %v2029 = vsel %vm2007, %v2024, %v2028
      %v2030 = vrot.slane %v1585, 7
      %v2031 = vor.u32 %v2030, %v1588
      %v2032 = vsel %vm2007, %v2027, %v2031
      %v2033 = vrot.slane %v1594, 7
      %v2034 = vor.u32 %v2033, %v1597
      %v2035 = vsel %vm2007, %v2030, %v2034
      %v2036 = vrot.slane %v1603, 7
      %v2037 = vor.u32 %v2036, %v1606
      %v2038 = vsel %vm2007, %v2033, %v2037
      %v2039 = vrot.slane %v1612, 7
      %v2040 = vor.u32 %v2039, %v1615
      %v2041 = vsel %vm2007, %v2036, %v2040
      %v2042 = vrot.slane %v1621, 7
      %v2043 = vor.u32 %v2042, %v1624
      %v2044 = vsel %vm2007, %v2039, %v2043
      %v2045 = vrot.slane %v1630, 7
      %v2046 = vor.u32 %v2045, %v1633
      %v2047 = vsel %vm2007, %v2042, %v2046
      %v2048 = vrot.slane %v1639, 7
      %v2049 = vor.u32 %v2048, %v1642
      %v2050 = vsel %vm2007, %v2045, %v2049
      %v2051 = vrot.slane %v1648, 7
      %v2052 = vor.u32 %v2051, %v1651
      %v2053 = vsel %vm2007, %v2048, %v2052
      %v2054 = vrot.slane %v1657, 7
      %v2055 = vor.u32 %v2054, %v1660
      %v2056 = vsel %vm2007, %v2051, %v2055
      %v2057 = vrot.slane %v1666, 7
      %v2058 = vor.u32 %v2057, %v1669
      %v2059 = vsel %vm2007, %v2054, %v2058
      %v2060 = vrot.slane %v1675, 7
      %v2061 = vor.u32 %v2060, %v1678
      %v2062 = vsel %vm2007, %v2057, %v2061
      %v2063 = vrot.slane %v1684, 7
      %v2064 = vor.u32 %v2063, %v1687
      %v2065 = vsel %vm2007, %v2060, %v2064
      %v2066 = vrot.slane %v1693, 7
      %v2067 = vor.u32 %v2066, %v1696
      %v2068 = vsel %vm2007, %v2063, %v2067
      %v2069 = vrot.slane %v1702, 7
      %v2070 = vor.u32 %v2069, %v1705
      %v2071 = vsel %vm2007, %v2066, %v2070
      %v2073 = vshrl.u32 %v1989, 16
      %v2075 = vrot.slane %v2073, 7
      %v2076 = vshll.u32 %v1989, 16
      %v2078 = vor.u32 %v2075, %v2076
      %v2079 = vsel %vm2007, %v2069, %v2078
      %v2117 = vunpack.c.l.b16 %v1991
      %v2118 = vunpack.c.l.b16 %v1992
      %v2119 = vunpack.c.l.b16 %v1993
      %v2120 = vunpack.c.l.b16 %v1994
      %v2121 = vunpack.c.l.b16 %v1995
      %v2122 = vunpack.c.l.b16 %v1996
      %v2123 = vunpack.c.l.b16 %v1997
      %v2124 = vunpack.c.l.b16 %v1998
      %v2125 = vunpack.c.l.b16 %v1999
      %v2126 = vunpack.c.l.b16 %v2000
      %v2127 = vunpack.c.l.b16 %v2001
      %v2128 = vunpack.c.l.b16 %v2002
      %v2129 = vunpack.c.l.b16 %v2003
      %v2130 = vunpack.c.l.b16 %v2004
      %v2131 = vunpack.c.l.b16 %v2005
      %v2132 = vunpack.c.l.b16 %v2006
      %v2133 = vpack.c.b16 %v2118, %v2117
      %v2134 = vpack.c.b16 %v2120, %v2119
      %v2135 = vpack.c.b16 %v2122, %v2121
      %v2136 = vpack.c.b16 %v2124, %v2123
      %v2137 = vpack.c.b16 %v2126, %v2125
      %v2138 = vpack.c.b16 %v2128, %v2127
      %v2139 = vpack.c.b16 %v2130, %v2129
      %v2140 = vpack.c.b16 %v2132, %v2131
      %2149 = vmatprep.subr.bf16.mxu0 0
      %2150 = vmatpush1.bf16.msra.mxu0 %v2133
      %2151 = vmatprep.subr.bf16.mxu0 0
      %2152 = vmatpush1.bf16.msra.mxu0 %v2134
      %2153 = vmatprep.subr.bf16.mxu0 0
      %2154 = vmatpush1.bf16.msra.mxu0 %v2135
      %2155 = vmatprep.subr.bf16.mxu0 0
      %2156 = vmatpush1.bf16.msra.mxu0 %v2136
      %2157 = vmatprep.subr.bf16.mxu0 0
      %2158 = vmatpush1.bf16.msra.mxu0 %v2137
      %2159 = vmatprep.subr.bf16.mxu0 0
      %2160 = vmatpush1.bf16.msra.mxu0 %v2138
      %2161 = vmatprep.subr.bf16.mxu0 0
      %2162 = vmatpush1.bf16.msra.mxu0 %v2139
      %2163 = vmatprep.subr.bf16.mxu0 0
      %2164 = vmatpush1.bf16.msra.mxu0 %v2140
      %2165 = vmatprep.subr.bf16.mxu0 0
      %2166 = vmatpush1.bf16.msra.mxu0 0
      %2167 = vmatprep.subr.bf16.mxu0 0
      %2168 = vmatpush1.bf16.msra.mxu0 0
      %2169 = vmatprep.subr.bf16.mxu0 0
      %2170 = vmatpush1.bf16.msra.mxu0 0
      %2171 = vmatprep.subr.bf16.mxu0 0
      %2172 = vmatpush1.bf16.msra.mxu0 0
      %2173 = vmatprep.subr.bf16.mxu0 0
      %2174 = vmatpush1.bf16.msra.mxu0 0
      %2175 = vmatprep.subr.bf16.mxu0 0
      %2176 = vmatpush1.bf16.msra.mxu0 0
      %2177 = vmatprep.subr.bf16.mxu0 0
      %2178 = vmatpush1.bf16.msra.mxu0 0
      %2179 = vmatprep.subr.bf16.mxu0 0
      %2180 = vmatpush1.bf16.msra.mxu0 0
      %2181 = vmatprep.mubr.bf16.mxu0 0
      %2182 = vmatmul.mubr.bf16.gmra.mrb[0].mxu0 %v2014
      %v2183 = vpop.f32.mrb[0].mxu0
      %v2184 = vadd.f32 0.0, %v2183
      %v2185 = vpop.f32.mrb[0].mxu0
      %v2186 = vpop.f32.mrb[0].mxu0
      %v2187 = vadd.f32 0.0, %v2186
      %v2188 = vpop.f32.mrb[0].mxu0
      %2189 = vmatprep.mubr.bf16.mxu0 0
      %2190 = vmatmul.mubr.bf16.gmra.mrb[0].mxu0 %v2017
      %v2191 = vpop.f32.mrb[0].mxu0
      %v2192 = vadd.f32 0.0, %v2191
      %v2193 = vpop.f32.mrb[0].mxu0
      %v2194 = vpop.f32.mrb[0].mxu0
      %v2195 = vadd.f32 0.0, %v2194
      %v2196 = vpop.f32.mrb[0].mxu0
      %2197 = vmatprep.mubr.bf16.mxu0 0
      %2198 = vmatmul.mubr.bf16.gmra.mrb[0].mxu0 %v2020
      %v2199 = vpop.f32.mrb[0].mxu0
      %v2200 = vadd.f32 0.0, %v2199
      %v2201 = vpop.f32.mrb[0].mxu0
      %v2202 = vpop.f32.mrb[0].mxu0
      %v2203 = vadd.f32 0.0, %v2202
      %v2204 = vpop.f32.mrb[0].mxu0
      %2205 = vmatprep.mubr.bf16.mxu0 0
      %2206 = vmatmul.mubr.bf16.gmra.mrb[0].mxu0 %v2023
      %v2207 = vpop.f32.mrb[0].mxu0
      %v2208 = vadd.f32 0.0, %v2207
      %v2209 = vpop.f32.mrb[0].mxu0
      %v2210 = vpop.f32.mrb[0].mxu0
      %v2211 = vadd.f32 0.0, %v2210
      %v2212 = vpop.f32.mrb[0].mxu0
      %2213 = vmatprep.mubr.bf16.mxu0 0
      %2214 = vmatmul.mubr.bf16.gmra.mrb[0].mxu0 %v2026
      %v2215 = vpop.f32.mrb[0].mxu0
      %v2216 = vadd.f32 0.0, %v2215
      %v2217 = vpop.f32.mrb[0].mxu0
      %v2218 = vpop.f32.mrb[0].mxu0
      %v2219 = vadd.f32 0.0, %v2218
      %v2220 = vpop.f32.mrb[0].mxu0
      %2221 = vmatprep.mubr.bf16.mxu0 0
      %2222 = vmatmul.mubr.bf16.gmra.mrb[0].mxu0 %v2029
      %v2223 = vpop.f32.mrb[0].mxu0
      %v2224 = vadd.f32 0.0, %v2223
      %v2225 = vpop.f32.mrb[0].mxu0
      %v2226 = vpop.f32.mrb[0].mxu0
      %v2227 = vadd.f32 0.0, %v2226
      %v2228 = vpop.f32.mrb[0].mxu0
      %2229 = vmatprep.mubr.bf16.mxu0 0
      %2230 = vmatmul.mubr.bf16.gmra.mrb[0].mxu0 %v2032
      %v2231 = vpop.f32.mrb[0].mxu0
      %v2232 = vadd.f32 0.0, %v2231
      %v2233 = vpop.f32.mrb[0].mxu0
      %v2234 = vpop.f32.mrb[0].mxu0
      %v2235 = vadd.f32 0.0, %v2234
      %v2236 = vpop.f32.mrb[0].mxu0
      %2237 = vmatprep.mubr.bf16.mxu0 0
      %2238 = vmatmul.mubr.bf16.gmra.mrb[0].mxu0 %v2035
      %v2239 = vpop.f32.mrb[0].mxu0
      %v2240 = vadd.f32 0.0, %v2239
      %v2241 = vpop.f32.mrb[0].mxu0
      %v2242 = vpop.f32.mrb[0].mxu0
      %v2243 = vadd.f32 0.0, %v2242
      %v2244 = vpop.f32.mrb[0].mxu0
      %2245 = vmatprep.mubr.bf16.mxu0 0
      %2246 = vmatmul.mubr.bf16.gmra.mrb[0].mxu0 %v2038
      %v2247 = vpop.f32.mrb[0].mxu0
      %v2248 = vadd.f32 0.0, %v2247
      %v2249 = vpop.f32.mrb[0].mxu0
      %v2250 = vpop.f32.mrb[0].mxu0
      %v2251 = vadd.f32 0.0, %v2250
      %v2252 = vpop.f32.mrb[0].mxu0
      %2253 = vmatprep.mubr.bf16.mxu0 0
      %2254 = vmatmul.mubr.bf16.gmra.mrb[0].mxu0 %v2041
      %v2255 = vpop.f32.mrb[0].mxu0
      %v2256 = vadd.f32 0.0, %v2255
      %v2257 = vpop.f32.mrb[0].mxu0
      %v2258 = vpop.f32.mrb[0].mxu0
      %v2259 = vadd.f32 0.0, %v2258
      %v2260 = vpop.f32.mrb[0].mxu0
      %2261 = vmatprep.mubr.bf16.mxu0 0
      %2262 = vmatmul.mubr.bf16.gmra.mrb[0].mxu0 %v2044
      %v2263 = vpop.f32.mrb[0].mxu0
      %v2264 = vadd.f32 0.0, %v2263
      %v2265 = vpop.f32.mrb[0].mxu0
      %v2266 = vpop.f32.mrb[0].mxu0
      %v2267 = vadd.f32 0.0, %v2266
      %v2268 = vpop.f32.mrb[0].mxu0
      %2269 = vmatprep.mubr.bf16.mxu0 0
      %2270 = vmatmul.mubr.bf16.gmra.mrb[0].mxu0 %v2047
      %v2271 = vpop.f32.mrb[0].mxu0
      %v2272 = vadd.f32 0.0, %v2271
      %v2273 = vpop.f32.mrb[0].mxu0
      %v2274 = vpop.f32.mrb[0].mxu0
      %v2275 = vadd.f32 0.0, %v2274
      %v2276 = vpop.f32.mrb[0].mxu0
      %2277 = vmatprep.mubr.bf16.mxu0 0
      %2278 = vmatmul.mubr.bf16.gmra.mrb[0].mxu0 %v2050
      %v2279 = vpop.f32.mrb[0].mxu0
      %v2280 = vadd.f32 0.0, %v2279
      %v2281 = vpop.f32.mrb[0].mxu0
      %v2282 = vpop.f32.mrb[0].mxu0
      %v2283 = vadd.f32 0.0, %v2282
      %v2284 = vpop.f32.mrb[0].mxu0
      %2285 = vmatprep.mubr.bf16.mxu0 0
      %2286 = vmatmul.mubr.bf16.gmra.mrb[0].mxu0 %v2053
      %v2287 = vpop.f32.mrb[0].mxu0
      %v2288 = vadd.f32 0.0, %v2287
      %v2289 = vpop.f32.mrb[0].mxu0
      %v2290 = vpop.f32.mrb[0].mxu0
      %v2291 = vadd.f32 0.0, %v2290
      %v2292 = vpop.f32.mrb[0].mxu0
      %2293 = vmatprep.mubr.bf16.mxu0 0
      %2294 = vmatmul.mubr.bf16.gmra.mrb[0].mxu0 %v2056
      %v2295 = vpop.f32.mrb[0].mxu0
      %v2296 = vadd.f32 0.0, %v2295
      %v2297 = vpop.f32.mrb[0].mxu0
      %v2298 = vpop.f32.mrb[0].mxu0
      %v2299 = vadd.f32 0.0, %v2298
      %v2300 = vpop.f32.mrb[0].mxu0
      %2301 = vmatprep.mubr.bf16.mxu0 0
      %2302 = vmatmul.mubr.bf16.gmra.mrb[0].mxu0 %v2059
      %v2303 = vpop.f32.mrb[0].mxu0
      %v2304 = vadd.f32 0.0, %v2303
      %v2305 = vpop.f32.mrb[0].mxu0
      %v2306 = vpop.f32.mrb[0].mxu0
      %v2307 = vadd.f32 0.0, %v2306
      %v2308 = vpop.f32.mrb[0].mxu0
      %2309 = vmatprep.mubr.bf16.mxu0 0
      %2310 = vmatmul.mubr.bf16.gmra.mrb[0].mxu0 %v2062
      %v2311 = vpop.f32.mrb[0].mxu0
      %v2312 = vadd.f32 0.0, %v2311
      %v2313 = vpop.f32.mrb[0].mxu0
      %v2314 = vpop.f32.mrb[0].mxu0
      %v2315 = vadd.f32 0.0, %v2314
      %v2316 = vpop.f32.mrb[0].mxu0
      %2317 = vmatprep.mubr.bf16.mxu0 0
      %2318 = vmatmul.mubr.bf16.gmra.mrb[0].mxu0 %v2065
      %v2319 = vpop.f32.mrb[0].mxu0
      %v2320 = vadd.f32 0.0, %v2319
      %v2321 = vpop.f32.mrb[0].mxu0
      %v2322 = vpop.f32.mrb[0].mxu0
      %v2323 = vadd.f32 0.0, %v2322
      %v2324 = vpop.f32.mrb[0].mxu0
      %2325 = vmatprep.mubr.bf16.mxu0 0
      %2326 = vmatmul.mubr.bf16.gmra.mrb[0].mxu0 %v2068
      %v2327 = vpop.f32.mrb[0].mxu0
      %v2328 = vadd.f32 0.0, %v2327
      %v2329 = vpop.f32.mrb[0].mxu0
      %v2330 = vpop.f32.mrb[0].mxu0
      %v2331 = vadd.f32 0.0, %v2330
      %v2332 = vpop.f32.mrb[0].mxu0
      %2333 = vmatprep.mubr.bf16.mxu0 0
      %2334 = vmatmul.mubr.bf16.gmra.mrb[0].mxu0 %v2071
      %v2335 = vpop.f32.mrb[0].mxu0
      %v2336 = vadd.f32 0.0, %v2335
      %v2337 = vpop.f32.mrb[0].mxu0
      %v2338 = vpop.f32.mrb[0].mxu0
      %v2339 = vadd.f32 0.0, %v2338
      %v2340 = vpop.f32.mrb[0].mxu0
      %2341 = vmatprep.mubr.bf16.mxu0 0
      %2342 = vmatmul.mubr.bf16.gmra.mrb[0].mxu0 %v2079
      %v2343 = vpop.f32.mrb[0].mxu0
      %v2344 = vadd.f32 0.0, %v2343
      %v2345 = vpop.f32.mrb[0].mxu0
      %v2346 = vpop.f32.mrb[0].mxu0
      %v2347 = vadd.f32 0.0, %v2346
      %v2348 = vpop.f32.mrb[0].mxu0
      %2349 = vdwg.mxu0
      %v2350 = vadd.f32 %v1823, %v2184
      %v2351 = vadd.f32 %v1826, %v2187
      %v2352 = vadd.f32 %v1831, %v2192
      %v2353 = vadd.f32 %v1834, %v2195
      %v2354 = vadd.f32 %v1839, %v2200
      %v2355 = vadd.f32 %v1842, %v2203
      %v2356 = vadd.f32 %v1847, %v2208
      %v2357 = vadd.f32 %v1850, %v2211
      %v2358 = vadd.f32 %v1855, %v2216
      %v2359 = vadd.f32 %v1858, %v2219
      %v2360 = vadd.f32 %v1863, %v2224
      %v2361 = vadd.f32 %v1866, %v2227
      %v2362 = vadd.f32 %v1871, %v2232
      %v2363 = vadd.f32 %v1874, %v2235
      %v2364 = vadd.f32 %v1879, %v2240
      %v2365 = vadd.f32 %v1882, %v2243
      %v2366 = vadd.f32 %v1887, %v2248
      %v2367 = vadd.f32 %v1890, %v2251
      %v2368 = vadd.f32 %v1895, %v2256
      %v2369 = vadd.f32 %v1898, %v2259
      %v2370 = vadd.f32 %v1903, %v2264
      %v2371 = vadd.f32 %v1906, %v2267
      %v2372 = vadd.f32 %v1911, %v2272
      %v2373 = vadd.f32 %v1914, %v2275
      %v2374 = vadd.f32 %v1919, %v2280
      %v2375 = vadd.f32 %v1922, %v2283
      %v2376 = vadd.f32 %v1927, %v2288
      %v2377 = vadd.f32 %v1930, %v2291
      %v2378 = vadd.f32 %v1935, %v2296
      %v2379 = vadd.f32 %v1938, %v2299
      %v2380 = vadd.f32 %v1943, %v2304
      %v2381 = vadd.f32 %v1946, %v2307
      %v2382 = vadd.f32 %v1951, %v2312
      %v2383 = vadd.f32 %v1954, %v2315
      %v2384 = vadd.f32 %v1959, %v2320
      %v2385 = vadd.f32 %v1962, %v2323
      %v2386 = vadd.f32 %v1967, %v2328
      %v2387 = vadd.f32 %v1970, %v2331
      %v2388 = vadd.f32 %v1975, %v2336
      %v2389 = vadd.f32 %v1978, %v2339
      %v2390 = vadd.f32 %v1983, %v2344
      %v2391 = vadd.f32 %v1986, %v2347
      %2392 = vst [vmem:[#allocation3] sm:$0xff] %v2350
      %2393 = vst [vmem:[#allocation3 + $0x8] sm:$0xff] %v2351
      %2394 = vst [vmem:[#allocation3 + $0x10] sm:$0xff] %v2352
      %2395 = vst [vmem:[#allocation3 + $0x18] sm:$0xff] %v2353
      %2396 = vst [vmem:[#allocation3 + $0x20] sm:$0xff] %v2354
      %2397 = vst [vmem:[#allocation3 + $0x28] sm:$0xff] %v2355
      %2398 = vst [vmem:[#allocation3 + $0x30] sm:$0xff] %v2356
      %2399 = vst [vmem:[#allocation3 + $0x38] sm:$0xff] %v2357
      %2400 = vst [vmem:[#allocation3 + $0x40] sm:$0xff] %v2358
      %2401 = vst [vmem:[#allocation3 + $0x48] sm:$0xff] %v2359
      %2402 = vst [vmem:[#allocation3 + $0x50] sm:$0xff] %v2360
      %2403 = vst [vmem:[#allocation3 + $0x58] sm:$0xff] %v2361
      %2404 = vst [vmem:[#allocation3 + $0x60] sm:$0xff] %v2362
      %2405 = vst [vmem:[#allocation3 + $0x68] sm:$0xff] %v2363
      %2406 = vst [vmem:[#allocation3 + $0x70] sm:$0xff] %v2364
      %2407 = vst [vmem:[#allocation3 + $0x78] sm:$0xff] %v2365
      %2408 = vst [vmem:[#allocation3 + $0x80] sm:$0xff] %v2366
      %2409 = vst [vmem:[#allocation3 + $0x88] sm:$0xff] %v2367
      %2410 = vst [vmem:[#allocation3 + $0x90] sm:$0xff] %v2368
      %2411 = vst [vmem:[#allocation3 + $0x98] sm:$0xff] %v2369
      %2412 = vst [vmem:[#allocation3 + $0xa0] sm:$0xff] %v2370
      %2413 = vst [vmem:[#allocation3 + $0xa8] sm:$0xff] %v2371
      %2414 = vst [vmem:[#allocation3 + $0xb0] sm:$0xff] %v2372
      %2415 = vst [vmem:[#allocation3 + $0xb8] sm:$0xff] %v2373
      %2416 = vst [vmem:[#allocation3 + $0xc0] sm:$0xff] %v2374
      %2417 = vst [vmem:[#allocation3 + $0xc8] sm:$0xff] %v2375
      %2418 = vst [vmem:[#allocation3 + $0xd0] sm:$0xff] %v2376
      %2419 = vst [vmem:[#allocation3 + $0xd8] sm:$0xff] %v2377
      %2420 = vst [vmem:[#allocation3 + $0xe0] sm:$0xff] %v2378
      %2421 = vst [vmem:[#allocation3 + $0xe8] sm:$0xff] %v2379
      %2422 = vst [vmem:[#allocation3 + $0xf0] sm:$0xff] %v2380
      %2423 = vst [vmem:[#allocation3 + $0xf8] sm:$0xff] %v2381
      %2424 = vst [vmem:[#allocation3 + $0x100] sm:$0xff] %v2382
      %2425 = vst [vmem:[#allocation3 + $0x108] sm:$0xff] %v2383
      %2426 = vst [vmem:[#allocation3 + $0x110] sm:$0xff] %v2384
      %2427 = vst [vmem:[#allocation3 + $0x118] sm:$0xff] %v2385
      %2428 = vst [vmem:[#allocation3 + $0x120] sm:$0xff] %v2386
      %2429 = vst [vmem:[#allocation3 + $0x128] sm:$0xff] %v2387
      %2430 = vst [vmem:[#allocation3 + $0x130] sm:$0xff] %v2388
      %2431 = vst [vmem:[#allocation3 + $0x138] sm:$0xff] %v2389
      %2432 = vst [vmem:[#allocation3 + $0x140] sm:$0xff] %v2390
      %2433 = vst [vmem:[#allocation3 + $0x148] sm:$0xff] %v2391
      %v2434 = vld [vmem:[#allocation2 + $0x8] sm:$0x80]
      %v2435 = vld [vmem:[#allocation2 + $0x10] sm:$0xff]
      %v2436 = vld [vmem:[#allocation2 + $0x18] sm:$0xff]
      %v2437 = vld [vmem:[#allocation2 + $0x20] sm:$0xff]
      %v2438 = vld [vmem:[#allocation2 + $0x28] sm:$0xff]
      %v2439 = vld [vmem:[#allocation2 + $0x30] sm:$0xff]
      %v2440 = vld [vmem:[#allocation2 + $0x38] sm:$0xff]
      %v2441 = vld [vmem:[#allocation2 + $0x40] sm:$0xff]
      %v2442 = vld [vmem:[#allocation2 + $0x48] sm:$0xff]
      %v2443 = vld [vmem:[#allocation2 + $0x50] sm:$0xff]
      %v2444 = vld [vmem:[#allocation2 + $0x58] sm:$0xff]
      %v2445 = vld [vmem:[#allocation2 + $0x60] sm:$0xff]
      %v2446 = vld [vmem:[#allocation2 + $0x68] sm:$0xff]
      %v2447 = vld [vmem:[#allocation2 + $0x70] sm:$0xff]
      %v2448 = vld [vmem:[#allocation2 + $0x78] sm:$0xff]
      %v2449 = vld [vmem:[#allocation2 + $0x80] sm:$0xff]
      %v2450 = vld [vmem:[#allocation2 + $0x88] sm:$0xff]
      %v2451 = vld [vmem:[#allocation2 + $0x90] sm:$0xff]
      %v2452 = vld [vmem:[#allocation2 + $0x98] sm:$0xff]
      %v2453 = vld [vmem:[#allocation2 + $0xa0] sm:$0xff]
      %v2454 = vld [vmem:[#allocation2 + $0xa8] sm:$0xff]
      %v2455 = vld [vmem:[#allocation2 + $0xb0] sm:$0xff]
      %s2456 = scalar_lea.vmem %s4, 192
      %v2457 = vld [vmem:[%s2456] sm:$0xf]
      %v2458 = vld [vmem:[%s2456 + $0x4] sm:$0xf]
      %v2459 = vld [vmem:[%s2456 + $0x8] sm:$0xf]
      %v2460 = vld [vmem:[%s2456 + $0xc] sm:$0xf]
      %v2461 = vld [vmem:[%s2456 + $0x10] sm:$0xf]
      %v2462 = vld [vmem:[%s2456 + $0x14] sm:$0xf]
      %v2463 = vld [vmem:[%s2456 + $0x18] sm:$0xf]
      %v2464 = vld [vmem:[%s2456 + $0x1c] sm:$0xf]
      %v2465 = vld [vmem:[%s2456 + $0x20] sm:$0xf]
      %v2466 = vld [vmem:[%s2456 + $0x24] sm:$0xf]
      %v2467 = vld [vmem:[%s2456 + $0x28] sm:$0xf]
      %v2468 = vld [vmem:[%s2456 + $0x2c] sm:$0xf]
      %v2469 = vld [vmem:[%s2456 + $0x30] sm:$0xf]
      %v2470 = vld [vmem:[%s2456 + $0x34] sm:$0xf]
      %v2471 = vld [vmem:[%s2456 + $0x38] sm:$0xf]
      %v2472 = vld [vmem:[%s2456 + $0x3c] sm:$0xf]
      %s2473 = scalar_lea.vmem %s4, 256
      %v2474 = vld [vmem:[%s2473] sm:$0xf]
      %v2475 = vld [vmem:[%s2473 + $0x4] sm:$0xf]
      %v2476 = vld [vmem:[%s2473 + $0x8] sm:$0xf]
      %v2477 = vld [vmem:[%s2473 + $0xc] sm:$0xf]
      %v2478 = vld [vmem:[%s2473 + $0x10] sm:$0xf]
      %v2479 = vld [vmem:[%s2473 + $0x14] sm:$0xf]
      %v2480 = vld [vmem:[%s2473 + $0x18] sm:$0xf]
      %v2481 = vld [vmem:[%s2473 + $0x1c] sm:$0xf]
      %v2482 = vld [vmem:[%s2473 + $0x20] sm:$0xf]
      %v2483 = vld [vmem:[%s2473 + $0x24] sm:$0xf]
      %v2484 = vld [vmem:[%s2473 + $0x28] sm:$0xf]
      %v2485 = vld [vmem:[%s2473 + $0x2c] sm:$0xf]
      %v2486 = vld [vmem:[%s2473 + $0x30] sm:$0xf]
      %v2487 = vld [vmem:[%s2473 + $0x34] sm:$0xf]
      %v2488 = vld [vmem:[%s2473 + $0x38] sm:$0xf]
      %v2489 = vld [vmem:[%s2473 + $0x3c] sm:$0xf]
      %v2506 = vunpack.c.l.b16 %v2474
      %v2507 = vunpack.c.l.b16 %v2475
      %v2508 = vunpack.c.l.b16 %v2476
      %v2509 = vunpack.c.l.b16 %v2477
      %v2510 = vunpack.c.l.b16 %v2478
      %v2511 = vunpack.c.l.b16 %v2479
      %v2512 = vunpack.c.l.b16 %v2480
      %v2513 = vunpack.c.l.b16 %v2481
      %v2514 = vunpack.c.l.b16 %v2482
      %v2515 = vunpack.c.l.b16 %v2483
      %v2516 = vunpack.c.l.b16 %v2484
      %v2517 = vunpack.c.l.b16 %v2485
      %v2518 = vunpack.c.l.b16 %v2486
      %v2519 = vunpack.c.l.b16 %v2487
      %v2520 = vunpack.c.l.b16 %v2488
      %v2521 = vunpack.c.l.b16 %v2489
      %v2522 = vpack.c.b16 %v2507, %v2506
      %v2523 = vpack.c.b16 %v2509, %v2508
      %v2524 = vpack.c.b16 %v2511, %v2510
      %v2525 = vpack.c.b16 %v2513, %v2512
      %v2526 = vpack.c.b16 %v2515, %v2514
      %v2527 = vpack.c.b16 %v2517, %v2516
      %v2528 = vpack.c.b16 %v2519, %v2518
      %v2529 = vpack.c.b16 %v2521, %v2520
      %2538 = vmatprep.subr.bf16.mxu0 0
      %2539 = vmatpush1.bf16.msra.mxu0 %v2522
      %2540 = vmatprep.subr.bf16.mxu0 0
      %2541 = vmatpush1.bf16.msra.mxu0 %v2523
      %2542 = vmatprep.subr.bf16.mxu0 0
      %2543 = vmatpush1.bf16.msra.mxu0 %v2524
      %2544 = vmatprep.subr.bf16.mxu0 0
      %2545 = vmatpush1.bf16.msra.mxu0 %v2525
      %2546 = vmatprep.subr.bf16.mxu0 0
      %2547 = vmatpush1.bf16.msra.mxu0 %v2526
      %2548 = vmatprep.subr.bf16.mxu0 0
      %2549 = vmatpush1.bf16.msra.mxu0 %v2527
      %2550 = vmatprep.subr.bf16.mxu0 0
      %2551 = vmatpush1.bf16.msra.mxu0 %v2528
      %2552 = vmatprep.subr.bf16.mxu0 0
      %2553 = vmatpush1.bf16.msra.mxu0 %v2529
      %2554 = vmatprep.subr.bf16.mxu0 0
      %2555 = vmatpush1.bf16.msra.mxu0 0
      %2556 = vmatprep.subr.bf16.mxu0 0
      %2557 = vmatpush1.bf16.msra.mxu0 0
      %2558 = vmatprep.subr.bf16.mxu0 0
      %2559 = vmatpush1.bf16.msra.mxu0 0
      %2560 = vmatprep.subr.bf16.mxu0 0
      %2561 = vmatpush1.bf16.msra.mxu0 0
      %2562 = vmatprep.subr.bf16.mxu0 0
      %2563 = vmatpush1.bf16.msra.mxu0 0
      %2564 = vmatprep.subr.bf16.mxu0 0
      %2565 = vmatpush1.bf16.msra.mxu0 0
      %2566 = vmatprep.subr.bf16.mxu0 0
      %2567 = vmatpush1.bf16.msra.mxu0 0
      %2568 = vmatprep.subr.bf16.mxu0 0
      %2569 = vmatpush1.bf16.msra.mxu0 0
      %2570 = vmatprep.mubr.bf16.mxu0 0
      %2571 = vmatmul.mubr.bf16.gmra.mrb[0].mxu0 %v2435
      %v2572 = vpop.f32.mrb[0].mxu0
      %v2573 = vadd.f32 0.0, %v2572
      %v2574 = vpop.f32.mrb[0].mxu0
      %v2575 = vpop.f32.mrb[0].mxu0
      %v2576 = vadd.f32 0.0, %v2575
      %v2577 = vpop.f32.mrb[0].mxu0
      %2578 = vmatprep.mubr.bf16.mxu0 0
      %2579 = vmatmul.mubr.bf16.gmra.mrb[0].mxu0 %v2436
      %v2580 = vpop.f32.mrb[0].mxu0
      %v2581 = vadd.f32 0.0, %v2580
      %v2582 = vpop.f32.mrb[0].mxu0
      %v2583 = vpop.f32.mrb[0].mxu0
      %v2584 = vadd.f32 0.0, %v2583
      %v2585 = vpop.f32.mrb[0].mxu0
      %2586 = vmatprep.mubr.bf16.mxu0 0
      %2587 = vmatmul.mubr.bf16.gmra.mrb[0].mxu0 %v2437
      %v2588 = vpop.f32.mrb[0].mxu0
      %v2589 = vadd.f32 0.0, %v2588
      %v2590 = vpop.f32.mrb[0].mxu0
      %v2591 = vpop.f32.mrb[0].mxu0
      %v2592 = vadd.f32 0.0, %v2591
      %v2593 = vpop.f32.mrb[0].mxu0
      %2594 = vmatprep.mubr.bf16.mxu0 0
      %2595 = vmatmul.mubr.bf16.gmra.mrb[0].mxu0 %v2438
      %v2596 = vpop.f32.mrb[0].mxu0
      %v2597 = vadd.f32 0.0, %v2596
      %v2598 = vpop.f32.mrb[0].mxu0
      %v2599 = vpop.f32.mrb[0].mxu0
      %v2600 = vadd.f32 0.0, %v2599
      %v2601 = vpop.f32.mrb[0].mxu0
      %2602 = vmatprep.mubr.bf16.mxu0 0
      %2603 = vmatmul.mubr.bf16.gmra.mrb[0].mxu0 %v2439
      %v2604 = vpop.f32.mrb[0].mxu0
      %v2605 = vadd.f32 0.0, %v2604
      %v2606 = vpop.f32.mrb[0].mxu0
      %v2607 = vpop.f32.mrb[0].mxu0
      %v2608 = vadd.f32 0.0, %v2607
      %v2609 = vpop.f32.mrb[0].mxu0
      %2610 = vmatprep.mubr.bf16.mxu0 0
      %2611 = vmatmul.mubr.bf16.gmra.mrb[0].mxu0 %v2440
      %v2612 = vpop.f32.mrb[0].mxu0
      %v2613 = vadd.f32 0.0, %v2612
      %v2614 = vpop.f32.mrb[0].mxu0
      %v2615 = vpop.f32.mrb[0].mxu0
      %v2616 = vadd.f32 0.0, %v2615
      %v2617 = vpop.f32.mrb[0].mxu0
      %2618 = vmatprep.mubr.bf16.mxu0 0
      %2619 = vmatmul.mubr.bf16.gmra.mrb[0].mxu0 %v2441
      %v2620 = vpop.f32.mrb[0].mxu0
      %v2621 = vadd.f32 0.0, %v2620
      %v2622 = vpop.f32.mrb[0].mxu0
      %v2623 = vpop.f32.mrb[0].mxu0
      %v2624 = vadd.f32 0.0, %v2623
      %v2625 = vpop.f32.mrb[0].mxu0
      %2626 = vmatprep.mubr.bf16.mxu0 0
      %2627 = vmatmul.mubr.bf16.gmra.mrb[0].mxu0 %v2442
      %v2628 = vpop.f32.mrb[0].mxu0
      %v2629 = vadd.f32 0.0, %v2628
      %v2630 = vpop.f32.mrb[0].mxu0
      %v2631 = vpop.f32.mrb[0].mxu0
      %v2632 = vadd.f32 0.0, %v2631
      %v2633 = vpop.f32.mrb[0].mxu0
      %2634 = vmatprep.mubr.bf16.mxu0 0
      %2635 = vmatmul.mubr.bf16.gmra.mrb[0].mxu0 %v2443
      %v2636 = vpop.f32.mrb[0].mxu0
      %v2637 = vadd.f32 0.0, %v2636
      %v2638 = vpop.f32.mrb[0].mxu0
      %v2639 = vpop.f32.mrb[0].mxu0
      %v2640 = vadd.f32 0.0, %v2639
      %v2641 = vpop.f32.mrb[0].mxu0
      %2642 = vmatprep.mubr.bf16.mxu0 0
      %2643 = vmatmul.mubr.bf16.gmra.mrb[0].mxu0 %v2444
      %v2644 = vpop.f32.mrb[0].mxu0
      %v2645 = vadd.f32 0.0, %v2644
      %v2646 = vpop.f32.mrb[0].mxu0
      %v2647 = vpop.f32.mrb[0].mxu0
      %v2648 = vadd.f32 0.0, %v2647
      %v2649 = vpop.f32.mrb[0].mxu0
      %2650 = vmatprep.mubr.bf16.mxu0 0
      %2651 = vmatmul.mubr.bf16.gmra.mrb[0].mxu0 %v2445
      %v2652 = vpop.f32.mrb[0].mxu0
      %v2653 = vadd.f32 0.0, %v2652
      %v2654 = vpop.f32.mrb[0].mxu0
      %v2655 = vpop.f32.mrb[0].mxu0
      %v2656 = vadd.f32 0.0, %v2655
      %v2657 = vpop.f32.mrb[0].mxu0
      %2658 = vmatprep.mubr.bf16.mxu0 0
      %2659 = vmatmul.mubr.bf16.gmra.mrb[0].mxu0 %v2446
      %v2660 = vpop.f32.mrb[0].mxu0
      %v2661 = vadd.f32 0.0, %v2660
      %v2662 = vpop.f32.mrb[0].mxu0
      %v2663 = vpop.f32.mrb[0].mxu0
      %v2664 = vadd.f32 0.0, %v2663
      %v2665 = vpop.f32.mrb[0].mxu0
      %2666 = vmatprep.mubr.bf16.mxu0 0
      %2667 = vmatmul.mubr.bf16.gmra.mrb[0].mxu0 %v2447
      %v2668 = vpop.f32.mrb[0].mxu0
      %v2669 = vadd.f32 0.0, %v2668
      %v2670 = vpop.f32.mrb[0].mxu0
      %v2671 = vpop.f32.mrb[0].mxu0
      %v2672 = vadd.f32 0.0, %v2671
      %v2673 = vpop.f32.mrb[0].mxu0
      %2674 = vmatprep.mubr.bf16.mxu0 0
      %2675 = vmatmul.mubr.bf16.gmra.mrb[0].mxu0 %v2448
      %v2676 = vpop.f32.mrb[0].mxu0
      %v2677 = vadd.f32 0.0, %v2676
      %v2678 = vpop.f32.mrb[0].mxu0
      %v2679 = vpop.f32.mrb[0].mxu0
      %v2680 = vadd.f32 0.0, %v2679
      %v2681 = vpop.f32.mrb[0].mxu0
      %2682 = vmatprep.mubr.bf16.mxu0 0
      %2683 = vmatmul.mubr.bf16.gmra.mrb[0].mxu0 %v2449
      %v2684 = vpop.f32.mrb[0].mxu0
      %v2685 = vadd.f32 0.0, %v2684
      %v2686 = vpop.f32.mrb[0].mxu0
      %v2687 = vpop.f32.mrb[0].mxu0
      %v2688 = vadd.f32 0.0, %v2687
      %v2689 = vpop.f32.mrb[0].mxu0
      %2690 = vmatprep.mubr.bf16.mxu0 0
      %2691 = vmatmul.mubr.bf16.gmra.mrb[0].mxu0 %v2450
      %v2692 = vpop.f32.mrb[0].mxu0
      %v2693 = vadd.f32 0.0, %v2692
      %v2694 = vpop.f32.mrb[0].mxu0
      %v2695 = vpop.f32.mrb[0].mxu0
      %v2696 = vadd.f32 0.0, %v2695
      %v2697 = vpop.f32.mrb[0].mxu0
      %2698 = vmatprep.mubr.bf16.mxu0 0
      %2699 = vmatmul.mubr.bf16.gmra.mrb[0].mxu0 %v2451
      %v2700 = vpop.f32.mrb[0].mxu0
      %v2701 = vadd.f32 0.0, %v2700
      %v2702 = vpop.f32.mrb[0].mxu0
      %v2703 = vpop.f32.mrb[0].mxu0
      %v2704 = vadd.f32 0.0, %v2703
      %v2705 = vpop.f32.mrb[0].mxu0
      %2706 = vmatprep.mubr.bf16.mxu0 0
      %2707 = vmatmul.mubr.bf16.gmra.mrb[0].mxu0 %v2452
      %v2708 = vpop.f32.mrb[0].mxu0
      %v2709 = vadd.f32 0.0, %v2708
      %v2710 = vpop.f32.mrb[0].mxu0
      %v2711 = vpop.f32.mrb[0].mxu0
      %v2712 = vadd.f32 0.0, %v2711
      %v2713 = vpop.f32.mrb[0].mxu0
      %2714 = vmatprep.mubr.bf16.mxu0 0
      %2715 = vmatmul.mubr.bf16.gmra.mrb[0].mxu0 %v2453
      %v2716 = vpop.f32.mrb[0].mxu0
      %v2717 = vadd.f32 0.0, %v2716
      %v2718 = vpop.f32.mrb[0].mxu0
      %v2719 = vpop.f32.mrb[0].mxu0
      %v2720 = vadd.f32 0.0, %v2719
      %v2721 = vpop.f32.mrb[0].mxu0
      %2722 = vmatprep.mubr.bf16.mxu0 0
      %2723 = vmatmul.mubr.bf16.gmra.mrb[0].mxu0 %v2454
      %v2724 = vpop.f32.mrb[0].mxu0
      %v2725 = vadd.f32 0.0, %v2724
      %v2726 = vpop.f32.mrb[0].mxu0
      %v2727 = vpop.f32.mrb[0].mxu0
      %v2728 = vadd.f32 0.0, %v2727
      %v2729 = vpop.f32.mrb[0].mxu0
      %2730 = vmatprep.mubr.bf16.mxu0 0
      %2731 = vmatmul.mubr.bf16.gmra.mrb[0].mxu0 %v2455
      %v2732 = vpop.f32.mrb[0].mxu0
      %v2733 = vadd.f32 0.0, %v2732
      %v2734 = vpop.f32.mrb[0].mxu0
      %v2735 = vpop.f32.mrb[0].mxu0
      %v2736 = vadd.f32 0.0, %v2735
      %v2737 = vpop.f32.mrb[0].mxu0
      %2738 = vdwg.mxu0
      %v2740 = vshrl.u32 %v2434, 16
      %v2742 = vrot.slane %v2740, 7
      %v2744 = vshrl.u32 %v2435, 16
      %v2746 = vrot.slane %v2744, 7
      %v2747 = vshll.u32 %v2435, 16
      %v2749 = vor.u32 %v2746, %v2747
      %v2750 = vsel %vm2007, %v2742, %v2749
      %v2752 = vshrl.u32 %v2436, 16
      %v2754 = vrot.slane %v2752, 7
      %v2755 = vshll.u32 %v2436, 16
      %v2757 = vor.u32 %v2754, %v2755
      %v2758 = vsel %vm2007, %v2746, %v2757
      %v2760 = vshrl.u32 %v2437, 16
      %v2762 = vrot.slane %v2760, 7
      %v2763 = vshll.u32 %v2437, 16
      %v2765 = vor.u32 %v2762, %v2763
      %v2766 = vsel %vm2007, %v2754, %v2765
      %v2768 = vshrl.u32 %v2438, 16
      %v2770 = vrot.slane %v2768, 7
      %v2771 = vshll.u32 %v2438, 16
      %v2773 = vor.u32 %v2770, %v2771
      %v2774 = vsel %vm2007, %v2762, %v2773
      %v2776 = vshrl.u32 %v2439, 16
      %v2778 = vrot.slane %v2776, 7
      %v2779 = vshll.u32 %v2439, 16
      %v2781 = vor.u32 %v2778, %v2779
      %v2782 = vsel %vm2007, %v2770, %v2781
      %v2784 = vshrl.u32 %v2440, 16
      %v2786 = vrot.slane %v2784, 7
      %v2787 = vshll.u32 %v2440, 16
      %v2789 = vor.u32 %v2786, %v2787
      %v2790 = vsel %vm2007, %v2778, %v2789
      %v2792 = vshrl.u32 %v2441, 16
      %v2794 = vrot.slane %v2792, 7
      %v2795 = vshll.u32 %v2441, 16
      %v2797 = vor.u32 %v2794, %v2795
      %v2798 = vsel %vm2007, %v2786, %v2797
      %v2800 = vshrl.u32 %v2442, 16
      %v2802 = vrot.slane %v2800, 7
      %v2803 = vshll.u32 %v2442, 16
      %v2805 = vor.u32 %v2802, %v2803
      %v2806 = vsel %vm2007, %v2794, %v2805
      %v2808 = vshrl.u32 %v2443, 16
      %v2810 = vrot.slane %v2808, 7
      %v2811 = vshll.u32 %v2443, 16
      %v2813 = vor.u32 %v2810, %v2811
      %v2814 = vsel %vm2007, %v2802, %v2813
      %v2816 = vshrl.u32 %v2444, 16
      %v2818 = vrot.slane %v2816, 7
      %v2819 = vshll.u32 %v2444, 16
      %v2821 = vor.u32 %v2818, %v2819
      %v2822 = vsel %vm2007, %v2810, %v2821
      %v2824 = vshrl.u32 %v2445, 16
      %v2826 = vrot.slane %v2824, 7
      %v2827 = vshll.u32 %v2445, 16
      %v2829 = vor.u32 %v2826, %v2827
      %v2830 = vsel %vm2007, %v2818, %v2829
      %v2832 = vshrl.u32 %v2446, 16
      %v2834 = vrot.slane %v2832, 7
      %v2835 = vshll.u32 %v2446, 16
      %v2837 = vor.u32 %v2834, %v2835
      %v2838 = vsel %vm2007, %v2826, %v2837
      %v2840 = vshrl.u32 %v2447, 16
      %v2842 = vrot.slane %v2840, 7
      %v2843 = vshll.u32 %v2447, 16
      %v2845 = vor.u32 %v2842, %v2843
      %v2846 = vsel %vm2007, %v2834, %v2845
      %v2848 = vshrl.u32 %v2448, 16
      %v2850 = vrot.slane %v2848, 7
      %v2851 = vshll.u32 %v2448, 16
      %v2853 = vor.u32 %v2850, %v2851
      %v2854 = vsel %vm2007, %v2842, %v2853
      %v2856 = vshrl.u32 %v2449, 16
      %v2858 = vrot.slane %v2856, 7
      %v2859 = vshll.u32 %v2449, 16
      %v2861 = vor.u32 %v2858, %v2859
      %v2862 = vsel %vm2007, %v2850, %v2861
      %v2864 = vshrl.u32 %v2450, 16
      %v2866 = vrot.slane %v2864, 7
      %v2867 = vshll.u32 %v2450, 16
      %v2869 = vor.u32 %v2866, %v2867
      %v2870 = vsel %vm2007, %v2858, %v2869
      %v2872 = vshrl.u32 %v2451, 16
      %v2874 = vrot.slane %v2872, 7
      %v2875 = vshll.u32 %v2451, 16
      %v2877 = vor.u32 %v2874, %v2875
      %v2878 = vsel %vm2007, %v2866, %v2877
      %v2880 = vshrl.u32 %v2452, 16
      %v2882 = vrot.slane %v2880, 7
      %v2883 = vshll.u32 %v2452, 16
      %v2885 = vor.u32 %v2882, %v2883
      %v2886 = vsel %vm2007, %v2874, %v2885
      %v2888 = vshrl.u32 %v2453, 16
      %v2890 = vrot.slane %v2888, 7
      %v2891 = vshll.u32 %v2453, 16
      %v2893 = vor.u32 %v2890, %v2891
      %v2894 = vsel %vm2007, %v2882, %v2893
      %v2896 = vshrl.u32 %v2454, 16
      %v2898 = vrot.slane %v2896, 7
      %v2899 = vshll.u32 %v2454, 16
      %v2901 = vor.u32 %v2898, %v2899
      %v2902 = vsel %vm2007, %v2890, %v2901
      %v2904 = vshrl.u32 %v2455, 16
      %v2906 = vrot.slane %v2904, 7
      %v2907 = vshll.u32 %v2455, 16
      %v2909 = vor.u32 %v2906, %v2907
      %v2910 = vsel %vm2007, %v2898, %v2909
      %v2948 = vunpack.c.l.b16 %v2457
      %v2949 = vunpack.c.l.b16 %v2458
      %v2950 = vunpack.c.l.b16 %v2459
      %v2951 = vunpack.c.l.b16 %v2460
      %v2952 = vunpack.c.l.b16 %v2461
      %v2953 = vunpack.c.l.b16 %v2462
      %v2954 = vunpack.c.l.b16 %v2463
      %v2955 = vunpack.c.l.b16 %v2464
      %v2956 = vunpack.c.l.b16 %v2465
      %v2957 = vunpack.c.l.b16 %v2466
      %v2958 = vunpack.c.l.b16 %v2467
      %v2959 = vunpack.c.l.b16 %v2468
      %v2960 = vunpack.c.l.b16 %v2469
      %v2961 = vunpack.c.l.b16 %v2470
      %v2962 = vunpack.c.l.b16 %v2471
      %v2963 = vunpack.c.l.b16 %v2472
      %v2964 = vpack.c.b16 %v2949, %v2948
      %v2965 = vpack.c.b16 %v2951, %v2950
      %v2966 = vpack.c.b16 %v2953, %v2952
      %v2967 = vpack.c.b16 %v2955, %v2954
      %v2968 = vpack.c.b16 %v2957, %v2956
      %v2969 = vpack.c.b16 %v2959, %v2958
      %v2970 = vpack.c.b16 %v2961, %v2960
      %v2971 = vpack.c.b16 %v2963, %v2962
      %2980 = vmatprep.subr.bf16.mxu0 0
      %2981 = vmatpush1.bf16.msra.mxu0 %v2964
      %2982 = vmatprep.subr.bf16.mxu0 0
      %2983 = vmatpush1.bf16.msra.mxu0 %v2965
      %2984 = vmatprep.subr.bf16.mxu0 0
      %2985 = vmatpush1.bf16.msra.mxu0 %v2966
      %2986 = vmatprep.subr.bf16.mxu0 0
      %2987 = vmatpush1.bf16.msra.mxu0 %v2967
      %2988 = vmatprep.subr.bf16.mxu0 0
      %2989 = vmatpush1.bf16.msra.mxu0 %v2968
      %2990 = vmatprep.subr.bf16.mxu0 0
      %2991 = vmatpush1.bf16.msra.mxu0 %v2969
      %2992 = vmatprep.subr.bf16.mxu0 0
      %2993 = vmatpush1.bf16.msra.mxu0 %v2970
      %2994 = vmatprep.subr.bf16.mxu0 0
      %2995 = vmatpush1.bf16.msra.mxu0 %v2971
      %2996 = vmatprep.subr.bf16.mxu0 0
      %2997 = vmatpush1.bf16.msra.mxu0 0
      %2998 = vmatprep.subr.bf16.mxu0 0
      %2999 = vmatpush1.bf16.msra.mxu0 0
      %3000 = vmatprep.subr.bf16.mxu0 0
      %3001 = vmatpush1.bf16.msra.mxu0 0
      %3002 = vmatprep.subr.bf16.mxu0 0
      %3003 = vmatpush1.bf16.msra.mxu0 0
      %3004 = vmatprep.subr.bf16.mxu0 0
      %3005 = vmatpush1.bf16.msra.mxu0 0
      %3006 = vmatprep.subr.bf16.mxu0 0
      %3007 = vmatpush1.bf16.msra.mxu0 0
      %3008 = vmatprep.subr.bf16.mxu0 0
      %3009 = vmatpush1.bf16.msra.mxu0 0
      %3010 = vmatprep.subr.bf16.mxu0 0
      %3011 = vmatpush1.bf16.msra.mxu0 0
      %3012 = vmatprep.mubr.bf16.mxu0 0
      %3013 = vmatmul.mubr.bf16.gmra.mrb[0].mxu0 %v2750
      %v3014 = vpop.f32.mrb[0].mxu0
      %v3015 = vadd.f32 %v2573, %v3014
      %v3016 = vpop.f32.mrb[0].mxu0
      %v3017 = vpop.f32.mrb[0].mxu0
      %v3018 = vadd.f32 %v2576, %v3017
      %v3019 = vpop.f32.mrb[0].mxu0
      %3020 = vmatprep.mubr.bf16.mxu0 0
      %3021 = vmatmul.mubr.bf16.gmra.mrb[0].mxu0 %v2758
      %v3022 = vpop.f32.mrb[0].mxu0
      %v3023 = vadd.f32 %v2581, %v3022
      %v3024 = vpop.f32.mrb[0].mxu0
      %v3025 = vpop.f32.mrb[0].mxu0
      %v3026 = vadd.f32 %v2584, %v3025
      %v3027 = vpop.f32.mrb[0].mxu0
      %3028 = vmatprep.mubr.bf16.mxu0 0
      %3029 = vmatmul.mubr.bf16.gmra.mrb[0].mxu0 %v2766
      %v3030 = vpop.f32.mrb[0].mxu0
      %v3031 = vadd.f32 %v2589, %v3030
      %v3032 = vpop.f32.mrb[0].mxu0
      %v3033 = vpop.f32.mrb[0].mxu0
      %v3034 = vadd.f32 %v2592, %v3033
      %v3035 = vpop.f32.mrb[0].mxu0
      %3036 = vmatprep.mubr.bf16.mxu0 0
      %3037 = vmatmul.mubr.bf16.gmra.mrb[0].mxu0 %v2774
      %v3038 = vpop.f32.mrb[0].mxu0
      %v3039 = vadd.f32 %v2597, %v3038
      %v3040 = vpop.f32.mrb[0].mxu0
      %v3041 = vpop.f32.mrb[0].mxu0
      %v3042 = vadd.f32 %v2600, %v3041
      %v3043 = vpop.f32.mrb[0].mxu0
      %3044 = vmatprep.mubr.bf16.mxu0 0
      %3045 = vmatmul.mubr.bf16.gmra.mrb[0].mxu0 %v2782
      %v3046 = vpop.f32.mrb[0].mxu0
      %v3047 = vadd.f32 %v2605, %v3046
      %v3048 = vpop.f32.mrb[0].mxu0
      %v3049 = vpop.f32.mrb[0].mxu0
      %v3050 = vadd.f32 %v2608, %v3049
      %v3051 = vpop.f32.mrb[0].mxu0
      %3052 = vmatprep.mubr.bf16.mxu0 0
      %3053 = vmatmul.mubr.bf16.gmra.mrb[0].mxu0 %v2790
      %v3054 = vpop.f32.mrb[0].mxu0
      %v3055 = vadd.f32 %v2613, %v3054
      %v3056 = vpop.f32.mrb[0].mxu0
      %v3057 = vpop.f32.mrb[0].mxu0
      %v3058 = vadd.f32 %v2616, %v3057
      %v3059 = vpop.f32.mrb[0].mxu0
      %3060 = vmatprep.mubr.bf16.mxu0 0
      %3061 = vmatmul.mubr.bf16.gmra.mrb[0].mxu0 %v2798
      %v3062 = vpop.f32.mrb[0].mxu0
      %v3063 = vadd.f32 %v2621, %v3062
      %v3064 = vpop.f32.mrb[0].mxu0
      %v3065 = vpop.f32.mrb[0].mxu0
      %v3066 = vadd.f32 %v2624, %v3065
      %v3067 = vpop.f32.mrb[0].mxu0
      %3068 = vmatprep.mubr.bf16.mxu0 0
      %3069 = vmatmul.mubr.bf16.gmra.mrb[0].mxu0 %v2806
      %v3070 = vpop.f32.mrb[0].mxu0
      %v3071 = vadd.f32 %v2629, %v3070
      %v3072 = vpop.f32.mrb[0].mxu0
      %v3073 = vpop.f32.mrb[0].mxu0
      %v3074 = vadd.f32 %v2632, %v3073
      %v3075 = vpop.f32.mrb[0].mxu0
      %3076 = vmatprep.mubr.bf16.mxu0 0
      %3077 = vmatmul.mubr.bf16.gmra.mrb[0].mxu0 %v2814
      %v3078 = vpop.f32.mrb[0].mxu0
      %v3079 = vadd.f32 %v2637, %v3078
      %v3080 = vpop.f32.mrb[0].mxu0
      %v3081 = vpop.f32.mrb[0].mxu0
      %v3082 = vadd.f32 %v2640, %v3081
      %v3083 = vpop.f32.mrb[0].mxu0
      %3084 = vmatprep.mubr.bf16.mxu0 0
      %3085 = vmatmul.mubr.bf16.gmra.mrb[0].mxu0 %v2822
      %v3086 = vpop.f32.mrb[0].mxu0
      %v3087 = vadd.f32 %v2645, %v3086
      %v3088 = vpop.f32.mrb[0].mxu0
      %v3089 = vpop.f32.mrb[0].mxu0
      %v3090 = vadd.f32 %v2648, %v3089
      %v3091 = vpop.f32.mrb[0].mxu0
      %3092 = vmatprep.mubr.bf16.mxu0 0
      %3093 = vmatmul.mubr.bf16.gmra.mrb[0].mxu0 %v2830
      %v3094 = vpop.f32.mrb[0].mxu0
      %v3095 = vadd.f32 %v2653, %v3094
      %v3096 = vpop.f32.mrb[0].mxu0
      %v3097 = vpop.f32.mrb[0].mxu0
      %v3098 = vadd.f32 %v2656, %v3097
      %v3099 = vpop.f32.mrb[0].mxu0
      %3100 = vmatprep.mubr.bf16.mxu0 0
      %3101 = vmatmul.mubr.bf16.gmra.mrb[0].mxu0 %v2838
      %v3102 = vpop.f32.mrb[0].mxu0
      %v3103 = vadd.f32 %v2661, %v3102
      %v3104 = vpop.f32.mrb[0].mxu0
      %v3105 = vpop.f32.mrb[0].mxu0
      %v3106 = vadd.f32 %v2664, %v3105
      %v3107 = vpop.f32.mrb[0].mxu0
      %3108 = vmatprep.mubr.bf16.mxu0 0
      %3109 = vmatmul.mubr.bf16.gmra.mrb[0].mxu0 %v2846
      %v3110 = vpop.f32.mrb[0].mxu0
      %v3111 = vadd.f32 %v2669, %v3110
      %v3112 = vpop.f32.mrb[0].mxu0
      %v3113 = vpop.f32.mrb[0].mxu0
      %v3114 = vadd.f32 %v2672, %v3113
      %v3115 = vpop.f32.mrb[0].mxu0
      %3116 = vmatprep.mubr.bf16.mxu0 0
      %3117 = vmatmul.mubr.bf16.gmra.mrb[0].mxu0 %v2854
      %v3118 = vpop.f32.mrb[0].mxu0
      %v3119 = vadd.f32 %v2677, %v3118
      %v3120 = vpop.f32.mrb[0].mxu0
      %v3121 = vpop.f32.mrb[0].mxu0
      %v3122 = vadd.f32 %v2680, %v3121
      %v3123 = vpop.f32.mrb[0].mxu0
      %3124 = vmatprep.mubr.bf16.mxu0 0
      %3125 = vmatmul.mubr.bf16.gmra.mrb[0].mxu0 %v2862
      %v3126 = vpop.f32.mrb[0].mxu0
      %v3127 = vadd.f32 %v2685, %v3126
      %v3128 = vpop.f32.mrb[0].mxu0
      %v3129 = vpop.f32.mrb[0].mxu0
      %v3130 = vadd.f32 %v2688, %v3129
      %v3131 = vpop.f32.mrb[0].mxu0
      %3132 = vmatprep.mubr.bf16.mxu0 0
      %3133 = vmatmul.mubr.bf16.gmra.mrb[0].mxu0 %v2870
      %v3134 = vpop.f32.mrb[0].mxu0
      %v3135 = vadd.f32 %v2693, %v3134
      %v3136 = vpop.f32.mrb[0].mxu0
      %v3137 = vpop.f32.mrb[0].mxu0
      %v3138 = vadd.f32 %v2696, %v3137
      %v3139 = vpop.f32.mrb[0].mxu0
      %3140 = vmatprep.mubr.bf16.mxu0 0
      %3141 = vmatmul.mubr.bf16.gmra.mrb[0].mxu0 %v2878
      %v3142 = vpop.f32.mrb[0].mxu0
      %v3143 = vadd.f32 %v2701, %v3142
      %v3144 = vpop.f32.mrb[0].mxu0
      %v3145 = vpop.f32.mrb[0].mxu0
      %v3146 = vadd.f32 %v2704, %v3145
      %v3147 = vpop.f32.mrb[0].mxu0
      %3148 = vmatprep.mubr.bf16.mxu0 0
      %3149 = vmatmul.mubr.bf16.gmra.mrb[0].mxu0 %v2886
      %v3150 = vpop.f32.mrb[0].mxu0
      %v3151 = vadd.f32 %v2709, %v3150
      %v3152 = vpop.f32.mrb[0].mxu0
      %v3153 = vpop.f32.mrb[0].mxu0
      %v3154 = vadd.f32 %v2712, %v3153
      %v3155 = vpop.f32.mrb[0].mxu0
      %3156 = vmatprep.mubr.bf16.mxu0 0
      %3157 = vmatmul.mubr.bf16.gmra.mrb[0].mxu0 %v2894
      %v3158 = vpop.f32.mrb[0].mxu0
      %v3159 = vadd.f32 %v2717, %v3158
      %v3160 = vpop.f32.mrb[0].mxu0
      %v3161 = vpop.f32.mrb[0].mxu0
      %v3162 = vadd.f32 %v2720, %v3161
      %v3163 = vpop.f32.mrb[0].mxu0
      %3164 = vmatprep.mubr.bf16.mxu0 0
      %3165 = vmatmul.mubr.bf16.gmra.mrb[0].mxu0 %v2902
      %v3166 = vpop.f32.mrb[0].mxu0
      %v3167 = vadd.f32 %v2725, %v3166
      %v3168 = vpop.f32.mrb[0].mxu0
      %v3169 = vpop.f32.mrb[0].mxu0
      %v3170 = vadd.f32 %v2728, %v3169
      %v3171 = vpop.f32.mrb[0].mxu0
      %3172 = vmatprep.mubr.bf16.mxu0 0
      %3173 = vmatmul.mubr.bf16.gmra.mrb[0].mxu0 %v2910
      %v3174 = vpop.f32.mrb[0].mxu0
      %v3175 = vadd.f32 %v2733, %v3174
      %v3176 = vpop.f32.mrb[0].mxu0
      %v3177 = vpop.f32.mrb[0].mxu0
      %v3178 = vadd.f32 %v2736, %v3177
      %v3179 = vpop.f32.mrb[0].mxu0
      %3180 = vdwg.mxu0
      %v3181 = vld [vmem:[#allocation2 + $0x10] sm:$0xff]
      %v3182 = vld [vmem:[#allocation2 + $0x18] sm:$0xff]
      %v3183 = vld [vmem:[#allocation2 + $0x20] sm:$0xff]
      %v3184 = vld [vmem:[#allocation2 + $0x28] sm:$0xff]
      %v3185 = vld [vmem:[#allocation2 + $0x30] sm:$0xff]
      %v3186 = vld [vmem:[#allocation2 + $0x38] sm:$0xff]
      %v3187 = vld [vmem:[#allocation2 + $0x40] sm:$0xff]
      %v3188 = vld [vmem:[#allocation2 + $0x48] sm:$0xff]
      %v3189 = vld [vmem:[#allocation2 + $0x50] sm:$0xff]
      %v3190 = vld [vmem:[#allocation2 + $0x58] sm:$0xff]
      %v3191 = vld [vmem:[#allocation2 + $0x60] sm:$0xff]
      %v3192 = vld [vmem:[#allocation2 + $0x68] sm:$0xff]
      %v3193 = vld [vmem:[#allocation2 + $0x70] sm:$0xff]
      %v3194 = vld [vmem:[#allocation2 + $0x78] sm:$0xff]
      %v3195 = vld [vmem:[#allocation2 + $0x80] sm:$0xff]
      %v3196 = vld [vmem:[#allocation2 + $0x88] sm:$0xff]
      %v3197 = vld [vmem:[#allocation2 + $0x90] sm:$0xff]
      %v3198 = vld [vmem:[#allocation2 + $0x98] sm:$0xff]
      %v3199 = vld [vmem:[#allocation2 + $0xa0] sm:$0xff]
      %v3200 = vld [vmem:[#allocation2 + $0xa8] sm:$0xff]
      %v3201 = vld [vmem:[#allocation2 + $0xb0] sm:$0xff]
      %v3202 = vld [vmem:[#allocation2 + $0xb8] sm:$0x1]
      %s3203 = scalar_lea.vmem %s4, 320
      %v3204 = vld [vmem:[%s3203] sm:$0xf]
      %v3205 = vld [vmem:[%s3203 + $0x4] sm:$0xf]
      %v3206 = vld [vmem:[%s3203 + $0x8] sm:$0xf]
      %v3207 = vld [vmem:[%s3203 + $0xc] sm:$0xf]
      %v3208 = vld [vmem:[%s3203 + $0x10] sm:$0xf]
      %v3209 = vld [vmem:[%s3203 + $0x14] sm:$0xf]
      %v3210 = vld [vmem:[%s3203 + $0x18] sm:$0xf]
      %v3211 = vld [vmem:[%s3203 + $0x1c] sm:$0xf]
      %v3212 = vld [vmem:[%s3203 + $0x20] sm:$0xf]
      %v3213 = vld [vmem:[%s3203 + $0x24] sm:$0xf]
      %v3214 = vld [vmem:[%s3203 + $0x28] sm:$0xf]
      %v3215 = vld [vmem:[%s3203 + $0x2c] sm:$0xf]
      %v3216 = vld [vmem:[%s3203 + $0x30] sm:$0xf]
      %v3217 = vld [vmem:[%s3203 + $0x34] sm:$0xf]
      %v3218 = vld [vmem:[%s3203 + $0x38] sm:$0xf]
      %v3219 = vld [vmem:[%s3203 + $0x3c] sm:$0xf]
      %vm3220 = vsmask.f32 7424
      %v3222 = vshrl.u32 %v3181, 16
      %v3224 = vshll.u32 %v3181, 16
      %v3226 = vrot.slane %v3224, 1
      %v3227 = vor.u32 %v3222, %v3226
      %v3229 = vshll.u32 %v3182, 16
      %v3231 = vrot.slane %v3229, 1
      %v3232 = vsel %vm3220, %v3227, %v3231
      %v3233 = vshrl.u32 %v3182, 16
      %v3235 = vor.u32 %v3233, %v3231
      %v3237 = vshll.u32 %v3183, 16
      %v3239 = vrot.slane %v3237, 1
      %v3240 = vsel %vm3220, %v3235, %v3239
      %v3241 = vshrl.u32 %v3183, 16
      %v3243 = vor.u32 %v3241, %v3239
      %v3245 = vshll.u32 %v3184, 16
      %v3247 = vrot.slane %v3245, 1
      %v3248 = vsel %vm3220, %v3243, %v3247
      %v3249 = vshrl.u32 %v3184, 16
      %v3251 = vor.u32 %v3249, %v3247
      %v3253 = vshll.u32 %v3185, 16
      %v3255 = vrot.slane %v3253, 1
      %v3256 = vsel %vm3220, %v3251, %v3255
      %v3257 = vshrl.u32 %v3185, 16
      %v3259 = vor.u32 %v3257, %v3255
      %v3261 = vshll.u32 %v3186, 16
      %v3263 = vrot.slane %v3261, 1
      %v3264 = vsel %vm3220, %v3259, %v3263
      %v3265 = vshrl.u32 %v3186, 16
      %v3267 = vor.u32 %v3265, %v3263
      %v3269 = vshll.u32 %v3187, 16
      %v3271 = vrot.slane %v3269, 1
      %v3272 = vsel %vm3220, %v3267, %v3271
      %v3273 = vshrl.u32 %v3187, 16
      %v3275 = vor.u32 %v3273, %v3271
      %v3277 = vshll.u32 %v3188, 16
      %v3279 = vrot.slane %v3277, 1
      %v3280 = vsel %vm3220, %v3275, %v3279
      %v3281 = vshrl.u32 %v3188, 16
      %v3283 = vor.u32 %v3281, %v3279
      %v3285 = vshll.u32 %v3189, 16
      %v3287 = vrot.slane %v3285, 1
      %v3288 = vsel %vm3220, %v3283, %v3287
      %v3289 = vshrl.u32 %v3189, 16
      %v3291 = vor.u32 %v3289, %v3287
      %v3293 = vshll.u32 %v3190, 16
      %v3295 = vrot.slane %v3293, 1
      %v3296 = vsel %vm3220, %v3291, %v3295
      %v3297 = vshrl.u32 %v3190, 16
      %v3299 = vor.u32 %v3297, %v3295
      %v3301 = vshll.u32 %v3191, 16
      %v3303 = vrot.slane %v3301, 1
      %v3304 = vsel %vm3220, %v3299, %v3303
      %v3305 = vshrl.u32 %v3191, 16
      %v3307 = vor.u32 %v3305, %v3303
      %v3309 = vshll.u32 %v3192, 16
      %v3311 = vrot.slane %v3309, 1
      %v3312 = vsel %vm3220, %v3307, %v3311
      %v3313 = vshrl.u32 %v3192, 16
      %v3315 = vor.u32 %v3313, %v3311
      %v3317 = vshll.u32 %v3193, 16
      %v3319 = vrot.slane %v3317, 1
      %v3320 = vsel %vm3220, %v3315, %v3319
      %v3321 = vshrl.u32 %v3193, 16
      %v3323 = vor.u32 %v3321, %v3319
      %v3325 = vshll.u32 %v3194, 16
      %v3327 = vrot.slane %v3325, 1
      %v3328 = vsel %vm3220, %v3323, %v3327
      %v3329 = vshrl.u32 %v3194, 16
      %v3331 = vor.u32 %v3329, %v3327
      %v3333 = vshll.u32 %v3195, 16
      %v3335 = vrot.slane %v3333, 1
      %v3336 = vsel %vm3220, %v3331, %v3335
      %v3337 = vshrl.u32 %v3195, 16
      %v3339 = vor.u32 %v3337, %v3335
      %v3341 = vshll.u32 %v3196, 16
      %v3343 = vrot.slane %v3341, 1
      %v3344 = vsel %vm3220, %v3339, %v3343
      %v3345 = vshrl.u32 %v3196, 16
      %v3347 = vor.u32 %v3345, %v3343
      %v3349 = vshll.u32 %v3197, 16
      %v3351 = vrot.slane %v3349, 1
      %v3352 = vsel %vm3220, %v3347, %v3351
      %v3353 = vshrl.u32 %v3197, 16
      %v3355 = vor.u32 %v3353, %v3351
      %v3357 = vshll.u32 %v3198, 16
      %v3359 = vrot.slane %v3357, 1
      %v3360 = vsel %vm3220, %v3355, %v3359
      %v3361 = vshrl.u32 %v3198, 16
      %v3363 = vor.u32 %v3361, %v3359
      %v3365 = vshll.u32 %v3199, 16
      %v3367 = vrot.slane %v3365, 1
      %v3368 = vsel %vm3220, %v3363, %v3367
      %v3369 = vshrl.u32 %v3199, 16
      %v3371 = vor.u32 %v3369, %v3367
      %v3373 = vshll.u32 %v3200, 16
      %v3375 = vrot.slane %v3373, 1
      %v3376 = vsel %vm3220, %v3371, %v3375
      %v3377 = vshrl.u32 %v3200, 16
      %v3379 = vor.u32 %v3377, %v3375
      %v3381 = vshll.u32 %v3201, 16
      %v3383 = vrot.slane %v3381, 1
      %v3384 = vsel %vm3220, %v3379, %v3383
      %v3385 = vshrl.u32 %v3201, 16
      %v3387 = vor.u32 %v3385, %v3383
      %v3389 = vshll.u32 %v3202, 16
      %v3391 = vrot.slane %v3389, 1
      %v3392 = vsel %vm3220, %v3387, %v3391
      %v3430 = vunpack.c.l.b16 %v3204
      %v3431 = vunpack.c.l.b16 %v3205
      %v3432 = vunpack.c.l.b16 %v3206
      %v3433 = vunpack.c.l.b16 %v3207
      %v3434 = vunpack.c.l.b16 %v3208
      %v3435 = vunpack.c.l.b16 %v3209
      %v3436 = vunpack.c.l.b16 %v3210
      %v3437 = vunpack.c.l.b16 %v3211
      %v3438 = vunpack.c.l.b16 %v3212
      %v3439 = vunpack.c.l.b16 %v3213
      %v3440 = vunpack.c.l.b16 %v3214
      %v3441 = vunpack.c.l.b16 %v3215
      %v3442 = vunpack.c.l.b16 %v3216
      %v3443 = vunpack.c.l.b16 %v3217
      %v3444 = vunpack.c.l.b16 %v3218
      %v3445 = vunpack.c.l.b16 %v3219
      %v3446 = vpack.c.b16 %v3431, %v3430
      %v3447 = vpack.c.b16 %v3433, %v3432
      %v3448 = vpack.c.b16 %v3435, %v3434
      %v3449 = vpack.c.b16 %v3437, %v3436
      %v3450 = vpack.c.b16 %v3439, %v3438
      %v3451 = vpack.c.b16 %v3441, %v3440
      %v3452 = vpack.c.b16 %v3443, %v3442
      %v3453 = vpack.c.b16 %v3445, %v3444
      %3462 = vmatprep.subr.bf16.mxu0 0
      %3463 = vmatpush1.bf16.msra.mxu0 %v3446
      %3464 = vmatprep.subr.bf16.mxu0 0
      %3465 = vmatpush1.bf16.msra.mxu0 %v3447
      %3466 = vmatprep.subr.bf16.mxu0 0
      %3467 = vmatpush1.bf16.msra.mxu0 %v3448
      %3468 = vmatprep.subr.bf16.mxu0 0
      %3469 = vmatpush1.bf16.msra.mxu0 %v3449
      %3470 = vmatprep.subr.bf16.mxu0 0
      %3471 = vmatpush1.bf16.msra.mxu0 %v3450
      %3472 = vmatprep.subr.bf16.mxu0 0
      %3473 = vmatpush1.bf16.msra.mxu0 %v3451
      %3474 = vmatprep.subr.bf16.mxu0 0
      %3475 = vmatpush1.bf16.msra.mxu0 %v3452
      %3476 = vmatprep.subr.bf16.mxu0 0
      %3477 = vmatpush1.bf16.msra.mxu0 %v3453
      %3478 = vmatprep.subr.bf16.mxu0 0
      %3479 = vmatpush1.bf16.msra.mxu0 0
      %3480 = vmatprep.subr.bf16.mxu0 0
      %3481 = vmatpush1.bf16.msra.mxu0 0
      %3482 = vmatprep.subr.bf16.mxu0 0
      %3483 = vmatpush1.bf16.msra.mxu0 0
      %3484 = vmatprep.subr.bf16.mxu0 0
      %3485 = vmatpush1.bf16.msra.mxu0 0
      %3486 = vmatprep.subr.bf16.mxu0 0
      %3487 = vmatpush1.bf16.msra.mxu0 0
      %3488 = vmatprep.subr.bf16.mxu0 0
      %3489 = vmatpush1.bf16.msra.mxu0 0
      %3490 = vmatprep.subr.bf16.mxu0 0
      %3491 = vmatpush1.bf16.msra.mxu0 0
      %3492 = vmatprep.subr.bf16.mxu0 0
      %3493 = vmatpush1.bf16.msra.mxu0 0
      %3494 = vmatprep.mubr.bf16.mxu0 0
      %3495 = vmatmul.mubr.bf16.gmra.mrb[0].mxu0 %v3232
      %v3496 = vpop.f32.mrb[0].mxu0
      %v3497 = vadd.f32 0.0, %v3496
      %v3498 = vpop.f32.mrb[0].mxu0
      %v3499 = vpop.f32.mrb[0].mxu0
      %v3500 = vadd.f32 0.0, %v3499
      %v3501 = vpop.f32.mrb[0].mxu0
      %3502 = vmatprep.mubr.bf16.mxu0 0
      %3503 = vmatmul.mubr.bf16.gmra.mrb[0].mxu0 %v3240
      %v3504 = vpop.f32.mrb[0].mxu0
      %v3505 = vadd.f32 0.0, %v3504
      %v3506 = vpop.f32.mrb[0].mxu0
      %v3507 = vpop.f32.mrb[0].mxu0
      %v3508 = vadd.f32 0.0, %v3507
      %v3509 = vpop.f32.mrb[0].mxu0
      %3510 = vmatprep.mubr.bf16.mxu0 0
      %3511 = vmatmul.mubr.bf16.gmra.mrb[0].mxu0 %v3248
      %v3512 = vpop.f32.mrb[0].mxu0
      %v3513 = vadd.f32 0.0, %v3512
      %v3514 = vpop.f32.mrb[0].mxu0
      %v3515 = vpop.f32.mrb[0].mxu0
      %v3516 = vadd.f32 0.0, %v3515
      %v3517 = vpop.f32.mrb[0].mxu0
      %3518 = vmatprep.mubr.bf16.mxu0 0
      %3519 = vmatmul.mubr.bf16.gmra.mrb[0].mxu0 %v3256
      %v3520 = vpop.f32.mrb[0].mxu0
      %v3521 = vadd.f32 0.0, %v3520
      %v3522 = vpop.f32.mrb[0].mxu0
      %v3523 = vpop.f32.mrb[0].mxu0
      %v3524 = vadd.f32 0.0, %v3523
      %v3525 = vpop.f32.mrb[0].mxu0
      %3526 = vmatprep.mubr.bf16.mxu0 0
      %3527 = vmatmul.mubr.bf16.gmra.mrb[0].mxu0 %v3264
      %v3528 = vpop.f32.mrb[0].mxu0
      %v3529 = vadd.f32 0.0, %v3528
      %v3530 = vpop.f32.mrb[0].mxu0
      %v3531 = vpop.f32.mrb[0].mxu0
      %v3532 = vadd.f32 0.0, %v3531
      %v3533 = vpop.f32.mrb[0].mxu0
      %3534 = vmatprep.mubr.bf16.mxu0 0
      %3535 = vmatmul.mubr.bf16.gmra.mrb[0].mxu0 %v3272
      %v3536 = vpop.f32.mrb[0].mxu0
      %v3537 = vadd.f32 0.0, %v3536
      %v3538 = vpop.f32.mrb[0].mxu0
      %v3539 = vpop.f32.mrb[0].mxu0
      %v3540 = vadd.f32 0.0, %v3539
      %v3541 = vpop.f32.mrb[0].mxu0
      %3542 = vmatprep.mubr.bf16.mxu0 0
      %3543 = vmatmul.mubr.bf16.gmra.mrb[0].mxu0 %v3280
      %v3544 = vpop.f32.mrb[0].mxu0
      %v3545 = vadd.f32 0.0, %v3544
      %v3546 = vpop.f32.mrb[0].mxu0
      %v3547 = vpop.f32.mrb[0].mxu0
      %v3548 = vadd.f32 0.0, %v3547
      %v3549 = vpop.f32.mrb[0].mxu0
      %3550 = vmatprep.mubr.bf16.mxu0 0
      %3551 = vmatmul.mubr.bf16.gmra.mrb[0].mxu0 %v3288
      %v3552 = vpop.f32.mrb[0].mxu0
      %v3553 = vadd.f32 0.0, %v3552
      %v3554 = vpop.f32.mrb[0].mxu0
      %v3555 = vpop.f32.mrb[0].mxu0
      %v3556 = vadd.f32 0.0, %v3555
      %v3557 = vpop.f32.mrb[0].mxu0
      %3558 = vmatprep.mubr.bf16.mxu0 0
      %3559 = vmatmul.mubr.bf16.gmra.mrb[0].mxu0 %v3296
      %v3560 = vpop.f32.mrb[0].mxu0
      %v3561 = vadd.f32 0.0, %v3560
      %v3562 = vpop.f32.mrb[0].mxu0
      %v3563 = vpop.f32.mrb[0].mxu0
      %v3564 = vadd.f32 0.0, %v3563
      %v3565 = vpop.f32.mrb[0].mxu0
      %3566 = vmatprep.mubr.bf16.mxu0 0
      %3567 = vmatmul.mubr.bf16.gmra.mrb[0].mxu0 %v3304
      %v3568 = vpop.f32.mrb[0].mxu0
      %v3569 = vadd.f32 0.0, %v3568
      %v3570 = vpop.f32.mrb[0].mxu0
      %v3571 = vpop.f32.mrb[0].mxu0
      %v3572 = vadd.f32 0.0, %v3571
      %v3573 = vpop.f32.mrb[0].mxu0
      %3574 = vmatprep.mubr.bf16.mxu0 0
      %3575 = vmatmul.mubr.bf16.gmra.mrb[0].mxu0 %v3312
      %v3576 = vpop.f32.mrb[0].mxu0
      %v3577 = vadd.f32 0.0, %v3576
      %v3578 = vpop.f32.mrb[0].mxu0
      %v3579 = vpop.f32.mrb[0].mxu0
      %v3580 = vadd.f32 0.0, %v3579
      %v3581 = vpop.f32.mrb[0].mxu0
      %3582 = vmatprep.mubr.bf16.mxu0 0
      %3583 = vmatmul.mubr.bf16.gmra.mrb[0].mxu0 %v3320
      %v3584 = vpop.f32.mrb[0].mxu0
      %v3585 = vadd.f32 0.0, %v3584
      %v3586 = vpop.f32.mrb[0].mxu0
      %v3587 = vpop.f32.mrb[0].mxu0
      %v3588 = vadd.f32 0.0, %v3587
      %v3589 = vpop.f32.mrb[0].mxu0
      %3590 = vmatprep.mubr.bf16.mxu0 0
      %3591 = vmatmul.mubr.bf16.gmra.mrb[0].mxu0 %v3328
      %v3592 = vpop.f32.mrb[0].mxu0
      %v3593 = vadd.f32 0.0, %v3592
      %v3594 = vpop.f32.mrb[0].mxu0
      %v3595 = vpop.f32.mrb[0].mxu0
      %v3596 = vadd.f32 0.0, %v3595
      %v3597 = vpop.f32.mrb[0].mxu0
      %3598 = vmatprep.mubr.bf16.mxu0 0
      %3599 = vmatmul.mubr.bf16.gmra.mrb[0].mxu0 %v3336
      %v3600 = vpop.f32.mrb[0].mxu0
      %v3601 = vadd.f32 0.0, %v3600
      %v3602 = vpop.f32.mrb[0].mxu0
      %v3603 = vpop.f32.mrb[0].mxu0
      %v3604 = vadd.f32 0.0, %v3603
      %v3605 = vpop.f32.mrb[0].mxu0
      %3606 = vmatprep.mubr.bf16.mxu0 0
      %3607 = vmatmul.mubr.bf16.gmra.mrb[0].mxu0 %v3344
      %v3608 = vpop.f32.mrb[0].mxu0
      %v3609 = vadd.f32 0.0, %v3608
      %v3610 = vpop.f32.mrb[0].mxu0
      %v3611 = vpop.f32.mrb[0].mxu0
      %v3612 = vadd.f32 0.0, %v3611
      %v3613 = vpop.f32.mrb[0].mxu0
      %3614 = vmatprep.mubr.bf16.mxu0 0
      %3615 = vmatmul.mubr.bf16.gmra.mrb[0].mxu0 %v3352
      %v3616 = vpop.f32.mrb[0].mxu0
      %v3617 = vadd.f32 0.0, %v3616
      %v3618 = vpop.f32.mrb[0].mxu0
      %v3619 = vpop.f32.mrb[0].mxu0
      %v3620 = vadd.f32 0.0, %v3619
      %v3621 = vpop.f32.mrb[0].mxu0
      %3622 = vmatprep.mubr.bf16.mxu0 0
      %3623 = vmatmul.mubr.bf16.gmra.mrb[0].mxu0 %v3360
      %v3624 = vpop.f32.mrb[0].mxu0
      %v3625 = vadd.f32 0.0, %v3624
      %v3626 = vpop.f32.mrb[0].mxu0
      %v3627 = vpop.f32.mrb[0].mxu0
      %v3628 = vadd.f32 0.0, %v3627
      %v3629 = vpop.f32.mrb[0].mxu0
      %3630 = vmatprep.mubr.bf16.mxu0 0
      %3631 = vmatmul.mubr.bf16.gmra.mrb[0].mxu0 %v3368
      %v3632 = vpop.f32.mrb[0].mxu0
      %v3633 = vadd.f32 0.0, %v3632
      %v3634 = vpop.f32.mrb[0].mxu0
      %v3635 = vpop.f32.mrb[0].mxu0
      %v3636 = vadd.f32 0.0, %v3635
      %v3637 = vpop.f32.mrb[0].mxu0
      %3638 = vmatprep.mubr.bf16.mxu0 0
      %3639 = vmatmul.mubr.bf16.gmra.mrb[0].mxu0 %v3376
      %v3640 = vpop.f32.mrb[0].mxu0
      %v3641 = vadd.f32 0.0, %v3640
      %v3642 = vpop.f32.mrb[0].mxu0
      %v3643 = vpop.f32.mrb[0].mxu0
      %v3644 = vadd.f32 0.0, %v3643
      %v3645 = vpop.f32.mrb[0].mxu0
      %3646 = vmatprep.mubr.bf16.mxu0 0
      %3647 = vmatmul.mubr.bf16.gmra.mrb[0].mxu0 %v3384
      %v3648 = vpop.f32.mrb[0].mxu0
      %v3649 = vadd.f32 0.0, %v3648
      %v3650 = vpop.f32.mrb[0].mxu0
      %v3651 = vpop.f32.mrb[0].mxu0
      %v3652 = vadd.f32 0.0, %v3651
      %v3653 = vpop.f32.mrb[0].mxu0
      %3654 = vmatprep.mubr.bf16.mxu0 0
      %3655 = vmatmul.mubr.bf16.gmra.mrb[0].mxu0 %v3392
      %v3656 = vpop.f32.mrb[0].mxu0
      %v3657 = vadd.f32 0.0, %v3656
      %v3658 = vpop.f32.mrb[0].mxu0
      %v3659 = vpop.f32.mrb[0].mxu0
      %v3660 = vadd.f32 0.0, %v3659
      %v3661 = vpop.f32.mrb[0].mxu0
      %3662 = vdwg.mxu0
      %v3663 = vadd.f32 %v3015, %v3497
      %v3664 = vadd.f32 %v3018, %v3500
      %v3665 = vadd.f32 %v3023, %v3505
      %v3666 = vadd.f32 %v3026, %v3508
      %v3667 = vadd.f32 %v3031, %v3513
      %v3668 = vadd.f32 %v3034, %v3516
      %v3669 = vadd.f32 %v3039, %v3521
      %v3670 = vadd.f32 %v3042, %v3524
      %v3671 = vadd.f32 %v3047, %v3529
      %v3672 = vadd.f32 %v3050, %v3532
      %v3673 = vadd.f32 %v3055, %v3537
      %v3674 = vadd.f32 %v3058, %v3540
      %v3675 = vadd.f32 %v3063, %v3545
      %v3676 = vadd.f32 %v3066, %v3548
      %v3677 = vadd.f32 %v3071, %v3553
      %v3678 = vadd.f32 %v3074, %v3556
      %v3679 = vadd.f32 %v3079, %v3561
      %v3680 = vadd.f32 %v3082, %v3564
      %v3681 = vadd.f32 %v3087, %v3569
      %v3682 = vadd.f32 %v3090, %v3572
      %v3683 = vadd.f32 %v3095, %v3577
      %v3684 = vadd.f32 %v3098, %v3580
      %v3685 = vadd.f32 %v3103, %v3585
      %v3686 = vadd.f32 %v3106, %v3588
      %v3687 = vadd.f32 %v3111, %v3593
      %v3688 = vadd.f32 %v3114, %v3596
      %v3689 = vadd.f32 %v3119, %v3601
      %v3690 = vadd.f32 %v3122, %v3604
      %v3691 = vadd.f32 %v3127, %v3609
      %v3692 = vadd.f32 %v3130, %v3612
      %v3693 = vadd.f32 %v3135, %v3617
      %v3694 = vadd.f32 %v3138, %v3620
      %v3695 = vadd.f32 %v3143, %v3625
      %v3696 = vadd.f32 %v3146, %v3628
      %v3697 = vadd.f32 %v3151, %v3633
      %v3698 = vadd.f32 %v3154, %v3636
      %v3699 = vadd.f32 %v3159, %v3641
      %v3700 = vadd.f32 %v3162, %v3644
      %v3701 = vadd.f32 %v3167, %v3649
      %v3702 = vadd.f32 %v3170, %v3652
      %v3703 = vadd.f32 %v3175, %v3657
      %v3704 = vadd.f32 %v3178, %v3660
      %v3705 = vld [vmem:[#allocation3] sm:$0xff]
      %v3706 = vld [vmem:[#allocation3 + $0x8] sm:$0xff]
      %v3707 = vld [vmem:[#allocation3 + $0x10] sm:$0xff]
      %v3708 = vld [vmem:[#allocation3 + $0x18] sm:$0xff]
      %v3709 = vld [vmem:[#allocation3 + $0x20] sm:$0xff]
      %v3710 = vld [vmem:[#allocation3 + $0x28] sm:$0xff]
      %v3711 = vld [vmem:[#allocation3 + $0x30] sm:$0xff]
      %v3712 = vld [vmem:[#allocation3 + $0x38] sm:$0xff]
      %v3713 = vld [vmem:[#allocation3 + $0x40] sm:$0xff]
      %v3714 = vld [vmem:[#allocation3 + $0x48] sm:$0xff]
      %v3715 = vld [vmem:[#allocation3 + $0x50] sm:$0xff]
      %v3716 = vld [vmem:[#allocation3 + $0x58] sm:$0xff]
      %v3717 = vld [vmem:[#allocation3 + $0x60] sm:$0xff]
      %v3718 = vld [vmem:[#allocation3 + $0x68] sm:$0xff]
      %v3719 = vld [vmem:[#allocation3 + $0x70] sm:$0xff]
      %v3720 = vld [vmem:[#allocation3 + $0x78] sm:$0xff]
      %v3721 = vld [vmem:[#allocation3 + $0x80] sm:$0xff]
      %v3722 = vld [vmem:[#allocation3 + $0x88] sm:$0xff]
      %v3723 = vld [vmem:[#allocation3 + $0x90] sm:$0xff]
      %v3724 = vld [vmem:[#allocation3 + $0x98] sm:$0xff]
      %v3725 = vld [vmem:[#allocation3 + $0xa0] sm:$0xff]
      %v3726 = vld [vmem:[#allocation3 + $0xa8] sm:$0xff]
      %v3727 = vld [vmem:[#allocation3 + $0xb0] sm:$0xff]
      %v3728 = vld [vmem:[#allocation3 + $0xb8] sm:$0xff]
      %v3729 = vld [vmem:[#allocation3 + $0xc0] sm:$0xff]
      %v3730 = vld [vmem:[#allocation3 + $0xc8] sm:$0xff]
      %v3731 = vld [vmem:[#allocation3 + $0xd0] sm:$0xff]
      %v3732 = vld [vmem:[#allocation3 + $0xd8] sm:$0xff]
      %v3733 = vld [vmem:[#allocation3 + $0xe0] sm:$0xff]
      %v3734 = vld [vmem:[#allocation3 + $0xe8] sm:$0xff]
      %v3735 = vld [vmem:[#allocation3 + $0xf0] sm:$0xff]
      %v3736 = vld [vmem:[#allocation3 + $0xf8] sm:$0xff]
      %v3737 = vld [vmem:[#allocation3 + $0x100] sm:$0xff]
      %v3738 = vld [vmem:[#allocation3 + $0x108] sm:$0xff]
      %v3739 = vld [vmem:[#allocation3 + $0x110] sm:$0xff]
      %v3740 = vld [vmem:[#allocation3 + $0x118] sm:$0xff]
      %v3741 = vld [vmem:[#allocation3 + $0x120] sm:$0xff]
      %v3742 = vld [vmem:[#allocation3 + $0x128] sm:$0xff]
      %v3743 = vld [vmem:[#allocation3 + $0x130] sm:$0xff]
      %v3744 = vld [vmem:[#allocation3 + $0x138] sm:$0xff]
      %v3745 = vld [vmem:[#allocation3 + $0x140] sm:$0xff]
      %v3746 = vld [vmem:[#allocation3 + $0x148] sm:$0xff]
      %v3747 = vadd.f32 %v3705, %v3663
      %v3748 = vadd.f32 %v3706, %v3664
      %v3749 = vadd.f32 %v3707, %v3665
      %v3750 = vadd.f32 %v3708, %v3666
      %v3751 = vadd.f32 %v3709, %v3667
      %v3752 = vadd.f32 %v3710, %v3668
      %v3753 = vadd.f32 %v3711, %v3669
      %v3754 = vadd.f32 %v3712, %v3670
      %v3755 = vadd.f32 %v3713, %v3671
      %v3756 = vadd.f32 %v3714, %v3672
      %v3757 = vadd.f32 %v3715, %v3673
      %v3758 = vadd.f32 %v3716, %v3674
      %v3759 = vadd.f32 %v3717, %v3675
      %v3760 = vadd.f32 %v3718, %v3676
      %v3761 = vadd.f32 %v3719, %v3677
      %v3762 = vadd.f32 %v3720, %v3678
      %v3763 = vadd.f32 %v3721, %v3679
      %v3764 = vadd.f32 %v3722, %v3680
      %v3765 = vadd.f32 %v3723, %v3681
      %v3766 = vadd.f32 %v3724, %v3682
      %v3767 = vadd.f32 %v3725, %v3683
      %v3768 = vadd.f32 %v3726, %v3684
      %v3769 = vadd.f32 %v3727, %v3685
      %v3770 = vadd.f32 %v3728, %v3686
      %v3771 = vadd.f32 %v3729, %v3687
      %v3772 = vadd.f32 %v3730, %v3688
      %v3773 = vadd.f32 %v3731, %v3689
      %v3774 = vadd.f32 %v3732, %v3690
      %v3775 = vadd.f32 %v3733, %v3691
      %v3776 = vadd.f32 %v3734, %v3692
      %v3777 = vadd.f32 %v3735, %v3693
      %v3778 = vadd.f32 %v3736, %v3694
      %v3779 = vadd.f32 %v3737, %v3695
      %v3780 = vadd.f32 %v3738, %v3696
      %v3781 = vadd.f32 %v3739, %v3697
      %v3782 = vadd.f32 %v3740, %v3698
      %v3783 = vadd.f32 %v3741, %v3699
      %v3784 = vadd.f32 %v3742, %v3700
      %v3785 = vadd.f32 %v3743, %v3701
      %v3786 = vadd.f32 %v3744, %v3702
      %v3787 = vadd.f32 %v3745, %v3703
      %v3788 = vadd.f32 %v3746, %v3704
      %3789 = vst [vmem:[#allocation3] sm:$0xff] %v3747
      %3790 = vst [vmem:[#allocation3 + $0x8] sm:$0xff] %v3748
      %3791 = vst [vmem:[#allocation3 + $0x10] sm:$0xff] %v3749
      %3792 = vst [vmem:[#allocation3 + $0x18] sm:$0xff] %v3750
      %3793 = vst [vmem:[#allocation3 + $0x20] sm:$0xff] %v3751
      %3794 = vst [vmem:[#allocation3 + $0x28] sm:$0xff] %v3752
      %3795 = vst [vmem:[#allocation3 + $0x30] sm:$0xff] %v3753
      %3796 = vst [vmem:[#allocation3 + $0x38] sm:$0xff] %v3754
      %3797 = vst [vmem:[#allocation3 + $0x40] sm:$0xff] %v3755
      %3798 = vst [vmem:[#allocation3 + $0x48] sm:$0xff] %v3756
      %3799 = vst [vmem:[#allocation3 + $0x50] sm:$0xff] %v3757
      %3800 = vst [vmem:[#allocation3 + $0x58] sm:$0xff] %v3758
      %3801 = vst [vmem:[#allocation3 + $0x60] sm:$0xff] %v3759
      %3802 = vst [vmem:[#allocation3 + $0x68] sm:$0xff] %v3760
      %3803 = vst [vmem:[#allocation3 + $0x70] sm:$0xff] %v3761
      %3804 = vst [vmem:[#allocation3 + $0x78] sm:$0xff] %v3762
      %3805 = vst [vmem:[#allocation3 + $0x80] sm:$0xff] %v3763
      %3806 = vst [vmem:[#allocation3 + $0x88] sm:$0xff] %v3764
      %3807 = vst [vmem:[#allocation3 + $0x90] sm:$0xff] %v3765
      %3808 = vst [vmem:[#allocation3 + $0x98] sm:$0xff] %v3766
      %3809 = vst [vmem:[#allocation3 + $0xa0] sm:$0xff] %v3767
      %3810 = vst [vmem:[#allocation3 + $0xa8] sm:$0xff] %v3768
      %3811 = vst [vmem:[#allocation3 + $0xb0] sm:$0xff] %v3769
      %3812 = vst [vmem:[#allocation3 + $0xb8] sm:$0xff] %v3770
      %3813 = vst [vmem:[#allocation3 + $0xc0] sm:$0xff] %v3771
      %3814 = vst [vmem:[#allocation3 + $0xc8] sm:$0xff] %v3772
      %3815 = vst [vmem:[#allocation3 + $0xd0] sm:$0xff] %v3773
      %3816 = vst [vmem:[#allocation3 + $0xd8] sm:$0xff] %v3774
      %3817 = vst [vmem:[#allocation3 + $0xe0] sm:$0xff] %v3775
      %3818 = vst [vmem:[#allocation3 + $0xe8] sm:$0xff] %v3776
      %3819 = vst [vmem:[#allocation3 + $0xf0] sm:$0xff] %v3777
      %3820 = vst [vmem:[#allocation3 + $0xf8] sm:$0xff] %v3778
      %3821 = vst [vmem:[#allocation3 + $0x100] sm:$0xff] %v3779
      %3822 = vst [vmem:[#allocation3 + $0x108] sm:$0xff] %v3780
      %3823 = vst [vmem:[#allocation3 + $0x110] sm:$0xff] %v3781
      %3824 = vst [vmem:[#allocation3 + $0x118] sm:$0xff] %v3782
      %3825 = vst [vmem:[#allocation3 + $0x120] sm:$0xff] %v3783
      %3826 = vst [vmem:[#allocation3 + $0x128] sm:$0xff] %v3784
      %3827 = vst [vmem:[#allocation3 + $0x130] sm:$0xff] %v3785
      %3828 = vst [vmem:[#allocation3 + $0x138] sm:$0xff] %v3786
      %3829 = vst [vmem:[#allocation3 + $0x140] sm:$0xff] %v3787
      %3830 = vst [vmem:[#allocation3 + $0x148] sm:$0xff] %v3788
      %v3831 = vld [vmem:[#allocation2 + $0x18] sm:$0xff]
      %v3832 = vld [vmem:[#allocation2 + $0x20] sm:$0xff]
      %v3833 = vld [vmem:[#allocation2 + $0x28] sm:$0xff]
      %v3834 = vld [vmem:[#allocation2 + $0x30] sm:$0xff]
      %v3835 = vld [vmem:[#allocation2 + $0x38] sm:$0xff]
      %v3836 = vld [vmem:[#allocation2 + $0x40] sm:$0xff]
      %v3837 = vld [vmem:[#allocation2 + $0x48] sm:$0xff]
      %v3838 = vld [vmem:[#allocation2 + $0x50] sm:$0xff]
      %v3839 = vld [vmem:[#allocation2 + $0x58] sm:$0xff]
      %v3840 = vld [vmem:[#allocation2 + $0x60] sm:$0xff]
      %v3841 = vld [vmem:[#allocation2 + $0x68] sm:$0xff]
      %v3842 = vld [vmem:[#allocation2 + $0x70] sm:$0xff]
      %v3843 = vld [vmem:[#allocation2 + $0x78] sm:$0xff]
      %v3844 = vld [vmem:[#allocation2 + $0x80] sm:$0xff]
      %v3845 = vld [vmem:[#allocation2 + $0x88] sm:$0xff]
      %v3846 = vld [vmem:[#allocation2 + $0x90] sm:$0xff]
      %v3847 = vld [vmem:[#allocation2 + $0x98] sm:$0xff]
      %v3848 = vld [vmem:[#allocation2 + $0xa0] sm:$0xff]
      %v3849 = vld [vmem:[#allocation2 + $0xa8] sm:$0xff]
      %v3850 = vld [vmem:[#allocation2 + $0xb0] sm:$0xff]
      %v3851 = vld [vmem:[#allocation2 + $0xb8] sm:$0xff]
      %v3852 = vld [vmem:[#allocation2 + $0xc0] sm:$0x1]
      %s3853 = scalar_lea.vmem %s4, 384
      %v3854 = vld [vmem:[%s3853] sm:$0xf]
      %v3855 = vld [vmem:[%s3853 + $0x4] sm:$0xf]
      %v3856 = vld [vmem:[%s3853 + $0x8] sm:$0xf]
      %v3857 = vld [vmem:[%s3853 + $0xc] sm:$0xf]
      %v3858 = vld [vmem:[%s3853 + $0x10] sm:$0xf]
      %v3859 = vld [vmem:[%s3853 + $0x14] sm:$0xf]
      %v3860 = vld [vmem:[%s3853 + $0x18] sm:$0xf]
      %v3861 = vld [vmem:[%s3853 + $0x1c] sm:$0xf]
      %v3862 = vld [vmem:[%s3853 + $0x20] sm:$0xf]
      %v3863 = vld [vmem:[%s3853 + $0x24] sm:$0xf]
      %v3864 = vld [vmem:[%s3853 + $0x28] sm:$0xf]
      %v3865 = vld [vmem:[%s3853 + $0x2c] sm:$0xf]
      %v3866 = vld [vmem:[%s3853 + $0x30] sm:$0xf]
      %v3867 = vld [vmem:[%s3853 + $0x34] sm:$0xf]
      %v3868 = vld [vmem:[%s3853 + $0x38] sm:$0xf]
      %v3869 = vld [vmem:[%s3853 + $0x3c] sm:$0xf]
      %v3870 = vld [vmem:[#allocation2 + $0x18] sm:$0xfe]
      %s3871 = scalar_lea.vmem %s4, 448
      %v3872 = vld [vmem:[%s3871] sm:$0xf]
      %v3873 = vld [vmem:[%s3871 + $0x4] sm:$0xf]
      %v3874 = vld [vmem:[%s3871 + $0x8] sm:$0xf]
      %v3875 = vld [vmem:[%s3871 + $0xc] sm:$0xf]
      %v3876 = vld [vmem:[%s3871 + $0x10] sm:$0xf]
      %v3877 = vld [vmem:[%s3871 + $0x14] sm:$0xf]
      %v3878 = vld [vmem:[%s3871 + $0x18] sm:$0xf]
      %v3879 = vld [vmem:[%s3871 + $0x1c] sm:$0xf]
      %v3880 = vld [vmem:[%s3871 + $0x20] sm:$0xf]
      %v3881 = vld [vmem:[%s3871 + $0x24] sm:$0xf]
      %v3882 = vld [vmem:[%s3871 + $0x28] sm:$0xf]
      %v3883 = vld [vmem:[%s3871 + $0x2c] sm:$0xf]
      %v3884 = vld [vmem:[%s3871 + $0x30] sm:$0xf]
      %v3885 = vld [vmem:[%s3871 + $0x34] sm:$0xf]
      %v3886 = vld [vmem:[%s3871 + $0x38] sm:$0xf]
      %v3887 = vld [vmem:[%s3871 + $0x3c] sm:$0xf]
      %vm3910 = vcmask 1046528
      %v3911 = vrot.slane %v3870, 1
      %v3912 = vrot.slane %v3832, 1
      %v3913 = vsel %vm3910, %v3911, %v3912
      %v3914 = vrot.slane %v3833, 1
      %v3915 = vsel %vm3910, %v3912, %v3914
      %v3916 = vrot.slane %v3834, 1
      %v3917 = vsel %vm3910, %v3914, %v3916
      %v3918 = vrot.slane %v3835, 1
      %v3919 = vsel %vm3910, %v3916, %v3918
      %v3920 = vrot.slane %v3836, 1
      %v3921 = vsel %vm3910, %v3918, %v3920
      %v3922 = vrot.slane %v3837, 1
      %v3923 = vsel %vm3910, %v3920, %v3922
      %v3924 = vrot.slane %v3838, 1
      %v3925 = vsel %vm3910, %v3922, %v3924
      %v3926 = vrot.slane %v3839, 1
      %v3927 = vsel %vm3910, %v3924, %v3926
      %v3928 = vrot.slane %v3840, 1
      %v3929 = vsel %vm3910, %v3926, %v3928
      %v3930 = vrot.slane %v3841, 1
      %v3931 = vsel %vm3910, %v3928, %v3930
      %v3932 = vrot.slane %v3842, 1
      %v3933 = vsel %vm3910, %v3930, %v3932
      %v3934 = vrot.slane %v3843, 1
      %v3935 = vsel %vm3910, %v3932, %v3934
      %v3936 = vrot.slane %v3844, 1
      %v3937 = vsel %vm3910, %v3934, %v3936
      %v3938 = vrot.slane %v3845, 1
      %v3939 = vsel %vm3910, %v3936, %v3938
      %v3940 = vrot.slane %v3846, 1
      %v3941 = vsel %vm3910, %v3938, %v3940
      %v3942 = vrot.slane %v3847, 1
      %v3943 = vsel %vm3910, %v3940, %v3942
      %v3944 = vrot.slane %v3848, 1
      %v3945 = vsel %vm3910, %v3942, %v3944
      %v3946 = vrot.slane %v3849, 1
      %v3947 = vsel %vm3910, %v3944, %v3946
      %v3948 = vrot.slane %v3850, 1
      %v3949 = vsel %vm3910, %v3946, %v3948
      %v3950 = vrot.slane %v3851, 1
      %v3951 = vsel %vm3910, %v3948, %v3950
      %v3952 = vrot.slane %v3852, 1
      %v3953 = vsel %vm3910, %v3950, %v3952
      %v3991 = vunpack.c.l.b16 %v3872
      %v3992 = vunpack.c.l.b16 %v3873
      %v3993 = vunpack.c.l.b16 %v3874
      %v3994 = vunpack.c.l.b16 %v3875
      %v3995 = vunpack.c.l.b16 %v3876
      %v3996 = vunpack.c.l.b16 %v3877
      %v3997 = vunpack.c.l.b16 %v3878
      %v3998 = vunpack.c.l.b16 %v3879
      %v3999 = vunpack.c.l.b16 %v3880
      %v4000 = vunpack.c.l.b16 %v3881
      %v4001 = vunpack.c.l.b16 %v3882
      %v4002 = vunpack.c.l.b16 %v3883
      %v4003 = vunpack.c.l.b16 %v3884
      %v4004 = vunpack.c.l.b16 %v3885
      %v4005 = vunpack.c.l.b16 %v3886
      %v4006 = vunpack.c.l.b16 %v3887
      %v4007 = vpack.c.b16 %v3992, %v3991
      %v4008 = vpack.c.b16 %v3994, %v3993
      %v4009 = vpack.c.b16 %v3996, %v3995
      %v4010 = vpack.c.b16 %v3998, %v3997
      %v4011 = vpack.c.b16 %v4000, %v3999
      %v4012 = vpack.c.b16 %v4002, %v4001
      %v4013 = vpack.c.b16 %v4004, %v4003
      %v4014 = vpack.c.b16 %v4006, %v4005
      %4023 = vmatprep.subr.bf16.mxu0 0
      %4024 = vmatpush1.bf16.msra.mxu0 %v4007
      %4025 = vmatprep.subr.bf16.mxu0 0
      %4026 = vmatpush1.bf16.msra.mxu0 %v4008
      %4027 = vmatprep.subr.bf16.mxu0 0
      %4028 = vmatpush1.bf16.msra.mxu0 %v4009
      %4029 = vmatprep.subr.bf16.mxu0 0
      %4030 = vmatpush1.bf16.msra.mxu0 %v4010
      %4031 = vmatprep.subr.bf16.mxu0 0
      %4032 = vmatpush1.bf16.msra.mxu0 %v4011
      %4033 = vmatprep.subr.bf16.mxu0 0
      %4034 = vmatpush1.bf16.msra.mxu0 %v4012
      %4035 = vmatprep.subr.bf16.mxu0 0
      %4036 = vmatpush1.bf16.msra.mxu0 %v4013
      %4037 = vmatprep.subr.bf16.mxu0 0
      %4038 = vmatpush1.bf16.msra.mxu0 %v4014
      %4039 = vmatprep.subr.bf16.mxu0 0
      %4040 = vmatpush1.bf16.msra.mxu0 0
      %4041 = vmatprep.subr.bf16.mxu0 0
      %4042 = vmatpush1.bf16.msra.mxu0 0
      %4043 = vmatprep.subr.bf16.mxu0 0
      %4044 = vmatpush1.bf16.msra.mxu0 0
      %4045 = vmatprep.subr.bf16.mxu0 0
      %4046 = vmatpush1.bf16.msra.mxu0 0
      %4047 = vmatprep.subr.bf16.mxu0 0
      %4048 = vmatpush1.bf16.msra.mxu0 0
      %4049 = vmatprep.subr.bf16.mxu0 0
      %4050 = vmatpush1.bf16.msra.mxu0 0
      %4051 = vmatprep.subr.bf16.mxu0 0
      %4052 = vmatpush1.bf16.msra.mxu0 0
      %4053 = vmatprep.subr.bf16.mxu0 0
      %4054 = vmatpush1.bf16.msra.mxu0 0
      %4055 = vmatprep.mubr.bf16.mxu0 0
      %4056 = vmatmul.mubr.bf16.gmra.mrb[0].mxu0 %v3913
      %v4057 = vpop.f32.mrb[0].mxu0
      %v4058 = vadd.f32 0.0, %v4057
      %v4059 = vpop.f32.mrb[0].mxu0
      %v4060 = vpop.f32.mrb[0].mxu0
      %v4061 = vadd.f32 0.0, %v4060
      %v4062 = vpop.f32.mrb[0].mxu0
      %4063 = vmatprep.mubr.bf16.mxu0 0
      %4064 = vmatmul.mubr.bf16.gmra.mrb[0].mxu0 %v3915
      %v4065 = vpop.f32.mrb[0].mxu0
      %v4066 = vadd.f32 0.0, %v4065
      %v4067 = vpop.f32.mrb[0].mxu0
      %v4068 = vpop.f32.mrb[0].mxu0
      %v4069 = vadd.f32 0.0, %v4068
      %v4070 = vpop.f32.mrb[0].mxu0
      %4071 = vmatprep.mubr.bf16.mxu0 0
      %4072 = vmatmul.mubr.bf16.gmra.mrb[0].mxu0 %v3917
      %v4073 = vpop.f32.mrb[0].mxu0
      %v4074 = vadd.f32 0.0, %v4073
      %v4075 = vpop.f32.mrb[0].mxu0
      %v4076 = vpop.f32.mrb[0].mxu0
      %v4077 = vadd.f32 0.0, %v4076
      %v4078 = vpop.f32.mrb[0].mxu0
      %4079 = vmatprep.mubr.bf16.mxu0 0
      %4080 = vmatmul.mubr.bf16.gmra.mrb[0].mxu0 %v3919
      %v4081 = vpop.f32.mrb[0].mxu0
      %v4082 = vadd.f32 0.0, %v4081
      %v4083 = vpop.f32.mrb[0].mxu0
      %v4084 = vpop.f32.mrb[0].mxu0
      %v4085 = vadd.f32 0.0, %v4084
      %v4086 = vpop.f32.mrb[0].mxu0
      %4087 = vmatprep.mubr.bf16.mxu0 0
      %4088 = vmatmul.mubr.bf16.gmra.mrb[0].mxu0 %v3921
      %v4089 = vpop.f32.mrb[0].mxu0
      %v4090 = vadd.f32 0.0, %v4089
      %v4091 = vpop.f32.mrb[0].mxu0
      %v4092 = vpop.f32.mrb[0].mxu0
      %v4093 = vadd.f32 0.0, %v4092
      %v4094 = vpop.f32.mrb[0].mxu0
      %4095 = vmatprep.mubr.bf16.mxu0 0
      %4096 = vmatmul.mubr.bf16.gmra.mrb[0].mxu0 %v3923
      %v4097 = vpop.f32.mrb[0].mxu0
      %v4098 = vadd.f32 0.0, %v4097
      %v4099 = vpop.f32.mrb[0].mxu0
      %v4100 = vpop.f32.mrb[0].mxu0
      %v4101 = vadd.f32 0.0, %v4100
      %v4102 = vpop.f32.mrb[0].mxu0
      %4103 = vmatprep.mubr.bf16.mxu0 0
      %4104 = vmatmul.mubr.bf16.gmra.mrb[0].mxu0 %v3925
      %v4105 = vpop.f32.mrb[0].mxu0
      %v4106 = vadd.f32 0.0, %v4105
      %v4107 = vpop.f32.mrb[0].mxu0
      %v4108 = vpop.f32.mrb[0].mxu0
      %v4109 = vadd.f32 0.0, %v4108
      %v4110 = vpop.f32.mrb[0].mxu0
      %4111 = vmatprep.mubr.bf16.mxu0 0
      %4112 = vmatmul.mubr.bf16.gmra.mrb[0].mxu0 %v3927
      %v4113 = vpop.f32.mrb[0].mxu0
      %v4114 = vadd.f32 0.0, %v4113
      %v4115 = vpop.f32.mrb[0].mxu0
      %v4116 = vpop.f32.mrb[0].mxu0
      %v4117 = vadd.f32 0.0, %v4116
      %v4118 = vpop.f32.mrb[0].mxu0
      %4119 = vmatprep.mubr.bf16.mxu0 0
      %4120 = vmatmul.mubr.bf16.gmra.mrb[0].mxu0 %v3929
      %v4121 = vpop.f32.mrb[0].mxu0
      %v4122 = vadd.f32 0.0, %v4121
      %v4123 = vpop.f32.mrb[0].mxu0
      %v4124 = vpop.f32.mrb[0].mxu0
      %v4125 = vadd.f32 0.0, %v4124
      %v4126 = vpop.f32.mrb[0].mxu0
      %4127 = vmatprep.mubr.bf16.mxu0 0
      %4128 = vmatmul.mubr.bf16.gmra.mrb[0].mxu0 %v3931
      %v4129 = vpop.f32.mrb[0].mxu0
      %v4130 = vadd.f32 0.0, %v4129
      %v4131 = vpop.f32.mrb[0].mxu0
      %v4132 = vpop.f32.mrb[0].mxu0
      %v4133 = vadd.f32 0.0, %v4132
      %v4134 = vpop.f32.mrb[0].mxu0
      %4135 = vmatprep.mubr.bf16.mxu0 0
      %4136 = vmatmul.mubr.bf16.gmra.mrb[0].mxu0 %v3933
      %v4137 = vpop.f32.mrb[0].mxu0
      %v4138 = vadd.f32 0.0, %v4137
      %v4139 = vpop.f32.mrb[0].mxu0
      %v4140 = vpop.f32.mrb[0].mxu0
      %v4141 = vadd.f32 0.0, %v4140
      %v4142 = vpop.f32.mrb[0].mxu0
      %4143 = vmatprep.mubr.bf16.mxu0 0
      %4144 = vmatmul.mubr.bf16.gmra.mrb[0].mxu0 %v3935
      %v4145 = vpop.f32.mrb[0].mxu0
      %v4146 = vadd.f32 0.0, %v4145
      %v4147 = vpop.f32.mrb[0].mxu0
      %v4148 = vpop.f32.mrb[0].mxu0
      %v4149 = vadd.f32 0.0, %v4148
      %v4150 = vpop.f32.mrb[0].mxu0
      %4151 = vmatprep.mubr.bf16.mxu0 0
      %4152 = vmatmul.mubr.bf16.gmra.mrb[0].mxu0 %v3937
      %v4153 = vpop.f32.mrb[0].mxu0
      %v4154 = vadd.f32 0.0, %v4153
      %v4155 = vpop.f32.mrb[0].mxu0
      %v4156 = vpop.f32.mrb[0].mxu0
      %v4157 = vadd.f32 0.0, %v4156
      %v4158 = vpop.f32.mrb[0].mxu0
      %4159 = vmatprep.mubr.bf16.mxu0 0
      %4160 = vmatmul.mubr.bf16.gmra.mrb[0].mxu0 %v3939
      %v4161 = vpop.f32.mrb[0].mxu0
      %v4162 = vadd.f32 0.0, %v4161
      %v4163 = vpop.f32.mrb[0].mxu0
      %v4164 = vpop.f32.mrb[0].mxu0
      %v4165 = vadd.f32 0.0, %v4164
      %v4166 = vpop.f32.mrb[0].mxu0
      %4167 = vmatprep.mubr.bf16.mxu0 0
      %4168 = vmatmul.mubr.bf16.gmra.mrb[0].mxu0 %v3941
      %v4169 = vpop.f32.mrb[0].mxu0
      %v4170 = vadd.f32 0.0, %v4169
      %v4171 = vpop.f32.mrb[0].mxu0
      %v4172 = vpop.f32.mrb[0].mxu0
      %v4173 = vadd.f32 0.0, %v4172
      %v4174 = vpop.f32.mrb[0].mxu0
      %4175 = vmatprep.mubr.bf16.mxu0 0
      %4176 = vmatmul.mubr.bf16.gmra.mrb[0].mxu0 %v3943
      %v4177 = vpop.f32.mrb[0].mxu0
      %v4178 = vadd.f32 0.0, %v4177
      %v4179 = vpop.f32.mrb[0].mxu0
      %v4180 = vpop.f32.mrb[0].mxu0
      %v4181 = vadd.f32 0.0, %v4180
      %v4182 = vpop.f32.mrb[0].mxu0
      %4183 = vmatprep.mubr.bf16.mxu0 0
      %4184 = vmatmul.mubr.bf16.gmra.mrb[0].mxu0 %v3945
      %v4185 = vpop.f32.mrb[0].mxu0
      %v4186 = vadd.f32 0.0, %v4185
      %v4187 = vpop.f32.mrb[0].mxu0
      %v4188 = vpop.f32.mrb[0].mxu0
      %v4189 = vadd.f32 0.0, %v4188
      %v4190 = vpop.f32.mrb[0].mxu0
      %4191 = vmatprep.mubr.bf16.mxu0 0
      %4192 = vmatmul.mubr.bf16.gmra.mrb[0].mxu0 %v3947
      %v4193 = vpop.f32.mrb[0].mxu0
      %v4194 = vadd.f32 0.0, %v4193
      %v4195 = vpop.f32.mrb[0].mxu0
      %v4196 = vpop.f32.mrb[0].mxu0
      %v4197 = vadd.f32 0.0, %v4196
      %v4198 = vpop.f32.mrb[0].mxu0
      %4199 = vmatprep.mubr.bf16.mxu0 0
      %4200 = vmatmul.mubr.bf16.gmra.mrb[0].mxu0 %v3949
      %v4201 = vpop.f32.mrb[0].mxu0
      %v4202 = vadd.f32 0.0, %v4201
      %v4203 = vpop.f32.mrb[0].mxu0
      %v4204 = vpop.f32.mrb[0].mxu0
      %v4205 = vadd.f32 0.0, %v4204
      %v4206 = vpop.f32.mrb[0].mxu0
      %4207 = vmatprep.mubr.bf16.mxu0 0
      %4208 = vmatmul.mubr.bf16.gmra.mrb[0].mxu0 %v3951
      %v4209 = vpop.f32.mrb[0].mxu0
      %v4210 = vadd.f32 0.0, %v4209
      %v4211 = vpop.f32.mrb[0].mxu0
      %v4212 = vpop.f32.mrb[0].mxu0
      %v4213 = vadd.f32 0.0, %v4212
      %v4214 = vpop.f32.mrb[0].mxu0
      %4215 = vmatprep.mubr.bf16.mxu0 0
      %4216 = vmatmul.mubr.bf16.gmra.mrb[0].mxu0 %v3953
      %v4217 = vpop.f32.mrb[0].mxu0
      %v4218 = vadd.f32 0.0, %v4217
      %v4219 = vpop.f32.mrb[0].mxu0
      %v4220 = vpop.f32.mrb[0].mxu0
      %v4221 = vadd.f32 0.0, %v4220
      %v4222 = vpop.f32.mrb[0].mxu0
      %4223 = vdwg.mxu0
      %v4225 = vshrl.u32 %v3831, 16
      %v4227 = vshll.u32 %v3831, 16
      %v4229 = vrot.slane %v4227, 1
      %v4230 = vor.u32 %v4225, %v4229
      %v4232 = vshll.u32 %v3832, 16
      %v4234 = vrot.slane %v4232, 1
      %v4235 = vsel %vm3220, %v4230, %v4234
      %v4236 = vshrl.u32 %v3832, 16
      %v4238 = vor.u32 %v4236, %v4234
      %v4240 = vshll.u32 %v3833, 16
      %v4242 = vrot.slane %v4240, 1
      %v4243 = vsel %vm3220, %v4238, %v4242
      %v4244 = vshrl.u32 %v3833, 16
      %v4246 = vor.u32 %v4244, %v4242
      %v4248 = vshll.u32 %v3834, 16
      %v4250 = vrot.slane %v4248, 1
      %v4251 = vsel %vm3220, %v4246, %v4250
      %v4252 = vshrl.u32 %v3834, 16
      %v4254 = vor.u32 %v4252, %v4250
      %v4256 = vshll.u32 %v3835, 16
      %v4258 = vrot.slane %v4256, 1
      %v4259 = vsel %vm3220, %v4254, %v4258
      %v4260 = vshrl.u32 %v3835, 16
      %v4262 = vor.u32 %v4260, %v4258
      %v4264 = vshll.u32 %v3836, 16
      %v4266 = vrot.slane %v4264, 1
      %v4267 = vsel %vm3220, %v4262, %v4266
      %v4268 = vshrl.u32 %v3836, 16
      %v4270 = vor.u32 %v4268, %v4266
      %v4272 = vshll.u32 %v3837, 16
      %v4274 = vrot.slane %v4272, 1
      %v4275 = vsel %vm3220, %v4270, %v4274
      %v4276 = vshrl.u32 %v3837, 16
      %v4278 = vor.u32 %v4276, %v4274
      %v4280 = vshll.u32 %v3838, 16
      %v4282 = vrot.slane %v4280, 1
      %v4283 = vsel %vm3220, %v4278, %v4282
      %v4284 = vshrl.u32 %v3838, 16
      %v4286 = vor.u32 %v4284, %v4282
      %v4288 = vshll.u32 %v3839, 16
      %v4290 = vrot.slane %v4288, 1
      %v4291 = vsel %vm3220, %v4286, %v4290
      %v4292 = vshrl.u32 %v3839, 16
      %v4294 = vor.u32 %v4292, %v4290
      %v4296 = vshll.u32 %v3840, 16
      %v4298 = vrot.slane %v4296, 1
      %v4299 = vsel %vm3220, %v4294, %v4298
      %v4300 = vshrl.u32 %v3840, 16
      %v4302 = vor.u32 %v4300, %v4298
      %v4304 = vshll.u32 %v3841, 16
      %v4306 = vrot.slane %v4304, 1
      %v4307 = vsel %vm3220, %v4302, %v4306
      %v4308 = vshrl.u32 %v3841, 16
      %v4310 = vor.u32 %v4308, %v4306
      %v4312 = vshll.u32 %v3842, 16
      %v4314 = vrot.slane %v4312, 1
      %v4315 = vsel %vm3220, %v4310, %v4314
      %v4316 = vshrl.u32 %v3842, 16
      %v4318 = vor.u32 %v4316, %v4314
      %v4320 = vshll.u32 %v3843, 16
      %v4322 = vrot.slane %v4320, 1
      %v4323 = vsel %vm3220, %v4318, %v4322
      %v4324 = vshrl.u32 %v3843, 16
      %v4326 = vor.u32 %v4324, %v4322
      %v4328 = vshll.u32 %v3844, 16
      %v4330 = vrot.slane %v4328, 1
      %v4331 = vsel %vm3220, %v4326, %v4330
      %v4332 = vshrl.u32 %v3844, 16
      %v4334 = vor.u32 %v4332, %v4330
      %v4336 = vshll.u32 %v3845, 16
      %v4338 = vrot.slane %v4336, 1
      %v4339 = vsel %vm3220, %v4334, %v4338
      %v4340 = vshrl.u32 %v3845, 16
      %v4342 = vor.u32 %v4340, %v4338
      %v4344 = vshll.u32 %v3846, 16
      %v4346 = vrot.slane %v4344, 1
      %v4347 = vsel %vm3220, %v4342, %v4346
      %v4348 = vshrl.u32 %v3846, 16
      %v4350 = vor.u32 %v4348, %v4346
      %v4352 = vshll.u32 %v3847, 16
      %v4354 = vrot.slane %v4352, 1
      %v4355 = vsel %vm3220, %v4350, %v4354
      %v4356 = vshrl.u32 %v3847, 16
      %v4358 = vor.u32 %v4356, %v4354
      %v4360 = vshll.u32 %v3848, 16
      %v4362 = vrot.slane %v4360, 1
      %v4363 = vsel %vm3220, %v4358, %v4362
      %v4364 = vshrl.u32 %v3848, 16
      %v4366 = vor.u32 %v4364, %v4362
      %v4368 = vshll.u32 %v3849, 16
      %v4370 = vrot.slane %v4368, 1
      %v4371 = vsel %vm3220, %v4366, %v4370
      %v4372 = vshrl.u32 %v3849, 16
      %v4374 = vor.u32 %v4372, %v4370
      %v4376 = vshll.u32 %v3850, 16
      %v4378 = vrot.slane %v4376, 1
      %v4379 = vsel %vm3220, %v4374, %v4378
      %v4380 = vshrl.u32 %v3850, 16
      %v4382 = vor.u32 %v4380, %v4378
      %v4384 = vshll.u32 %v3851, 16
      %v4386 = vrot.slane %v4384, 1
      %v4387 = vsel %vm3220, %v4382, %v4386
      %v4388 = vshrl.u32 %v3851, 16
      %v4390 = vor.u32 %v4388, %v4386
      %v4392 = vshll.u32 %v3852, 16
      %v4394 = vrot.slane %v4392, 1
      %v4395 = vsel %vm3220, %v4390, %v4394
      %v4433 = vunpack.c.l.b16 %v3854
      %v4434 = vunpack.c.l.b16 %v3855
      %v4435 = vunpack.c.l.b16 %v3856
      %v4436 = vunpack.c.l.b16 %v3857
      %v4437 = vunpack.c.l.b16 %v3858
      %v4438 = vunpack.c.l.b16 %v3859
      %v4439 = vunpack.c.l.b16 %v3860
      %v4440 = vunpack.c.l.b16 %v3861
      %v4441 = vunpack.c.l.b16 %v3862
      %v4442 = vunpack.c.l.b16 %v3863
      %v4443 = vunpack.c.l.b16 %v3864
      %v4444 = vunpack.c.l.b16 %v3865
      %v4445 = vunpack.c.l.b16 %v3866
      %v4446 = vunpack.c.l.b16 %v3867
      %v4447 = vunpack.c.l.b16 %v3868
      %v4448 = vunpack.c.l.b16 %v3869
      %v4449 = vpack.c.b16 %v4434, %v4433
      %v4450 = vpack.c.b16 %v4436, %v4435
      %v4451 = vpack.c.b16 %v4438, %v4437
      %v4452 = vpack.c.b16 %v4440, %v4439
      %v4453 = vpack.c.b16 %v4442, %v4441
      %v4454 = vpack.c.b16 %v4444, %v4443
      %v4455 = vpack.c.b16 %v4446, %v4445
      %v4456 = vpack.c.b16 %v4448, %v4447
      %4465 = vmatprep.subr.bf16.mxu0 0
      %4466 = vmatpush1.bf16.msra.mxu0 %v4449
      %4467 = vmatprep.subr.bf16.mxu0 0
      %4468 = vmatpush1.bf16.msra.mxu0 %v4450
      %4469 = vmatprep.subr.bf16.mxu0 0
      %4470 = vmatpush1.bf16.msra.mxu0 %v4451
      %4471 = vmatprep.subr.bf16.mxu0 0
      %4472 = vmatpush1.bf16.msra.mxu0 %v4452
      %4473 = vmatprep.subr.bf16.mxu0 0
      %4474 = vmatpush1.bf16.msra.mxu0 %v4453
      %4475 = vmatprep.subr.bf16.mxu0 0
      %4476 = vmatpush1.bf16.msra.mxu0 %v4454
      %4477 = vmatprep.subr.bf16.mxu0 0
      %4478 = vmatpush1.bf16.msra.mxu0 %v4455
      %4479 = vmatprep.subr.bf16.mxu0 0
      %4480 = vmatpush1.bf16.msra.mxu0 %v4456
      %4481 = vmatprep.subr.bf16.mxu0 0
      %4482 = vmatpush1.bf16.msra.mxu0 0
      %4483 = vmatprep.subr.bf16.mxu0 0
      %4484 = vmatpush1.bf16.msra.mxu0 0
      %4485 = vmatprep.subr.bf16.mxu0 0
      %4486 = vmatpush1.bf16.msra.mxu0 0
      %4487 = vmatprep.subr.bf16.mxu0 0
      %4488 = vmatpush1.bf16.msra.mxu0 0
      %4489 = vmatprep.subr.bf16.mxu0 0
      %4490 = vmatpush1.bf16.msra.mxu0 0
      %4491 = vmatprep.subr.bf16.mxu0 0
      %4492 = vmatpush1.bf16.msra.mxu0 0
      %4493 = vmatprep.subr.bf16.mxu0 0
      %4494 = vmatpush1.bf16.msra.mxu0 0
      %4495 = vmatprep.subr.bf16.mxu0 0
      %4496 = vmatpush1.bf16.msra.mxu0 0
      %4497 = vmatprep.mubr.bf16.mxu0 0
      %4498 = vmatmul.mubr.bf16.gmra.mrb[0].mxu0 %v4235
      %v4499 = vpop.f32.mrb[0].mxu0
      %v4500 = vadd.f32 %v4058, %v4499
      %v4501 = vpop.f32.mrb[0].mxu0
      %v4502 = vpop.f32.mrb[0].mxu0
      %v4503 = vadd.f32 %v4061, %v4502
      %v4504 = vpop.f32.mrb[0].mxu0
      %4505 = vmatprep.mubr.bf16.mxu0 0
      %4506 = vmatmul.mubr.bf16.gmra.mrb[0].mxu0 %v4243
      %v4507 = vpop.f32.mrb[0].mxu0
      %v4508 = vadd.f32 %v4066, %v4507
      %v4509 = vpop.f32.mrb[0].mxu0
      %v4510 = vpop.f32.mrb[0].mxu0
      %v4511 = vadd.f32 %v4069, %v4510
      %v4512 = vpop.f32.mrb[0].mxu0
      %4513 = vmatprep.mubr.bf16.mxu0 0
      %4514 = vmatmul.mubr.bf16.gmra.mrb[0].mxu0 %v4251
      %v4515 = vpop.f32.mrb[0].mxu0
      %v4516 = vadd.f32 %v4074, %v4515
      %v4517 = vpop.f32.mrb[0].mxu0
      %v4518 = vpop.f32.mrb[0].mxu0
      %v4519 = vadd.f32 %v4077, %v4518
      %v4520 = vpop.f32.mrb[0].mxu0
      %4521 = vmatprep.mubr.bf16.mxu0 0
      %4522 = vmatmul.mubr.bf16.gmra.mrb[0].mxu0 %v4259
      %v4523 = vpop.f32.mrb[0].mxu0
      %v4524 = vadd.f32 %v4082, %v4523
      %v4525 = vpop.f32.mrb[0].mxu0
      %v4526 = vpop.f32.mrb[0].mxu0
      %v4527 = vadd.f32 %v4085, %v4526
      %v4528 = vpop.f32.mrb[0].mxu0
      %4529 = vmatprep.mubr.bf16.mxu0 0
      %4530 = vmatmul.mubr.bf16.gmra.mrb[0].mxu0 %v4267
      %v4531 = vpop.f32.mrb[0].mxu0
      %v4532 = vadd.f32 %v4090, %v4531
      %v4533 = vpop.f32.mrb[0].mxu0
      %v4534 = vpop.f32.mrb[0].mxu0
      %v4535 = vadd.f32 %v4093, %v4534
      %v4536 = vpop.f32.mrb[0].mxu0
      %4537 = vmatprep.mubr.bf16.mxu0 0
      %4538 = vmatmul.mubr.bf16.gmra.mrb[0].mxu0 %v4275
      %v4539 = vpop.f32.mrb[0].mxu0
      %v4540 = vadd.f32 %v4098, %v4539
      %v4541 = vpop.f32.mrb[0].mxu0
      %v4542 = vpop.f32.mrb[0].mxu0
      %v4543 = vadd.f32 %v4101, %v4542
      %v4544 = vpop.f32.mrb[0].mxu0
      %4545 = vmatprep.mubr.bf16.mxu0 0
      %4546 = vmatmul.mubr.bf16.gmra.mrb[0].mxu0 %v4283
      %v4547 = vpop.f32.mrb[0].mxu0
      %v4548 = vadd.f32 %v4106, %v4547
      %v4549 = vpop.f32.mrb[0].mxu0
      %v4550 = vpop.f32.mrb[0].mxu0
      %v4551 = vadd.f32 %v4109, %v4550
      %v4552 = vpop.f32.mrb[0].mxu0
      %4553 = vmatprep.mubr.bf16.mxu0 0
      %4554 = vmatmul.mubr.bf16.gmra.mrb[0].mxu0 %v4291
      %v4555 = vpop.f32.mrb[0].mxu0
      %v4556 = vadd.f32 %v4114, %v4555
      %v4557 = vpop.f32.mrb[0].mxu0
      %v4558 = vpop.f32.mrb[0].mxu0
      %v4559 = vadd.f32 %v4117, %v4558
      %v4560 = vpop.f32.mrb[0].mxu0
      %4561 = vmatprep.mubr.bf16.mxu0 0
      %4562 = vmatmul.mubr.bf16.gmra.mrb[0].mxu0 %v4299
      %v4563 = vpop.f32.mrb[0].mxu0
      %v4564 = vadd.f32 %v4122, %v4563
      %v4565 = vpop.f32.mrb[0].mxu0
      %v4566 = vpop.f32.mrb[0].mxu0
      %v4567 = vadd.f32 %v4125, %v4566
      %v4568 = vpop.f32.mrb[0].mxu0
      %4569 = vmatprep.mubr.bf16.mxu0 0
      %4570 = vmatmul.mubr.bf16.gmra.mrb[0].mxu0 %v4307
      %v4571 = vpop.f32.mrb[0].mxu0
      %v4572 = vadd.f32 %v4130, %v4571
      %v4573 = vpop.f32.mrb[0].mxu0
      %v4574 = vpop.f32.mrb[0].mxu0
      %v4575 = vadd.f32 %v4133, %v4574
      %v4576 = vpop.f32.mrb[0].mxu0
      %4577 = vmatprep.mubr.bf16.mxu0 0
      %4578 = vmatmul.mubr.bf16.gmra.mrb[0].mxu0 %v4315
      %v4579 = vpop.f32.mrb[0].mxu0
      %v4580 = vadd.f32 %v4138, %v4579
      %v4581 = vpop.f32.mrb[0].mxu0
      %v4582 = vpop.f32.mrb[0].mxu0
      %v4583 = vadd.f32 %v4141, %v4582
      %v4584 = vpop.f32.mrb[0].mxu0
      %4585 = vmatprep.mubr.bf16.mxu0 0
      %4586 = vmatmul.mubr.bf16.gmra.mrb[0].mxu0 %v4323
      %v4587 = vpop.f32.mrb[0].mxu0
      %v4588 = vadd.f32 %v4146, %v4587
      %v4589 = vpop.f32.mrb[0].mxu0
      %v4590 = vpop.f32.mrb[0].mxu0
      %v4591 = vadd.f32 %v4149, %v4590
      %v4592 = vpop.f32.mrb[0].mxu0
      %4593 = vmatprep.mubr.bf16.mxu0 0
      %4594 = vmatmul.mubr.bf16.gmra.mrb[0].mxu0 %v4331
      %v4595 = vpop.f32.mrb[0].mxu0
      %v4596 = vadd.f32 %v4154, %v4595
      %v4597 = vpop.f32.mrb[0].mxu0
      %v4598 = vpop.f32.mrb[0].mxu0
      %v4599 = vadd.f32 %v4157, %v4598
      %v4600 = vpop.f32.mrb[0].mxu0
      %4601 = vmatprep.mubr.bf16.mxu0 0
      %4602 = vmatmul.mubr.bf16.gmra.mrb[0].mxu0 %v4339
      %v4603 = vpop.f32.mrb[0].mxu0
      %v4604 = vadd.f32 %v4162, %v4603
      %v4605 = vpop.f32.mrb[0].mxu0
      %v4606 = vpop.f32.mrb[0].mxu0
      %v4607 = vadd.f32 %v4165, %v4606
      %v4608 = vpop.f32.mrb[0].mxu0
      %4609 = vmatprep.mubr.bf16.mxu0 0
      %4610 = vmatmul.mubr.bf16.gmra.mrb[0].mxu0 %v4347
      %v4611 = vpop.f32.mrb[0].mxu0
      %v4612 = vadd.f32 %v4170, %v4611
      %v4613 = vpop.f32.mrb[0].mxu0
      %v4614 = vpop.f32.mrb[0].mxu0
      %v4615 = vadd.f32 %v4173, %v4614
      %v4616 = vpop.f32.mrb[0].mxu0
      %4617 = vmatprep.mubr.bf16.mxu0 0
      %4618 = vmatmul.mubr.bf16.gmra.mrb[0].mxu0 %v4355
      %v4619 = vpop.f32.mrb[0].mxu0
      %v4620 = vadd.f32 %v4178, %v4619
      %v4621 = vpop.f32.mrb[0].mxu0
      %v4622 = vpop.f32.mrb[0].mxu0
      %v4623 = vadd.f32 %v4181, %v4622
      %v4624 = vpop.f32.mrb[0].mxu0
      %4625 = vmatprep.mubr.bf16.mxu0 0
      %4626 = vmatmul.mubr.bf16.gmra.mrb[0].mxu0 %v4363
      %v4627 = vpop.f32.mrb[0].mxu0
      %v4628 = vadd.f32 %v4186, %v4627
      %v4629 = vpop.f32.mrb[0].mxu0
      %v4630 = vpop.f32.mrb[0].mxu0
      %v4631 = vadd.f32 %v4189, %v4630
      %v4632 = vpop.f32.mrb[0].mxu0
      %4633 = vmatprep.mubr.bf16.mxu0 0
      %4634 = vmatmul.mubr.bf16.gmra.mrb[0].mxu0 %v4371
      %v4635 = vpop.f32.mrb[0].mxu0
      %v4636 = vadd.f32 %v4194, %v4635
      %v4637 = vpop.f32.mrb[0].mxu0
      %v4638 = vpop.f32.mrb[0].mxu0
      %v4639 = vadd.f32 %v4197, %v4638
      %v4640 = vpop.f32.mrb[0].mxu0
      %4641 = vmatprep.mubr.bf16.mxu0 0
      %4642 = vmatmul.mubr.bf16.gmra.mrb[0].mxu0 %v4379
      %v4643 = vpop.f32.mrb[0].mxu0
      %v4644 = vadd.f32 %v4202, %v4643
      %v4645 = vpop.f32.mrb[0].mxu0
      %v4646 = vpop.f32.mrb[0].mxu0
      %v4647 = vadd.f32 %v4205, %v4646
      %v4648 = vpop.f32.mrb[0].mxu0
      %4649 = vmatprep.mubr.bf16.mxu0 0
      %4650 = vmatmul.mubr.bf16.gmra.mrb[0].mxu0 %v4387
      %v4651 = vpop.f32.mrb[0].mxu0
      %v4652 = vadd.f32 %v4210, %v4651
      %v4653 = vpop.f32.mrb[0].mxu0
      %v4654 = vpop.f32.mrb[0].mxu0
      %v4655 = vadd.f32 %v4213, %v4654
      %v4656 = vpop.f32.mrb[0].mxu0
      %4657 = vmatprep.mubr.bf16.mxu0 0
      %4658 = vmatmul.mubr.bf16.gmra.mrb[0].mxu0 %v4395
      %v4659 = vpop.f32.mrb[0].mxu0
      %v4660 = vadd.f32 %v4218, %v4659
      %v4661 = vpop.f32.mrb[0].mxu0
      %v4662 = vpop.f32.mrb[0].mxu0
      %v4663 = vadd.f32 %v4221, %v4662
      %v4664 = vpop.f32.mrb[0].mxu0
      %4665 = vdwg.mxu0
      %v4666 = vld [vmem:[#allocation2 + $0xc0] sm:$0x3]
      %s4667 = scalar_lea.vmem %s4, 512
      %v4668 = vld [vmem:[%s4667] sm:$0xf]
      %v4669 = vld [vmem:[%s4667 + $0x4] sm:$0xf]
      %v4670 = vld [vmem:[%s4667 + $0x8] sm:$0xf]
      %v4671 = vld [vmem:[%s4667 + $0xc] sm:$0xf]
      %v4672 = vld [vmem:[%s4667 + $0x10] sm:$0xf]
      %v4673 = vld [vmem:[%s4667 + $0x14] sm:$0xf]
      %v4674 = vld [vmem:[%s4667 + $0x18] sm:$0xf]
      %v4675 = vld [vmem:[%s4667 + $0x1c] sm:$0xf]
      %v4676 = vld [vmem:[%s4667 + $0x20] sm:$0xf]
      %v4677 = vld [vmem:[%s4667 + $0x24] sm:$0xf]
      %v4678 = vld [vmem:[%s4667 + $0x28] sm:$0xf]
      %v4679 = vld [vmem:[%s4667 + $0x2c] sm:$0xf]
      %v4680 = vld [vmem:[%s4667 + $0x30] sm:$0xf]
      %v4681 = vld [vmem:[%s4667 + $0x34] sm:$0xf]
      %v4682 = vld [vmem:[%s4667 + $0x38] sm:$0xf]
      %v4683 = vld [vmem:[%s4667 + $0x3c] sm:$0xf]
      %vm4684 = vsmask.f32 6400
      %v4686 = vshrl.u32 %v3870, 16
      %v4688 = vrot.slane %v4686, 1
      %v4689 = vshll.u32 %v3870, 16
      %v4691 = vrot.slane %v4689, 2
      %v4692 = vor.u32 %v4688, %v4691
      %v4693 = vrot.slane %v4236, 1
      %v4694 = vrot.slane %v4232, 2
      %v4695 = vor.u32 %v4693, %v4694
      %v4696 = vsel %vm4684, %v4692, %v4695
      %v4697 = vrot.slane %v4244, 1
      %v4698 = vrot.slane %v4240, 2
      %v4699 = vor.u32 %v4697, %v4698
      %v4700 = vsel %vm4684, %v4695, %v4699
      %v4701 = vrot.slane %v4252, 1
      %v4702 = vrot.slane %v4248, 2
      %v4703 = vor.u32 %v4701, %v4702
      %v4704 = vsel %vm4684, %v4699, %v4703
      %v4705 = vrot.slane %v4260, 1
      %v4706 = vrot.slane %v4256, 2
      %v4707 = vor.u32 %v4705, %v4706
      %v4708 = vsel %vm4684, %v4703, %v4707
      %v4709 = vrot.slane %v4268, 1
      %v4710 = vrot.slane %v4264, 2
      %v4711 = vor.u32 %v4709, %v4710
      %v4712 = vsel %vm4684, %v4707, %v4711
      %v4713 = vrot.slane %v4276, 1
      %v4714 = vrot.slane %v4272, 2
      %v4715 = vor.u32 %v4713, %v4714
      %v4716 = vsel %vm4684, %v4711, %v4715
      %v4717 = vrot.slane %v4284, 1
      %v4718 = vrot.slane %v4280, 2
      %v4719 = vor.u32 %v4717, %v4718
      %v4720 = vsel %vm4684, %v4715, %v4719
      %v4721 = vrot.slane %v4292, 1
      %v4722 = vrot.slane %v4288, 2
      %v4723 = vor.u32 %v4721, %v4722
      %v4724 = vsel %vm4684, %v4719, %v4723
      %v4725 = vrot.slane %v4300, 1
      %v4726 = vrot.slane %v4296, 2
      %v4727 = vor.u32 %v4725, %v4726
      %v4728 = vsel %vm4684, %v4723, %v4727
      %v4729 = vrot.slane %v4308, 1
      %v4730 = vrot.slane %v4304, 2
      %v4731 = vor.u32 %v4729, %v4730
      %v4732 = vsel %vm4684, %v4727, %v4731
      %v4733 = vrot.slane %v4316, 1
      %v4734 = vrot.slane %v4312, 2
      %v4735 = vor.u32 %v4733, %v4734
      %v4736 = vsel %vm4684, %v4731, %v4735
      %v4737 = vrot.slane %v4324, 1
      %v4738 = vrot.slane %v4320, 2
      %v4739 = vor.u32 %v4737, %v4738
      %v4740 = vsel %vm4684, %v4735, %v4739
      %v4741 = vrot.slane %v4332, 1
      %v4742 = vrot.slane %v4328, 2
      %v4743 = vor.u32 %v4741, %v4742
      %v4744 = vsel %vm4684, %v4739, %v4743
      %v4745 = vrot.slane %v4340, 1
      %v4746 = vrot.slane %v4336, 2
      %v4747 = vor.u32 %v4745, %v4746
      %v4748 = vsel %vm4684, %v4743, %v4747
      %v4749 = vrot.slane %v4348, 1
      %v4750 = vrot.slane %v4344, 2
      %v4751 = vor.u32 %v4749, %v4750
      %v4752 = vsel %vm4684, %v4747, %v4751
      %v4753 = vrot.slane %v4356, 1
      %v4754 = vrot.slane %v4352, 2
      %v4755 = vor.u32 %v4753, %v4754
      %v4756 = vsel %vm4684, %v4751, %v4755
      %v4757 = vrot.slane %v4364, 1
      %v4758 = vrot.slane %v4360, 2
      %v4759 = vor.u32 %v4757, %v4758
      %v4760 = vsel %vm4684, %v4755, %v4759
      %v4761 = vrot.slane %v4372, 1
      %v4762 = vrot.slane %v4368, 2
      %v4763 = vor.u32 %v4761, %v4762
      %v4764 = vsel %vm4684, %v4759, %v4763
      %v4765 = vrot.slane %v4380, 1
      %v4766 = vrot.slane %v4376, 2
      %v4767 = vor.u32 %v4765, %v4766
      %v4768 = vsel %vm4684, %v4763, %v4767
      %v4769 = vrot.slane %v4388, 1
      %v4770 = vrot.slane %v4384, 2
      %v4771 = vor.u32 %v4769, %v4770
      %v4772 = vsel %vm4684, %v4767, %v4771
      %v4774 = vshrl.u32 %v4666, 16
      %v4776 = vrot.slane %v4774, 1
      %v4777 = vshll.u32 %v4666, 16
      %v4779 = vrot.slane %v4777, 2
      %v4780 = vor.u32 %v4776, %v4779
      %v4781 = vsel %vm4684, %v4771, %v4780
      %v4819 = vunpack.c.l.b16 %v4668
      %v4820 = vunpack.c.l.b16 %v4669
      %v4821 = vunpack.c.l.b16 %v4670
      %v4822 = vunpack.c.l.b16 %v4671
      %v4823 = vunpack.c.l.b16 %v4672
      %v4824 = vunpack.c.l.b16 %v4673
      %v4825 = vunpack.c.l.b16 %v4674
      %v4826 = vunpack.c.l.b16 %v4675
      %v4827 = vunpack.c.l.b16 %v4676
      %v4828 = vunpack.c.l.b16 %v4677
      %v4829 = vunpack.c.l.b16 %v4678
      %v4830 = vunpack.c.l.b16 %v4679
      %v4831 = vunpack.c.l.b16 %v4680
      %v4832 = vunpack.c.l.b16 %v4681
      %v4833 = vunpack.c.l.b16 %v4682
      %v4834 = vunpack.c.l.b16 %v4683
      %v4835 = vpack.c.b16 %v4820, %v4819
      %v4836 = vpack.c.b16 %v4822, %v4821
      %v4837 = vpack.c.b16 %v4824, %v4823
      %v4838 = vpack.c.b16 %v4826, %v4825
      %v4839 = vpack.c.b16 %v4828, %v4827
      %v4840 = vpack.c.b16 %v4830, %v4829
      %v4841 = vpack.c.b16 %v4832, %v4831
      %v4842 = vpack.c.b16 %v4834, %v4833
      %4851 = vmatprep.subr.bf16.mxu0 0
      %4852 = vmatpush1.bf16.msra.mxu0 %v4835
      %4853 = vmatprep.subr.bf16.mxu0 0
      %4854 = vmatpush1.bf16.msra.mxu0 %v4836
      %4855 = vmatprep.subr.bf16.mxu0 0
      %4856 = vmatpush1.bf16.msra.mxu0 %v4837
      %4857 = vmatprep.subr.bf16.mxu0 0
      %4858 = vmatpush1.bf16.msra.mxu0 %v4838
      %4859 = vmatprep.subr.bf16.mxu0 0
      %4860 = vmatpush1.bf16.msra.mxu0 %v4839
      %4861 = vmatprep.subr.bf16.mxu0 0
      %4862 = vmatpush1.bf16.msra.mxu0 %v4840
      %4863 = vmatprep.subr.bf16.mxu0 0
      %4864 = vmatpush1.bf16.msra.mxu0 %v4841
      %4865 = vmatprep.subr.bf16.mxu0 0
      %4866 = vmatpush1.bf16.msra.mxu0 %v4842
      %4867 = vmatprep.subr.bf16.mxu0 0
      %4868 = vmatpush1.bf16.msra.mxu0 0
      %4869 = vmatprep.subr.bf16.mxu0 0
      %4870 = vmatpush1.bf16.msra.mxu0 0
      %4871 = vmatprep.subr.bf16.mxu0 0
      %4872 = vmatpush1.bf16.msra.mxu0 0
      %4873 = vmatprep.subr.bf16.mxu0 0
      %4874 = vmatpush1.bf16.msra.mxu0 0
      %4875 = vmatprep.subr.bf16.mxu0 0
      %4876 = vmatpush1.bf16.msra.mxu0 0
      %4877 = vmatprep.subr.bf16.mxu0 0
      %4878 = vmatpush1.bf16.msra.mxu0 0
      %4879 = vmatprep.subr.bf16.mxu0 0
      %4880 = vmatpush1.bf16.msra.mxu0 0
      %4881 = vmatprep.subr.bf16.mxu0 0
      %4882 = vmatpush1.bf16.msra.mxu0 0
      %4883 = vmatprep.mubr.bf16.mxu0 0
      %4884 = vmatmul.mubr.bf16.gmra.mrb[0].mxu0 %v4696
      %v4885 = vpop.f32.mrb[0].mxu0
      %v4886 = vadd.f32 0.0, %v4885
      %v4887 = vpop.f32.mrb[0].mxu0
      %v4888 = vpop.f32.mrb[0].mxu0
      %v4889 = vadd.f32 0.0, %v4888
      %v4890 = vpop.f32.mrb[0].mxu0
      %4891 = vmatprep.mubr.bf16.mxu0 0
      %4892 = vmatmul.mubr.bf16.gmra.mrb[0].mxu0 %v4700
      %v4893 = vpop.f32.mrb[0].mxu0
      %v4894 = vadd.f32 0.0, %v4893
      %v4895 = vpop.f32.mrb[0].mxu0
      %v4896 = vpop.f32.mrb[0].mxu0
      %v4897 = vadd.f32 0.0, %v4896
      %v4898 = vpop.f32.mrb[0].mxu0
      %4899 = vmatprep.mubr.bf16.mxu0 0
      %4900 = vmatmul.mubr.bf16.gmra.mrb[0].mxu0 %v4704
      %v4901 = vpop.f32.mrb[0].mxu0
      %v4902 = vadd.f32 0.0, %v4901
      %v4903 = vpop.f32.mrb[0].mxu0
      %v4904 = vpop.f32.mrb[0].mxu0
      %v4905 = vadd.f32 0.0, %v4904
      %v4906 = vpop.f32.mrb[0].mxu0
      %4907 = vmatprep.mubr.bf16.mxu0 0
      %4908 = vmatmul.mubr.bf16.gmra.mrb[0].mxu0 %v4708
      %v4909 = vpop.f32.mrb[0].mxu0
      %v4910 = vadd.f32 0.0, %v4909
      %v4911 = vpop.f32.mrb[0].mxu0
      %v4912 = vpop.f32.mrb[0].mxu0
      %v4913 = vadd.f32 0.0, %v4912
      %v4914 = vpop.f32.mrb[0].mxu0
      %4915 = vmatprep.mubr.bf16.mxu0 0
      %4916 = vmatmul.mubr.bf16.gmra.mrb[0].mxu0 %v4712
      %v4917 = vpop.f32.mrb[0].mxu0
      %v4918 = vadd.f32 0.0, %v4917
      %v4919 = vpop.f32.mrb[0].mxu0
      %v4920 = vpop.f32.mrb[0].mxu0
      %v4921 = vadd.f32 0.0, %v4920
      %v4922 = vpop.f32.mrb[0].mxu0
      %4923 = vmatprep.mubr.bf16.mxu0 0
      %4924 = vmatmul.mubr.bf16.gmra.mrb[0].mxu0 %v4716
      %v4925 = vpop.f32.mrb[0].mxu0
      %v4926 = vadd.f32 0.0, %v4925
      %v4927 = vpop.f32.mrb[0].mxu0
      %v4928 = vpop.f32.mrb[0].mxu0
      %v4929 = vadd.f32 0.0, %v4928
      %v4930 = vpop.f32.mrb[0].mxu0
      %4931 = vmatprep.mubr.bf16.mxu0 0
      %4932 = vmatmul.mubr.bf16.gmra.mrb[0].mxu0 %v4720
      %v4933 = vpop.f32.mrb[0].mxu0
      %v4934 = vadd.f32 0.0, %v4933
      %v4935 = vpop.f32.mrb[0].mxu0
      %v4936 = vpop.f32.mrb[0].mxu0
      %v4937 = vadd.f32 0.0, %v4936
      %v4938 = vpop.f32.mrb[0].mxu0
      %4939 = vmatprep.mubr.bf16.mxu0 0
      %4940 = vmatmul.mubr.bf16.gmra.mrb[0].mxu0 %v4724
      %v4941 = vpop.f32.mrb[0].mxu0
      %v4942 = vadd.f32 0.0, %v4941
      %v4943 = vpop.f32.mrb[0].mxu0
      %v4944 = vpop.f32.mrb[0].mxu0
      %v4945 = vadd.f32 0.0, %v4944
      %v4946 = vpop.f32.mrb[0].mxu0
      %4947 = vmatprep.mubr.bf16.mxu0 0
      %4948 = vmatmul.mubr.bf16.gmra.mrb[0].mxu0 %v4728
      %v4949 = vpop.f32.mrb[0].mxu0
      %v4950 = vadd.f32 0.0, %v4949
      %v4951 = vpop.f32.mrb[0].mxu0
      %v4952 = vpop.f32.mrb[0].mxu0
      %v4953 = vadd.f32 0.0, %v4952
      %v4954 = vpop.f32.mrb[0].mxu0
      %4955 = vmatprep.mubr.bf16.mxu0 0
      %4956 = vmatmul.mubr.bf16.gmra.mrb[0].mxu0 %v4732
      %v4957 = vpop.f32.mrb[0].mxu0
      %v4958 = vadd.f32 0.0, %v4957
      %v4959 = vpop.f32.mrb[0].mxu0
      %v4960 = vpop.f32.mrb[0].mxu0
      %v4961 = vadd.f32 0.0, %v4960
      %v4962 = vpop.f32.mrb[0].mxu0
      %4963 = vmatprep.mubr.bf16.mxu0 0
      %4964 = vmatmul.mubr.bf16.gmra.mrb[0].mxu0 %v4736
      %v4965 = vpop.f32.mrb[0].mxu0
      %v4966 = vadd.f32 0.0, %v4965
      %v4967 = vpop.f32.mrb[0].mxu0
      %v4968 = vpop.f32.mrb[0].mxu0
      %v4969 = vadd.f32 0.0, %v4968
      %v4970 = vpop.f32.mrb[0].mxu0
      %4971 = vmatprep.mubr.bf16.mxu0 0
      %4972 = vmatmul.mubr.bf16.gmra.mrb[0].mxu0 %v4740
      %v4973 = vpop.f32.mrb[0].mxu0
      %v4974 = vadd.f32 0.0, %v4973
      %v4975 = vpop.f32.mrb[0].mxu0
      %v4976 = vpop.f32.mrb[0].mxu0
      %v4977 = vadd.f32 0.0, %v4976
      %v4978 = vpop.f32.mrb[0].mxu0
      %4979 = vmatprep.mubr.bf16.mxu0 0
      %4980 = vmatmul.mubr.bf16.gmra.mrb[0].mxu0 %v4744
      %v4981 = vpop.f32.mrb[0].mxu0
      %v4982 = vadd.f32 0.0, %v4981
      %v4983 = vpop.f32.mrb[0].mxu0
      %v4984 = vpop.f32.mrb[0].mxu0
      %v4985 = vadd.f32 0.0, %v4984
      %v4986 = vpop.f32.mrb[0].mxu0
      %4987 = vmatprep.mubr.bf16.mxu0 0
      %4988 = vmatmul.mubr.bf16.gmra.mrb[0].mxu0 %v4748
      %v4989 = vpop.f32.mrb[0].mxu0
      %v4990 = vadd.f32 0.0, %v4989
      %v4991 = vpop.f32.mrb[0].mxu0
      %v4992 = vpop.f32.mrb[0].mxu0
      %v4993 = vadd.f32 0.0, %v4992
      %v4994 = vpop.f32.mrb[0].mxu0
      %4995 = vmatprep.mubr.bf16.mxu0 0
      %4996 = vmatmul.mubr.bf16.gmra.mrb[0].mxu0 %v4752
      %v4997 = vpop.f32.mrb[0].mxu0
      %v4998 = vadd.f32 0.0, %v4997
      %v4999 = vpop.f32.mrb[0].mxu0
      %v5000 = vpop.f32.mrb[0].mxu0
      %v5001 = vadd.f32 0.0, %v5000
      %v5002 = vpop.f32.mrb[0].mxu0
      %5003 = vmatprep.mubr.bf16.mxu0 0
      %5004 = vmatmul.mubr.bf16.gmra.mrb[0].mxu0 %v4756
      %v5005 = vpop.f32.mrb[0].mxu0
      %v5006 = vadd.f32 0.0, %v5005
      %v5007 = vpop.f32.mrb[0].mxu0
      %v5008 = vpop.f32.mrb[0].mxu0
      %v5009 = vadd.f32 0.0, %v5008
      %v5010 = vpop.f32.mrb[0].mxu0
      %5011 = vmatprep.mubr.bf16.mxu0 0
      %5012 = vmatmul.mubr.bf16.gmra.mrb[0].mxu0 %v4760
      %v5013 = vpop.f32.mrb[0].mxu0
      %v5014 = vadd.f32 0.0, %v5013
      %v5015 = vpop.f32.mrb[0].mxu0
      %v5016 = vpop.f32.mrb[0].mxu0
      %v5017 = vadd.f32 0.0, %v5016
      %v5018 = vpop.f32.mrb[0].mxu0
      %5019 = vmatprep.mubr.bf16.mxu0 0
      %5020 = vmatmul.mubr.bf16.gmra.mrb[0].mxu0 %v4764
      %v5021 = vpop.f32.mrb[0].mxu0
      %v5022 = vadd.f32 0.0, %v5021
      %v5023 = vpop.f32.mrb[0].mxu0
      %v5024 = vpop.f32.mrb[0].mxu0
      %v5025 = vadd.f32 0.0, %v5024
      %v5026 = vpop.f32.mrb[0].mxu0
      %5027 = vmatprep.mubr.bf16.mxu0 0
      %5028 = vmatmul.mubr.bf16.gmra.mrb[0].mxu0 %v4768
      %v5029 = vpop.f32.mrb[0].mxu0
      %v5030 = vadd.f32 0.0, %v5029
      %v5031 = vpop.f32.mrb[0].mxu0
      %v5032 = vpop.f32.mrb[0].mxu0
      %v5033 = vadd.f32 0.0, %v5032
      %v5034 = vpop.f32.mrb[0].mxu0
      %5035 = vmatprep.mubr.bf16.mxu0 0
      %5036 = vmatmul.mubr.bf16.gmra.mrb[0].mxu0 %v4772
      %v5037 = vpop.f32.mrb[0].mxu0
      %v5038 = vadd.f32 0.0, %v5037
      %v5039 = vpop.f32.mrb[0].mxu0
      %v5040 = vpop.f32.mrb[0].mxu0
      %v5041 = vadd.f32 0.0, %v5040
      %v5042 = vpop.f32.mrb[0].mxu0
      %5043 = vmatprep.mubr.bf16.mxu0 0
      %5044 = vmatmul.mubr.bf16.gmra.mrb[0].mxu0 %v4781
      %v5045 = vpop.f32.mrb[0].mxu0
      %v5046 = vadd.f32 0.0, %v5045
      %v5047 = vpop.f32.mrb[0].mxu0
      %v5048 = vpop.f32.mrb[0].mxu0
      %v5049 = vadd.f32 0.0, %v5048
      %v5050 = vpop.f32.mrb[0].mxu0
      %5051 = vdwg.mxu0
      %v5052 = vadd.f32 %v4500, %v4886
      %v5053 = vadd.f32 %v4503, %v4889
      %v5054 = vadd.f32 %v4508, %v4894
      %v5055 = vadd.f32 %v4511, %v4897
      %v5056 = vadd.f32 %v4516, %v4902
      %v5057 = vadd.f32 %v4519, %v4905
      %v5058 = vadd.f32 %v4524, %v4910
      %v5059 = vadd.f32 %v4527, %v4913
      %v5060 = vadd.f32 %v4532, %v4918
      %v5061 = vadd.f32 %v4535, %v4921
      %v5062 = vadd.f32 %v4540, %v4926
      %v5063 = vadd.f32 %v4543, %v4929
      %v5064 = vadd.f32 %v4548, %v4934
      %v5065 = vadd.f32 %v4551, %v4937
      %v5066 = vadd.f32 %v4556, %v4942
      %v5067 = vadd.f32 %v4559, %v4945
      %v5068 = vadd.f32 %v4564, %v4950
      %v5069 = vadd.f32 %v4567, %v4953
      %v5070 = vadd.f32 %v4572, %v4958
      %v5071 = vadd.f32 %v4575, %v4961
      %v5072 = vadd.f32 %v4580, %v4966
      %v5073 = vadd.f32 %v4583, %v4969
      %v5074 = vadd.f32 %v4588, %v4974
      %v5075 = vadd.f32 %v4591, %v4977
      %v5076 = vadd.f32 %v4596, %v4982
      %v5077 = vadd.f32 %v4599, %v4985
      %v5078 = vadd.f32 %v4604, %v4990
      %v5079 = vadd.f32 %v4607, %v4993
      %v5080 = vadd.f32 %v4612, %v4998
      %v5081 = vadd.f32 %v4615, %v5001
      %v5082 = vadd.f32 %v4620, %v5006
      %v5083 = vadd.f32 %v4623, %v5009
      %v5084 = vadd.f32 %v4628, %v5014
      %v5085 = vadd.f32 %v4631, %v5017
      %v5086 = vadd.f32 %v4636, %v5022
      %v5087 = vadd.f32 %v4639, %v5025
      %v5088 = vadd.f32 %v4644, %v5030
      %v5089 = vadd.f32 %v4647, %v5033
      %v5090 = vadd.f32 %v4652, %v5038
      %v5091 = vadd.f32 %v4655, %v5041
      %v5092 = vadd.f32 %v4660, %v5046
      %v5093 = vadd.f32 %v4663, %v5049
      %v5094 = vld [vmem:[#allocation3] sm:$0xff]
      %v5095 = vld [vmem:[#allocation3 + $0x8] sm:$0xff]
      %v5096 = vld [vmem:[#allocation3 + $0x10] sm:$0xff]
      %v5097 = vld [vmem:[#allocation3 + $0x18] sm:$0xff]
      %v5098 = vld [vmem:[#allocation3 + $0x20] sm:$0xff]
      %v5099 = vld [vmem:[#allocation3 + $0x28] sm:$0xff]
      %v5100 = vld [vmem:[#allocation3 + $0x30] sm:$0xff]
      %v5101 = vld [vmem:[#allocation3 + $0x38] sm:$0xff]
      %v5102 = vld [vmem:[#allocation3 + $0x40] sm:$0xff]
      %v5103 = vld [vmem:[#allocation3 + $0x48] sm:$0xff]
      %v5104 = vld [vmem:[#allocation3 + $0x50] sm:$0xff]
      %v5105 = vld [vmem:[#allocation3 + $0x58] sm:$0xff]
      %v5106 = vld [vmem:[#allocation3 + $0x60] sm:$0xff]
      %v5107 = vld [vmem:[#allocation3 + $0x68] sm:$0xff]
      %v5108 = vld [vmem:[#allocation3 + $0x70] sm:$0xff]
      %v5109 = vld [vmem:[#allocation3 + $0x78] sm:$0xff]
      %v5110 = vld [vmem:[#allocation3 + $0x80] sm:$0xff]
      %v5111 = vld [vmem:[#allocation3 + $0x88] sm:$0xff]
      %v5112 = vld [vmem:[#allocation3 + $0x90] sm:$0xff]
      %v5113 = vld [vmem:[#allocation3 + $0x98] sm:$0xff]
      %v5114 = vld [vmem:[#allocation3 + $0xa0] sm:$0xff]
      %v5115 = vld [vmem:[#allocation3 + $0xa8] sm:$0xff]
      %v5116 = vld [vmem:[#allocation3 + $0xb0] sm:$0xff]
      %v5117 = vld [vmem:[#allocation3 + $0xb8] sm:$0xff]
      %v5118 = vld [vmem:[#allocation3 + $0xc0] sm:$0xff]
      %v5119 = vld [vmem:[#allocation3 + $0xc8] sm:$0xff]
      %v5120 = vld [vmem:[#allocation3 + $0xd0] sm:$0xff]
      %v5121 = vld [vmem:[#allocation3 + $0xd8] sm:$0xff]
      %v5122 = vld [vmem:[#allocation3 + $0xe0] sm:$0xff]
      %v5123 = vld [vmem:[#allocation3 + $0xe8] sm:$0xff]
      %v5124 = vld [vmem:[#allocation3 + $0xf0] sm:$0xff]
      %v5125 = vld [vmem:[#allocation3 + $0xf8] sm:$0xff]
      %v5126 = vld [vmem:[#allocation3 + $0x100] sm:$0xff]
      %v5127 = vld [vmem:[#allocation3 + $0x108] sm:$0xff]
      %v5128 = vld [vmem:[#allocation3 + $0x110] sm:$0xff]
      %v5129 = vld [vmem:[#allocation3 + $0x118] sm:$0xff]
      %v5130 = vld [vmem:[#allocation3 + $0x120] sm:$0xff]
      %v5131 = vld [vmem:[#allocation3 + $0x128] sm:$0xff]
      %v5132 = vld [vmem:[#allocation3 + $0x130] sm:$0xff]
      %v5133 = vld [vmem:[#allocation3 + $0x138] sm:$0xff]
      %v5134 = vld [vmem:[#allocation3 + $0x140] sm:$0xff]
      %v5135 = vld [vmem:[#allocation3 + $0x148] sm:$0xff]
      %v5136 = vadd.f32 %v5094, %v5052
      %v5137 = vadd.f32 %v5095, %v5053
      %v5138 = vadd.f32 %v5096, %v5054
      %v5139 = vadd.f32 %v5097, %v5055
      %v5140 = vadd.f32 %v5098, %v5056
      %v5141 = vadd.f32 %v5099, %v5057
      %v5142 = vadd.f32 %v5100, %v5058
      %v5143 = vadd.f32 %v5101, %v5059
      %v5144 = vadd.f32 %v5102, %v5060
      %v5145 = vadd.f32 %v5103, %v5061
      %v5146 = vadd.f32 %v5104, %v5062
      %v5147 = vadd.f32 %v5105, %v5063
      %v5148 = vadd.f32 %v5106, %v5064
      %v5149 = vadd.f32 %v5107, %v5065
      %v5150 = vadd.f32 %v5108, %v5066
      %v5151 = vadd.f32 %v5109, %v5067
      %v5152 = vadd.f32 %v5110, %v5068
      %v5153 = vadd.f32 %v5111, %v5069
      %v5154 = vadd.f32 %v5112, %v5070
      %v5155 = vadd.f32 %v5113, %v5071
      %v5156 = vadd.f32 %v5114, %v5072
      %v5157 = vadd.f32 %v5115, %v5073
      %v5158 = vadd.f32 %v5116, %v5074
      %v5159 = vadd.f32 %v5117, %v5075
      %v5160 = vadd.f32 %v5118, %v5076
      %v5161 = vadd.f32 %v5119, %v5077
      %v5162 = vadd.f32 %v5120, %v5078
      %v5163 = vadd.f32 %v5121, %v5079
      %v5164 = vadd.f32 %v5122, %v5080
      %v5165 = vadd.f32 %v5123, %v5081
      %v5166 = vadd.f32 %v5124, %v5082
      %v5167 = vadd.f32 %v5125, %v5083
      %v5168 = vadd.f32 %v5126, %v5084
      %v5169 = vadd.f32 %v5127, %v5085
      %v5170 = vadd.f32 %v5128, %v5086
      %v5171 = vadd.f32 %v5129, %v5087
      %v5172 = vadd.f32 %v5130, %v5088
      %v5173 = vadd.f32 %v5131, %v5089
      %v5174 = vadd.f32 %v5132, %v5090
      %v5175 = vadd.f32 %v5133, %v5091
      %v5176 = vadd.f32 %v5134, %v5092
      %v5177 = vadd.f32 %v5135, %v5093
      %5178 = vst [vmem:[#allocation3] sm:$0xff] %v5136
      %5179 = vst [vmem:[#allocation3 + $0x8] sm:$0xff] %v5137
      %5180 = vst [vmem:[#allocation3 + $0x10] sm:$0xff] %v5138
      %5181 = vst [vmem:[#allocation3 + $0x18] sm:$0xff] %v5139
      %5182 = vst [vmem:[#allocation3 + $0x20] sm:$0xff] %v5140
      %5183 = vst [vmem:[#allocation3 + $0x28] sm:$0xff] %v5141
      %5184 = vst [vmem:[#allocation3 + $0x30] sm:$0xff] %v5142
      %5185 = vst [vmem:[#allocation3 + $0x38] sm:$0xff] %v5143
      %5186 = vst [vmem:[#allocation3 + $0x40] sm:$0xff] %v5144
      %5187 = vst [vmem:[#allocation3 + $0x48] sm:$0xff] %v5145
      %5188 = vst [vmem:[#allocation3 + $0x50] sm:$0xff] %v5146
      %5189 = vst [vmem:[#allocation3 + $0x58] sm:$0xff] %v5147
      %5190 = vst [vmem:[#allocation3 + $0x60] sm:$0xff] %v5148
      %5191 = vst [vmem:[#allocation3 + $0x68] sm:$0xff] %v5149
      %5192 = vst [vmem:[#allocation3 + $0x70] sm:$0xff] %v5150
      %5193 = vst [vmem:[#allocation3 + $0x78] sm:$0xff] %v5151
      %5194 = vst [vmem:[#allocation3 + $0x80] sm:$0xff] %v5152
      %5195 = vst [vmem:[#allocation3 + $0x88] sm:$0xff] %v5153
      %5196 = vst [vmem:[#allocation3 + $0x90] sm:$0xff] %v5154
      %5197 = vst [vmem:[#allocation3 + $0x98] sm:$0xff] %v5155
      %5198 = vst [vmem:[#allocation3 + $0xa0] sm:$0xff] %v5156
      %5199 = vst [vmem:[#allocation3 + $0xa8] sm:$0xff] %v5157
      %5200 = vst [vmem:[#allocation3 + $0xb0] sm:$0xff] %v5158
      %5201 = vst [vmem:[#allocation3 + $0xb8] sm:$0xff] %v5159
      %5202 = vst [vmem:[#allocation3 + $0xc0] sm:$0xff] %v5160
      %5203 = vst [vmem:[#allocation3 + $0xc8] sm:$0xff] %v5161
      %5204 = vst [vmem:[#allocation3 + $0xd0] sm:$0xff] %v5162
      %5205 = vst [vmem:[#allocation3 + $0xd8] sm:$0xff] %v5163
      %5206 = vst [vmem:[#allocation3 + $0xe0] sm:$0xff] %v5164
      %5207 = vst [vmem:[#allocation3 + $0xe8] sm:$0xff] %v5165
      %5208 = vst [vmem:[#allocation3 + $0xf0] sm:$0xff] %v5166
      %5209 = vst [vmem:[#allocation3 + $0xf8] sm:$0xff] %v5167
      %5210 = vst [vmem:[#allocation3 + $0x100] sm:$0xff] %v5168
      %5211 = vst [vmem:[#allocation3 + $0x108] sm:$0xff] %v5169
      %5212 = vst [vmem:[#allocation3 + $0x110] sm:$0xff] %v5170
      %5213 = vst [vmem:[#allocation3 + $0x118] sm:$0xff] %v5171
      %5214 = vst [vmem:[#allocation3 + $0x120] sm:$0xff] %v5172
      %5215 = vst [vmem:[#allocation3 + $0x128] sm:$0xff] %v5173
      %5216 = vst [vmem:[#allocation3 + $0x130] sm:$0xff] %v5174
      %5217 = vst [vmem:[#allocation3 + $0x138] sm:$0xff] %v5175
      %5218 = vst [vmem:[#allocation3 + $0x140] sm:$0xff] %v5176
      %5219 = vst [vmem:[#allocation3 + $0x148] sm:$0xff] %v5177
      %v5220 = vld [vmem:[#allocation3] sm:$0xff]
      %v5221 = vld [vmem:[#allocation3 + $0x8] sm:$0xff]
      %v5222 = vld [vmem:[#allocation3 + $0x10] sm:$0xff]
      %v5223 = vld [vmem:[#allocation3 + $0x18] sm:$0xff]
      %v5224 = vld [vmem:[#allocation3 + $0x20] sm:$0xff]
      %v5225 = vld [vmem:[#allocation3 + $0x28] sm:$0xff]
      %v5226 = vld [vmem:[#allocation3 + $0x30] sm:$0xff]
      %v5227 = vld [vmem:[#allocation3 + $0x38] sm:$0xff]
      %v5228 = vld [vmem:[#allocation3 + $0x40] sm:$0xff]
      %v5229 = vld [vmem:[#allocation3 + $0x48] sm:$0xff]
      %v5230 = vld [vmem:[#allocation3 + $0x50] sm:$0xff]
      %v5231 = vld [vmem:[#allocation3 + $0x58] sm:$0xff]
      %v5232 = vld [vmem:[#allocation3 + $0x60] sm:$0xff]
      %v5233 = vld [vmem:[#allocation3 + $0x68] sm:$0xff]
      %v5234 = vld [vmem:[#allocation3 + $0x70] sm:$0xff]
      %v5235 = vld [vmem:[#allocation3 + $0x78] sm:$0xff]
      %v5236 = vld [vmem:[#allocation3 + $0x80] sm:$0xff]
      %v5237 = vld [vmem:[#allocation3 + $0x88] sm:$0xff]
      %v5238 = vld [vmem:[#allocation3 + $0x90] sm:$0xff]
      %v5239 = vld [vmem:[#allocation3 + $0x98] sm:$0xff]
      %v5240 = vld [vmem:[#allocation3 + $0xa0] sm:$0xff]
      %v5241 = vld [vmem:[#allocation3 + $0xa8] sm:$0xff]
      %v5242 = vld [vmem:[#allocation3 + $0xb0] sm:$0xff]
      %v5243 = vld [vmem:[#allocation3 + $0xb8] sm:$0xff]
      %v5244 = vld [vmem:[#allocation3 + $0xc0] sm:$0xff]
      %v5245 = vld [vmem:[#allocation3 + $0xc8] sm:$0xff]
      %v5246 = vld [vmem:[#allocation3 + $0xd0] sm:$0xff]
      %v5247 = vld [vmem:[#allocation3 + $0xd8] sm:$0xff]
      %v5248 = vld [vmem:[#allocation3 + $0xe0] sm:$0xff]
      %v5249 = vld [vmem:[#allocation3 + $0xe8] sm:$0xff]
      %v5250 = vld [vmem:[#allocation3 + $0xf0] sm:$0xff]
      %v5251 = vld [vmem:[#allocation3 + $0xf8] sm:$0xff]
      %v5252 = vld [vmem:[#allocation3 + $0x100] sm:$0xff]
      %v5253 = vld [vmem:[#allocation3 + $0x108] sm:$0xff]
      %v5254 = vld [vmem:[#allocation3 + $0x110] sm:$0xff]
      %v5255 = vld [vmem:[#allocation3 + $0x118] sm:$0xff]
      %v5256 = vld [vmem:[#allocation3 + $0x120] sm:$0xff]
      %v5257 = vld [vmem:[#allocation3 + $0x128] sm:$0xff]
      %v5258 = vld [vmem:[#allocation3 + $0x130] sm:$0xff]
      %v5259 = vld [vmem:[#allocation3 + $0x138] sm:$0xff]
      %v5260 = vld [vmem:[#allocation3 + $0x140] sm:$0xff]
      %v5261 = vld [vmem:[#allocation3 + $0x148] sm:$0xff]
      %v5262 = vld [vmem:[%s5] sm:$0x1]
      %v5264 = vlaneseq
      %v5265 = vshrl.u32 %v5264, 7
      %v5266 = vsub.s32 0, %v5265
      %v5267 = vrot.slane %v5262, %v5266
      %v5269 = vadd.f32 %v5220, %v5267
      %v5270 = vadd.f32 %v5221, %v5267
      %v5271 = vadd.f32 %v5222, %v5267
      %v5272 = vadd.f32 %v5223, %v5267
      %v5273 = vadd.f32 %v5224, %v5267
      %v5274 = vadd.f32 %v5225, %v5267
      %v5275 = vadd.f32 %v5226, %v5267
      %v5276 = vadd.f32 %v5227, %v5267
      %v5277 = vadd.f32 %v5228, %v5267
      %v5278 = vadd.f32 %v5229, %v5267
      %v5279 = vadd.f32 %v5230, %v5267
      %v5280 = vadd.f32 %v5231, %v5267
      %v5281 = vadd.f32 %v5232, %v5267
      %v5282 = vadd.f32 %v5233, %v5267
      %v5283 = vadd.f32 %v5234, %v5267
      %v5284 = vadd.f32 %v5235, %v5267
      %v5285 = vadd.f32 %v5236, %v5267
      %v5286 = vadd.f32 %v5237, %v5267
      %v5287 = vadd.f32 %v5238, %v5267
      %v5288 = vadd.f32 %v5239, %v5267
      %v5289 = vadd.f32 %v5240, %v5267
      %v5290 = vadd.f32 %v5241, %v5267
      %v5291 = vadd.f32 %v5242, %v5267
      %v5292 = vadd.f32 %v5243, %v5267
      %v5293 = vadd.f32 %v5244, %v5267
      %v5294 = vadd.f32 %v5245, %v5267
      %v5295 = vadd.f32 %v5246, %v5267
      %v5296 = vadd.f32 %v5247, %v5267
      %v5297 = vadd.f32 %v5248, %v5267
      %v5298 = vadd.f32 %v5249, %v5267
      %v5299 = vadd.f32 %v5250, %v5267
      %v5300 = vadd.f32 %v5251, %v5267
      %v5301 = vadd.f32 %v5252, %v5267
      %v5302 = vadd.f32 %v5253, %v5267
      %v5303 = vadd.f32 %v5254, %v5267
      %v5304 = vadd.f32 %v5255, %v5267
      %v5305 = vadd.f32 %v5256, %v5267
      %v5306 = vadd.f32 %v5257, %v5267
      %v5307 = vadd.f32 %v5258, %v5267
      %v5308 = vadd.f32 %v5259, %v5267
      %v5309 = vadd.f32 %v5260, %v5267
      %v5310 = vadd.f32 %v5261, %v5267
      %v5311 = vmax.f32 %v5269, 0.0
      %v5312 = vmax.f32 %v5270, 0.0
      %v5313 = vmax.f32 %v5271, 0.0
      %v5314 = vmax.f32 %v5272, 0.0
      %v5315 = vmax.f32 %v5273, 0.0
      %v5316 = vmax.f32 %v5274, 0.0
      %v5317 = vmax.f32 %v5275, 0.0
      %v5318 = vmax.f32 %v5276, 0.0
      %v5319 = vmax.f32 %v5277, 0.0
      %v5320 = vmax.f32 %v5278, 0.0
      %v5321 = vmax.f32 %v5279, 0.0
      %v5322 = vmax.f32 %v5280, 0.0
      %v5323 = vmax.f32 %v5281, 0.0
      %v5324 = vmax.f32 %v5282, 0.0
      %v5325 = vmax.f32 %v5283, 0.0
      %v5326 = vmax.f32 %v5284, 0.0
      %v5327 = vmax.f32 %v5285, 0.0
      %v5328 = vmax.f32 %v5286, 0.0
      %v5329 = vmax.f32 %v5287, 0.0
      %v5330 = vmax.f32 %v5288, 0.0
      %v5331 = vmax.f32 %v5289, 0.0
      %v5332 = vmax.f32 %v5290, 0.0
      %v5333 = vmax.f32 %v5291, 0.0
      %v5334 = vmax.f32 %v5292, 0.0
      %v5335 = vmax.f32 %v5293, 0.0
      %v5336 = vmax.f32 %v5294, 0.0
      %v5337 = vmax.f32 %v5295, 0.0
      %v5338 = vmax.f32 %v5296, 0.0
      %v5339 = vmax.f32 %v5297, 0.0
      %v5340 = vmax.f32 %v5298, 0.0
      %v5341 = vmax.f32 %v5299, 0.0
      %v5342 = vmax.f32 %v5300, 0.0
      %v5343 = vmax.f32 %v5301, 0.0
      %v5344 = vmax.f32 %v5302, 0.0
      %v5345 = vmax.f32 %v5303, 0.0
      %v5346 = vmax.f32 %v5304, 0.0
      %v5347 = vmax.f32 %v5305, 0.0
      %v5348 = vmax.f32 %v5306, 0.0
      %v5349 = vmax.f32 %v5307, 0.0
      %v5350 = vmax.f32 %v5308, 0.0
      %v5351 = vmax.f32 %v5309, 0.0
      %v5352 = vmax.f32 %v5310, 0.0
      %v5353 = vpack.c.bf16 %v5312, %v5311
      %v5354 = vpack.c.bf16 %v5314, %v5313
      %v5355 = vpack.c.bf16 %v5316, %v5315
      %v5356 = vpack.c.bf16 %v5318, %v5317
      %v5357 = vpack.c.bf16 %v5320, %v5319
      %v5358 = vpack.c.bf16 %v5322, %v5321
      %v5359 = vpack.c.bf16 %v5324, %v5323
      %v5360 = vpack.c.bf16 %v5326, %v5325
      %v5361 = vpack.c.bf16 %v5328, %v5327
      %v5362 = vpack.c.bf16 %v5330, %v5329
      %v5363 = vpack.c.bf16 %v5332, %v5331
      %v5364 = vpack.c.bf16 %v5334, %v5333
      %v5365 = vpack.c.bf16 %v5336, %v5335
      %v5366 = vpack.c.bf16 %v5338, %v5337
      %v5367 = vpack.c.bf16 %v5340, %v5339
      %v5368 = vpack.c.bf16 %v5342, %v5341
      %v5369 = vpack.c.bf16 %v5344, %v5343
      %v5370 = vpack.c.bf16 %v5346, %v5345
      %v5371 = vpack.c.bf16 %v5348, %v5347
      %v5372 = vpack.c.bf16 %v5350, %v5349
      %v5373 = vpack.c.bf16 %v5352, %v5351
      %v5374 = vld [vmem:[%s6] sm:$0xf]
      %v5375 = vld [vmem:[%s6 + $0x4] sm:$0xf]
      %v5376 = vld [vmem:[%s6 + $0x8] sm:$0xf]
      %v5377 = vld [vmem:[%s6 + $0xc] sm:$0xf]
      %v5378 = vld [vmem:[%s6 + $0x10] sm:$0xf]
      %v5379 = vld [vmem:[%s6 + $0x14] sm:$0xf]
      %v5380 = vld [vmem:[%s6 + $0x18] sm:$0xf]
      %v5381 = vld [vmem:[%s6 + $0x1c] sm:$0xf]
      %v5382 = vld [vmem:[%s6 + $0x20] sm:$0xf]
      %v5383 = vld [vmem:[%s6 + $0x24] sm:$0xf]
      %v5384 = vld [vmem:[%s6 + $0x28] sm:$0xf]
      %v5385 = vld [vmem:[%s6 + $0x2c] sm:$0xf]
      %v5386 = vld [vmem:[%s6 + $0x30] sm:$0xf]
      %v5387 = vld [vmem:[%s6 + $0x34] sm:$0xf]
      %v5388 = vld [vmem:[%s6 + $0x38] sm:$0xf]
      %v5389 = vld [vmem:[%s6 + $0x3c] sm:$0xf]
      %v5390 = vld [vmem:[%s7] sm:$0x1]
      %v5392 = vlaneseq
      %v5393 = vshrl.u32 %v5392, 7
      %v5394 = vsub.s32 0, %v5393
      %v5395 = vrot.slane %v5390, %v5394
      %v5413 = vunpack.c.l.b16 %v5374
      %v5414 = vunpack.c.l.b16 %v5375
      %v5415 = vunpack.c.l.b16 %v5376
      %v5416 = vunpack.c.l.b16 %v5377
      %v5417 = vunpack.c.l.b16 %v5378
      %v5418 = vunpack.c.l.b16 %v5379
      %v5419 = vunpack.c.l.b16 %v5380
      %v5420 = vunpack.c.l.b16 %v5381
      %v5421 = vunpack.c.l.b16 %v5382
      %v5422 = vunpack.c.l.b16 %v5383
      %v5423 = vunpack.c.l.b16 %v5384
      %v5424 = vunpack.c.l.b16 %v5385
      %v5425 = vunpack.c.l.b16 %v5386
      %v5426 = vunpack.c.l.b16 %v5387
      %v5427 = vunpack.c.l.b16 %v5388
      %v5428 = vunpack.c.l.b16 %v5389
      %v5429 = vpack.c.b16 %v5414, %v5413
      %v5430 = vpack.c.b16 %v5416, %v5415
      %v5431 = vpack.c.b16 %v5418, %v5417
      %v5432 = vpack.c.b16 %v5420, %v5419
      %v5433 = vpack.c.b16 %v5422, %v5421
      %v5434 = vpack.c.b16 %v5424, %v5423
      %v5435 = vpack.c.b16 %v5426, %v5425
      %v5436 = vpack.c.b16 %v5428, %v5427
      %5445 = vmatprep.subr.bf16.mxu0 0
      %5446 = vmatpush1.bf16.msra.mxu0 %v5429
      %5447 = vmatprep.subr.bf16.mxu0 0
      %5448 = vmatpush1.bf16.msra.mxu0 %v5430
      %5449 = vmatprep.subr.bf16.mxu0 0
      %5450 = vmatpush1.bf16.msra.mxu0 %v5431
      %5451 = vmatprep.subr.bf16.mxu0 0
      %5452 = vmatpush1.bf16.msra.mxu0 %v5432
      %5453 = vmatprep.subr.bf16.mxu0 0
      %5454 = vmatpush1.bf16.msra.mxu0 %v5433
      %5455 = vmatprep.subr.bf16.mxu0 0
      %5456 = vmatpush1.bf16.msra.mxu0 %v5434
      %5457 = vmatprep.subr.bf16.mxu0 0
      %5458 = vmatpush1.bf16.msra.mxu0 %v5435
      %5459 = vmatprep.subr.bf16.mxu0 0
      %5460 = vmatpush1.bf16.msra.mxu0 %v5436
      %5461 = vmatprep.subr.bf16.mxu0 0
      %5462 = vmatpush1.bf16.msra.mxu0 0
      %5463 = vmatprep.subr.bf16.mxu0 0
      %5464 = vmatpush1.bf16.msra.mxu0 0
      %5465 = vmatprep.subr.bf16.mxu0 0
      %5466 = vmatpush1.bf16.msra.mxu0 0
      %5467 = vmatprep.subr.bf16.mxu0 0
      %5468 = vmatpush1.bf16.msra.mxu0 0
      %5469 = vmatprep.subr.bf16.mxu0 0
      %5470 = vmatpush1.bf16.msra.mxu0 0
      %5471 = vmatprep.subr.bf16.mxu0 0
      %5472 = vmatpush1.bf16.msra.mxu0 0
      %5473 = vmatprep.subr.bf16.mxu0 0
      %5474 = vmatpush1.bf16.msra.mxu0 0
      %5475 = vmatprep.subr.bf16.mxu0 0
      %5476 = vmatpush1.bf16.msra.mxu0 0
      %5477 = vmatprep.mubr.bf16.mxu0 0
      %5478 = vmatmul.mubr.bf16.gmra.mrb[0].mxu0 %v5353
      %v5479 = vpop.f32.mrb[0].mxu0
      %v5480 = vadd.f32 %v5395, %v5479
      %v5481 = vpop.f32.mrb[0].mxu0
      %v5482 = vpop.f32.mrb[0].mxu0
      %v5483 = vadd.f32 %v5395, %v5482
      %v5484 = vpop.f32.mrb[0].mxu0
      %5485 = vmatprep.mubr.bf16.mxu0 0
      %5486 = vmatmul.mubr.bf16.gmra.mrb[0].mxu0 %v5354
      %v5487 = vpop.f32.mrb[0].mxu0
      %v5488 = vadd.f32 %v5395, %v5487
      %v5489 = vpop.f32.mrb[0].mxu0
      %v5490 = vpop.f32.mrb[0].mxu0
      %v5491 = vadd.f32 %v5395, %v5490
      %v5492 = vpop.f32.mrb[0].mxu0
      %5493 = vmatprep.mubr.bf16.mxu0 0
      %5494 = vmatmul.mubr.bf16.gmra.mrb[0].mxu0 %v5355
      %v5495 = vpop.f32.mrb[0].mxu0
      %v5496 = vadd.f32 %v5395, %v5495
      %v5497 = vpop.f32.mrb[0].mxu0
      %v5498 = vpop.f32.mrb[0].mxu0
      %v5499 = vadd.f32 %v5395, %v5498
      %v5500 = vpop.f32.mrb[0].mxu0
      %5501 = vmatprep.mubr.bf16.mxu0 0
      %5502 = vmatmul.mubr.bf16.gmra.mrb[0].mxu0 %v5356
      %v5503 = vpop.f32.mrb[0].mxu0
      %v5504 = vadd.f32 %v5395, %v5503
      %v5505 = vpop.f32.mrb[0].mxu0
      %v5506 = vpop.f32.mrb[0].mxu0
      %v5507 = vadd.f32 %v5395, %v5506
      %v5508 = vpop.f32.mrb[0].mxu0
      %5509 = vmatprep.mubr.bf16.mxu0 0
      %5510 = vmatmul.mubr.bf16.gmra.mrb[0].mxu0 %v5357
      %v5511 = vpop.f32.mrb[0].mxu0
      %v5512 = vadd.f32 %v5395, %v5511
      %v5513 = vpop.f32.mrb[0].mxu0
      %v5514 = vpop.f32.mrb[0].mxu0
      %v5515 = vadd.f32 %v5395, %v5514
      %v5516 = vpop.f32.mrb[0].mxu0
      %5517 = vmatprep.mubr.bf16.mxu0 0
      %5518 = vmatmul.mubr.bf16.gmra.mrb[0].mxu0 %v5358
      %v5519 = vpop.f32.mrb[0].mxu0
      %v5520 = vadd.f32 %v5395, %v5519
      %v5521 = vpop.f32.mrb[0].mxu0
      %v5522 = vpop.f32.mrb[0].mxu0
      %v5523 = vadd.f32 %v5395, %v5522
      %v5524 = vpop.f32.mrb[0].mxu0
      %5525 = vmatprep.mubr.bf16.mxu0 0
      %5526 = vmatmul.mubr.bf16.gmra.mrb[0].mxu0 %v5359
      %v5527 = vpop.f32.mrb[0].mxu0
      %v5528 = vadd.f32 %v5395, %v5527
      %v5529 = vpop.f32.mrb[0].mxu0
      %v5530 = vpop.f32.mrb[0].mxu0
      %v5531 = vadd.f32 %v5395, %v5530
      %v5532 = vpop.f32.mrb[0].mxu0
      %5533 = vmatprep.mubr.bf16.mxu0 0
      %5534 = vmatmul.mubr.bf16.gmra.mrb[0].mxu0 %v5360
      %v5535 = vpop.f32.mrb[0].mxu0
      %v5536 = vadd.f32 %v5395, %v5535
      %v5537 = vpop.f32.mrb[0].mxu0
      %v5538 = vpop.f32.mrb[0].mxu0
      %v5539 = vadd.f32 %v5395, %v5538
      %v5540 = vpop.f32.mrb[0].mxu0
      %5541 = vmatprep.mubr.bf16.mxu0 0
      %5542 = vmatmul.mubr.bf16.gmra.mrb[0].mxu0 %v5361
      %v5543 = vpop.f32.mrb[0].mxu0
      %v5544 = vadd.f32 %v5395, %v5543
      %v5545 = vpop.f32.mrb[0].mxu0
      %v5546 = vpop.f32.mrb[0].mxu0
      %v5547 = vadd.f32 %v5395, %v5546
      %v5548 = vpop.f32.mrb[0].mxu0
      %5549 = vmatprep.mubr.bf16.mxu0 0
      %5550 = vmatmul.mubr.bf16.gmra.mrb[0].mxu0 %v5362
      %v5551 = vpop.f32.mrb[0].mxu0
      %v5552 = vadd.f32 %v5395, %v5551
      %v5553 = vpop.f32.mrb[0].mxu0
      %v5554 = vpop.f32.mrb[0].mxu0
      %v5555 = vadd.f32 %v5395, %v5554
      %v5556 = vpop.f32.mrb[0].mxu0
      %5557 = vmatprep.mubr.bf16.mxu0 0
      %5558 = vmatmul.mubr.bf16.gmra.mrb[0].mxu0 %v5363
      %v5559 = vpop.f32.mrb[0].mxu0
      %v5560 = vadd.f32 %v5395, %v5559
      %v5561 = vpop.f32.mrb[0].mxu0
      %v5562 = vpop.f32.mrb[0].mxu0
      %v5563 = vadd.f32 %v5395, %v5562
      %v5564 = vpop.f32.mrb[0].mxu0
      %5565 = vmatprep.mubr.bf16.mxu0 0
      %5566 = vmatmul.mubr.bf16.gmra.mrb[0].mxu0 %v5364
      %v5567 = vpop.f32.mrb[0].mxu0
      %v5568 = vadd.f32 %v5395, %v5567
      %v5569 = vpop.f32.mrb[0].mxu0
      %v5570 = vpop.f32.mrb[0].mxu0
      %v5571 = vadd.f32 %v5395, %v5570
      %v5572 = vpop.f32.mrb[0].mxu0
      %5573 = vmatprep.mubr.bf16.mxu0 0
      %5574 = vmatmul.mubr.bf16.gmra.mrb[0].mxu0 %v5365
      %v5575 = vpop.f32.mrb[0].mxu0
      %v5576 = vadd.f32 %v5395, %v5575
      %v5577 = vpop.f32.mrb[0].mxu0
      %v5578 = vpop.f32.mrb[0].mxu0
      %v5579 = vadd.f32 %v5395, %v5578
      %v5580 = vpop.f32.mrb[0].mxu0
      %5581 = vmatprep.mubr.bf16.mxu0 0
      %5582 = vmatmul.mubr.bf16.gmra.mrb[0].mxu0 %v5366
      %v5583 = vpop.f32.mrb[0].mxu0
      %v5584 = vadd.f32 %v5395, %v5583
      %v5585 = vpop.f32.mrb[0].mxu0
      %v5586 = vpop.f32.mrb[0].mxu0
      %v5587 = vadd.f32 %v5395, %v5586
      %v5588 = vpop.f32.mrb[0].mxu0
      %5589 = vmatprep.mubr.bf16.mxu0 0
      %5590 = vmatmul.mubr.bf16.gmra.mrb[0].mxu0 %v5367
      %v5591 = vpop.f32.mrb[0].mxu0
      %v5592 = vadd.f32 %v5395, %v5591
      %v5593 = vpop.f32.mrb[0].mxu0
      %v5594 = vpop.f32.mrb[0].mxu0
      %v5595 = vadd.f32 %v5395, %v5594
      %v5596 = vpop.f32.mrb[0].mxu0
      %5597 = vmatprep.mubr.bf16.mxu0 0
      %5598 = vmatmul.mubr.bf16.gmra.mrb[0].mxu0 %v5368
      %v5599 = vpop.f32.mrb[0].mxu0
      %v5600 = vadd.f32 %v5395, %v5599
      %v5601 = vpop.f32.mrb[0].mxu0
      %v5602 = vpop.f32.mrb[0].mxu0
      %v5603 = vadd.f32 %v5395, %v5602
      %v5604 = vpop.f32.mrb[0].mxu0
      %5605 = vmatprep.mubr.bf16.mxu0 0
      %5606 = vmatmul.mubr.bf16.gmra.mrb[0].mxu0 %v5369
      %v5607 = vpop.f32.mrb[0].mxu0
      %v5608 = vadd.f32 %v5395, %v5607
      %v5609 = vpop.f32.mrb[0].mxu0
      %v5610 = vpop.f32.mrb[0].mxu0
      %v5611 = vadd.f32 %v5395, %v5610
      %v5612 = vpop.f32.mrb[0].mxu0
      %5613 = vmatprep.mubr.bf16.mxu0 0
      %5614 = vmatmul.mubr.bf16.gmra.mrb[0].mxu0 %v5370
      %v5615 = vpop.f32.mrb[0].mxu0
      %v5616 = vadd.f32 %v5395, %v5615
      %v5617 = vpop.f32.mrb[0].mxu0
      %v5618 = vpop.f32.mrb[0].mxu0
      %v5619 = vadd.f32 %v5395, %v5618
      %v5620 = vpop.f32.mrb[0].mxu0
      %5621 = vmatprep.mubr.bf16.mxu0 0
      %5622 = vmatmul.mubr.bf16.gmra.mrb[0].mxu0 %v5371
      %v5623 = vpop.f32.mrb[0].mxu0
      %v5624 = vadd.f32 %v5395, %v5623
      %v5625 = vpop.f32.mrb[0].mxu0
      %v5626 = vpop.f32.mrb[0].mxu0
      %v5627 = vadd.f32 %v5395, %v5626
      %v5628 = vpop.f32.mrb[0].mxu0
      %5629 = vmatprep.mubr.bf16.mxu0 0
      %5630 = vmatmul.mubr.bf16.gmra.mrb[0].mxu0 %v5372
      %v5631 = vpop.f32.mrb[0].mxu0
      %v5632 = vadd.f32 %v5395, %v5631
      %v5633 = vpop.f32.mrb[0].mxu0
      %v5634 = vpop.f32.mrb[0].mxu0
      %v5635 = vadd.f32 %v5395, %v5634
      %v5636 = vpop.f32.mrb[0].mxu0
      %5637 = vmatprep.mubr.bf16.mxu0 0
      %5638 = vmatmul.mubr.bf16.gmra.mrb[0].mxu0 %v5373
      %v5639 = vpop.f32.mrb[0].mxu0
      %v5640 = vadd.f32 %v5395, %v5639
      %v5641 = vpop.f32.mrb[0].mxu0
      %v5642 = vpop.f32.mrb[0].mxu0
      %v5643 = vadd.f32 %v5395, %v5642
      %v5644 = vpop.f32.mrb[0].mxu0
      %5645 = vdwg.mxu0
      %v5646 = vmax.f32 %v5480, 0.0
      %v5647 = vmax.f32 %v5483, 0.0
      %v5648 = vmax.f32 %v5488, 0.0
      %v5649 = vmax.f32 %v5491, 0.0
      %v5650 = vmax.f32 %v5496, 0.0
      %v5651 = vmax.f32 %v5499, 0.0
      %v5652 = vmax.f32 %v5504, 0.0
      %v5653 = vmax.f32 %v5507, 0.0
      %v5654 = vmax.f32 %v5512, 0.0
      %v5655 = vmax.f32 %v5515, 0.0
      %v5656 = vmax.f32 %v5520, 0.0
      %v5657 = vmax.f32 %v5523, 0.0
      %v5658 = vmax.f32 %v5528, 0.0
      %v5659 = vmax.f32 %v5531, 0.0
      %v5660 = vmax.f32 %v5536, 0.0
      %v5661 = vmax.f32 %v5539, 0.0
      %v5662 = vmax.f32 %v5544, 0.0
      %v5663 = vmax.f32 %v5547, 0.0
      %v5664 = vmax.f32 %v5552, 0.0
      %v5665 = vmax.f32 %v5555, 0.0
      %v5666 = vmax.f32 %v5560, 0.0
      %v5667 = vmax.f32 %v5563, 0.0
      %v5668 = vmax.f32 %v5568, 0.0
      %v5669 = vmax.f32 %v5571, 0.0
      %v5670 = vmax.f32 %v5576, 0.0
      %v5671 = vmax.f32 %v5579, 0.0
      %v5672 = vmax.f32 %v5584, 0.0
      %v5673 = vmax.f32 %v5587, 0.0
      %v5674 = vmax.f32 %v5592, 0.0
      %v5675 = vmax.f32 %v5595, 0.0
      %v5676 = vmax.f32 %v5600, 0.0
      %v5677 = vmax.f32 %v5603, 0.0
      %v5678 = vmax.f32 %v5608, 0.0
      %v5679 = vmax.f32 %v5611, 0.0
      %v5680 = vmax.f32 %v5616, 0.0
      %v5681 = vmax.f32 %v5619, 0.0
      %v5682 = vmax.f32 %v5624, 0.0
      %v5683 = vmax.f32 %v5627, 0.0
      %v5684 = vmax.f32 %v5632, 0.0
      %v5685 = vmax.f32 %v5635, 0.0
      %v5686 = vmax.f32 %v5640, 0.0
      %v5687 = vmax.f32 %v5643, 0.0
      %v5688 = vunpack.c.l.bf16 %v311
      %v5689 = vunpack.c.l.bf16 %v312
      %v5690 = vunpack.c.l.bf16 %v313
      %v5691 = vunpack.c.l.bf16 %v314
      %v5692 = vunpack.c.l.bf16 %v315
      %v5693 = vunpack.c.l.bf16 %v316
      %v5694 = vunpack.c.l.bf16 %v317
      %v5695 = vunpack.c.l.bf16 %v318
      %v5696 = vunpack.c.l.bf16 %v319
      %v5697 = vunpack.c.l.bf16 %v320
      %v5698 = vunpack.c.l.bf16 %v321
      %v5699 = vunpack.c.l.bf16 %v322
      %v5700 = vunpack.c.l.bf16 %v323
      %v5701 = vunpack.c.l.bf16 %v324
      %v5702 = vunpack.c.l.bf16 %v325
      %v5703 = vunpack.c.l.bf16 %v326
      %v5704 = vunpack.c.l.bf16 %v327
      %v5705 = vunpack.c.l.bf16 %v328
      %v5706 = vunpack.c.l.bf16 %v329
      %v5707 = vunpack.c.l.bf16 %v330
      %v5708 = vunpack.c.l.bf16 %v331
      %v5709 = vunpack.c.l.bf16 %v332
      %v5710 = vunpack.c.l.bf16 %v333
      %v5711 = vunpack.c.l.bf16 %v334
      %v5712 = vunpack.c.l.bf16 %v335
      %v5713 = vunpack.c.l.bf16 %v336
      %v5714 = vunpack.c.l.bf16 %v337
      %v5715 = vunpack.c.l.bf16 %v338
      %v5716 = vunpack.c.l.bf16 %v339
      %v5717 = vunpack.c.l.bf16 %v340
      %v5718 = vunpack.c.l.bf16 %v341
      %v5719 = vunpack.c.l.bf16 %v342
      %v5720 = vunpack.c.l.bf16 %v343
      %v5721 = vunpack.c.l.bf16 %v344
      %v5722 = vunpack.c.l.bf16 %v345
      %v5723 = vunpack.c.l.bf16 %v346
      %v5724 = vunpack.c.l.bf16 %v347
      %v5725 = vunpack.c.l.bf16 %v348
      %v5726 = vunpack.c.l.bf16 %v349
      %v5727 = vunpack.c.l.bf16 %v350
      %v5728 = vunpack.c.l.bf16 %v351
      %v5729 = vunpack.c.l.bf16 %v352
      %v5730 = vadd.f32 %v5688, %v5646
      %v5731 = vadd.f32 %v5689, %v5647
      %v5732 = vadd.f32 %v5690, %v5648
      %v5733 = vadd.f32 %v5691, %v5649
      %v5734 = vadd.f32 %v5692, %v5650
      %v5735 = vadd.f32 %v5693, %v5651
      %v5736 = vadd.f32 %v5694, %v5652
      %v5737 = vadd.f32 %v5695, %v5653
      %v5738 = vadd.f32 %v5696, %v5654
      %v5739 = vadd.f32 %v5697, %v5655
      %v5740 = vadd.f32 %v5698, %v5656
      %v5741 = vadd.f32 %v5699, %v5657
      %v5742 = vadd.f32 %v5700, %v5658
      %v5743 = vadd.f32 %v5701, %v5659
      %v5744 = vadd.f32 %v5702, %v5660
      %v5745 = vadd.f32 %v5703, %v5661
      %v5746 = vadd.f32 %v5704, %v5662
      %v5747 = vadd.f32 %v5705, %v5663
      %v5748 = vadd.f32 %v5706, %v5664
      %v5749 = vadd.f32 %v5707, %v5665
      %v5750 = vadd.f32 %v5708, %v5666
      %v5751 = vadd.f32 %v5709, %v5667
      %v5752 = vadd.f32 %v5710, %v5668
      %v5753 = vadd.f32 %v5711, %v5669
      %v5754 = vadd.f32 %v5712, %v5670
      %v5755 = vadd.f32 %v5713, %v5671
      %v5756 = vadd.f32 %v5714, %v5672
      %v5757 = vadd.f32 %v5715, %v5673
      %v5758 = vadd.f32 %v5716, %v5674
      %v5759 = vadd.f32 %v5717, %v5675
      %v5760 = vadd.f32 %v5718, %v5676
      %v5761 = vadd.f32 %v5719, %v5677
      %v5762 = vadd.f32 %v5720, %v5678
      %v5763 = vadd.f32 %v5721, %v5679
      %v5764 = vadd.f32 %v5722, %v5680
      %v5765 = vadd.f32 %v5723, %v5681
      %v5766 = vadd.f32 %v5724, %v5682
      %v5767 = vadd.f32 %v5725, %v5683
      %v5768 = vadd.f32 %v5726, %v5684
      %v5769 = vadd.f32 %v5727, %v5685
      %v5770 = vadd.f32 %v5728, %v5686
      %v5771 = vadd.f32 %v5729, %v5687
      %5772 = vst [vmem:[%s305] sm:$0xff] %v5730
      %5773 = vst [vmem:[%s305 + $0x8] sm:$0xff] %v5731
      %5774 = vst [vmem:[%s305 + $0x10] sm:$0xff] %v5732
      %5775 = vst [vmem:[%s305 + $0x18] sm:$0xff] %v5733
      %5776 = vst [vmem:[%s305 + $0x20] sm:$0xff] %v5734
      %5777 = vst [vmem:[%s305 + $0x28] sm:$0xff] %v5735
      %5778 = vst [vmem:[%s305 + $0x30] sm:$0xff] %v5736
      %5779 = vst [vmem:[%s305 + $0x38] sm:$0xff] %v5737
      %5780 = vst [vmem:[%s305 + $0x40] sm:$0xff] %v5738
      %5781 = vst [vmem:[%s305 + $0x48] sm:$0xff] %v5739
      %5782 = vst [vmem:[%s305 + $0x50] sm:$0xff] %v5740
      %5783 = vst [vmem:[%s305 + $0x58] sm:$0xff] %v5741
      %5784 = vst [vmem:[%s305 + $0x60] sm:$0xff] %v5742
      %5785 = vst [vmem:[%s305 + $0x68] sm:$0xff] %v5743
      %5786 = vst [vmem:[%s305 + $0x70] sm:$0xff] %v5744
      %5787 = vst [vmem:[%s305 + $0x78] sm:$0xff] %v5745
      %5788 = vst [vmem:[%s305 + $0x80] sm:$0xff] %v5746
      %5789 = vst [vmem:[%s305 + $0x88] sm:$0xff] %v5747
      %5790 = vst [vmem:[%s305 + $0x90] sm:$0xff] %v5748
      %5791 = vst [vmem:[%s305 + $0x98] sm:$0xff] %v5749
      %5792 = vst [vmem:[%s305 + $0xa0] sm:$0xff] %v5750
      %5793 = vst [vmem:[%s305 + $0xa8] sm:$0xff] %v5751
      %5794 = vst [vmem:[%s305 + $0xb0] sm:$0xff] %v5752
      %5795 = vst [vmem:[%s305 + $0xb8] sm:$0xff] %v5753
      %5796 = vst [vmem:[%s305 + $0xc0] sm:$0xff] %v5754
      %5797 = vst [vmem:[%s305 + $0xc8] sm:$0xff] %v5755
      %5798 = vst [vmem:[%s305 + $0xd0] sm:$0xff] %v5756
      %5799 = vst [vmem:[%s305 + $0xd8] sm:$0xff] %v5757
      %5800 = vst [vmem:[%s305 + $0xe0] sm:$0xff] %v5758
      %5801 = vst [vmem:[%s305 + $0xe8] sm:$0xff] %v5759
      %5802 = vst [vmem:[%s305 + $0xf0] sm:$0xff] %v5760
      %5803 = vst [vmem:[%s305 + $0xf8] sm:$0xff] %v5761
      %5804 = vst [vmem:[%s305 + $0x100] sm:$0xff] %v5762
      %5805 = vst [vmem:[%s305 + $0x108] sm:$0xff] %v5763
      %5806 = vst [vmem:[%s305 + $0x110] sm:$0xff] %v5764
      %5807 = vst [vmem:[%s305 + $0x118] sm:$0xff] %v5765
      %5808 = vst [vmem:[%s305 + $0x120] sm:$0xff] %v5766
      %5809 = vst [vmem:[%s305 + $0x128] sm:$0xff] %v5767
      %5810 = vst [vmem:[%s305 + $0x130] sm:$0xff] %v5768
      %5811 = vst [vmem:[%s305 + $0x138] sm:$0xff] %v5769
      %5812 = vst [vmem:[%s305 + $0x140] sm:$0xff] %v5770
      %5813 = vst [vmem:[%s305 + $0x148] sm:$0xff] %v5771
      %p5814 = scmp.lt.s32.totalorder %s19, 1
      %s5815 = scalar_select %p5814, %s19, 1
      %s5816 = smul.addr %s5815, 42
      %s5817 = smul.addr %s5816, 8
      %s5818 = scalar_lea.vmem %s8, %s5817
      // Predicated region
      $region53: #{resblock_forward.1} parent=51 // pred_check
        %p5819 = pneg %p210
      $region54: #{resblock_forward.1} parent=51 // pred_check_branch
        %5821 = sbr.rel (%p5819) target = $region56
      $region55: #{resblock_forward.1} parent=51 // pred_region
        _
      $region56: #{resblock_forward.1} parent=51 // pred_fallthru
        _
    $region52: #{resblock_forward.1} parent=5 // pred_fallthru
      _
    %p5822 = scmp.le.s32.totalorder 2, %s14
    // Predicated region
    $region57: #{resblock_forward.1} parent=5 // pred_check
      %p5823 = pneg %p5822
    $region58: #{resblock_forward.1} parent=5 // pred_check_branch
      %5825 = sbr.rel (%p5823) target = $region60
    $region59: #{resblock_forward.1} parent=5 // pred_region
      %s5826 = ssub.s32 %s14, 2
      // Predicated region
      $region61: #{resblock_forward.1} parent=59 // pred_check
        %p5827 = pneg %p216
      $region62: #{resblock_forward.1} parent=59 // pred_check_branch
        %5829 = sbr.rel (%p5827) target = $region64
      $region63: #{resblock_forward.1} parent=59 // pred_region
        %p5830 = scmp.lt.s32.totalorder %s20, 1
        %s5831 = scalar_select %p5830, %s20, 1
        %s5832 = smul.addr %s5831, 42
        %s5833 = smul.addr %s5832, 8
        %s5834 = scalar_lea.vmem %s8, %s5833
      $region64: #{resblock_forward.1} parent=59 // pred_fallthru
        _
    $region60: #{resblock_forward.1} parent=5 // pred_fallthru
      _
  $region6: #{resblock_forward.1} parent=0 // loop_footer
    %s18 = sadd.s32 1, %s14
  $region7: #{resblock_forward.1} parent=0 // loop_footer_branch
    %13 = sbr.rel target = $region3
  $region8: #{resblock_forward.1} parent=0 // loop_exit
    _

</llo_original>
